<compile_context>
chip_gen: v6e
topology: v6e:2x2x1
jax: 0.10.0
libtpu: 0.0.40
codegen_flags: <defaults>
</compile_context>

<pallas_src>
import jax
import jax.numpy as jnp
from jax.experimental import pallas as pl
from jax.experimental.pallas import tpu as pltpu


# ---------------------------------------------------------------------------
# Kernel 1: fused scale/shift (folded eval-mode BatchNorm) + ReLU, row-tiled.
# ---------------------------------------------------------------------------
def _bn_relu_kernel(x_ref, s_ref, b_ref, o_ref):
    y = x_ref[...].astype(jnp.float32) * s_ref[...] + b_ref[...]
    o_ref[...] = jnp.maximum(y, 0.0).astype(o_ref.dtype)


def bn_relu_pallas(x2d, scale, shift, out_dtype=jnp.bfloat16, tm=512):
    """relu(x * scale + shift), row tiled.  Folds (M, C<128) -> (M/f, 128) so
    both the load and the store path are lane-dense."""
    M, C = x2d.shape
    scale = scale.reshape(1, C).astype(jnp.float32)
    shift = shift.reshape(1, C).astype(jnp.float32)
    if C < 128 and 128 % C == 0 and M % (128 // C) == 0:
        f = 128 // C
        x2d = x2d.reshape(M // f, C * f)
        scale = jnp.tile(scale, (1, f))
        shift = jnp.tile(shift, (1, f))
    Mf, Cf = x2d.shape
    tm = min(tm, ((Mf + 7) // 8) * 8)
    g = pl.cdiv(Mf, tm)
    Mp = g * tm
    if Mp != Mf:
        x2d = jnp.pad(x2d, ((0, Mp - Mf), (0, 0)))
    y = pl.pallas_call(
        _bn_relu_kernel,
        out_shape=jax.ShapeDtypeStruct((Mp, Cf), out_dtype),
        grid=(g,),
        in_specs=[pl.BlockSpec((tm, Cf), lambda i: (i, 0)),
                  pl.BlockSpec((1, Cf), lambda i: (0, 0)),
                  pl.BlockSpec((1, Cf), lambda i: (0, 0))],
        out_specs=pl.BlockSpec((tm, Cf), lambda i: (i, 0)),
        compiler_params=pltpu.CompilerParams(
            dimension_semantics=("parallel",)),
    )(x2d, scale, shift)
    if Mp != Mf:
        y = y[:Mf]
    return y.reshape(M, C)


# ---------------------------------------------------------------------------
# Kernel 2/3: 3x3 conv (pad=1) as 3 K-packed shifted-window matmuls with a
# fused epilogue (BN+ReLU, identity residual add, or in-kernel 1x1 shortcut).
# ---------------------------------------------------------------------------
def _make_conv_kernel(n_src, taps, tmo, has_post, res_mode):
    def kernel(*refs):
        i = 0
        src_refs = refs[i:i + n_src]; i += n_src
        w_ref = refs[i]; i += 1
        if has_post:
            ps_ref, pb_ref = refs[i], refs[i + 1]; i += 2
        if res_mode == 'add':
            r_ref = refs[i]; i += 1
        elif res_mode == 'conv':
            scx_ref, scw_ref = refs[i], refs[i + 1]; i += 2
        o_ref = refs[i]

        row0 = pl.multiple_of(pl.program_id(1) * tmo, tmo)

        # K-packed taps (K = fold*3*Cin); accumulate in registers (f32) and
        # store once at the end (no VMEM scratch accumulator).
        acc = None
        for t, (s, start) in enumerate(taps):
            win = src_refs[s][0, pl.ds(row0 + start, tmo), :]   # (tmo, Cs) bf16
            part = jnp.dot(win, w_ref[t], preferred_element_type=jnp.float32)
            acc = part if acc is None else acc + part

        if has_post:                       # fused BN + ReLU epilogue
            acc = jnp.maximum(acc * ps_ref[...] + pb_ref[...], 0.0)
        if res_mode == 'add':              # fused identity-residual add
            acc = acc + r_ref[0].astype(jnp.float32)
        elif res_mode == 'conv':           # fused 1x1-conv shortcut + add
            acc = acc + jnp.dot(scx_ref[0], scw_ref[...],
                                preferred_element_type=jnp.float32)
        o_ref[0] = acc.astype(o_ref.dtype)
    return kernel


def _pick_row_tile(m, cap=256):
    """Largest row tile <= cap dividing m (multiple of 8), else m itself."""
    if m <= cap:
        return m
    t = (cap // 8) * 8
    while t >= 8:
        if m % t == 0:
            return t
        t -= 8
    return m


def _block_diag(w, f):
    """(K, N) -> (f*K, f*N) block-diagonal (for the lane-dense spatial fold)."""
    return jnp.kron(jnp.eye(f, dtype=w.dtype), w)


def conv3x3_fused(x, w3, *, stride, post_scale=None, post_shift=None,
                  residual=None, sc_x=None, sc_w=None,
                  out_dtype=jnp.bfloat16, row_tile=256):
    """3x3 conv (padding=1, bias=False) on NHWC x.
    w3: (3, 3*Cin, Cout) bf16, channel order kx*Cin + ci.
    Optional fused epilogue: relu(out*post_scale + post_shift); out += residual
    (NHWC, same shape as output); or out += sc_x @ sc_w (1x1 shortcut)."""
    N, H, W, Cin = x.shape
    _, K3, Cout = w3.shape
    assert K3 == 3 * Cin and stride in (1, 2)
    if stride == 2:
        assert H % 2 == 0 and W % 2 == 0
    Ho, Wo = (H, W) if stride == 1 else (H // 2, W // 2)
    Mo = Ho * Wo

    # ---- wrapper-side K-packing along kx (zero-pad W, concat 3 shifted views)
    xw = jnp.pad(x.astype(jnp.bfloat16), ((0, 0), (0, 0), (1, 1), (0, 0)))
    xk = jnp.concatenate([xw[:, :, k:k + W:stride, :] for k in range(3)], axis=-1)
    xh = jnp.pad(xk, ((0, 0), (1, 1), (0, 0), (0, 0)))            # zero-pad H
    if stride == 1:
        srcs = [xh.reshape(N, (H + 2) * Wo, 3 * Cin)]
        taps = [(0, 0), (0, Wo), (0, 2 * Wo)]                     # ky = 0, 1, 2
    else:
        srcs = [xh[:, 0::2].reshape(N, -1, 3 * Cin),              # even padded rows
                xh[:, 1::2].reshape(N, -1, 3 * Cin)]              # odd  padded rows
        taps = [(0, 0), (1, 0), (0, Wo)]                          # ky = 0, 1, 2

    # ---- lane-dense fold: pack `fold` spatial positions per row when Cout<128
    fold = 1
    if Cout < 128 and 128 % Cout == 0 and Wo % (128 // Cout) == 0:
        fold = 128 // Cout
    Cs, Co, Mo_f = 3 * Cin * fold, Cout * fold, Mo // fold
    if fold > 1:
        srcs = [s.reshape(N, s.shape[1] // fold, Cs) for s in srcs]
        taps = [(si, st // fold) for si, st in taps]
        w3 = jnp.stack([_block_diag(w3[t], fold) for t in range(3)], axis=0)
    R = srcs[0].shape[1]
    tmo = _pick_row_tile(Mo_f, row_tile)
    n_rt = Mo_f // tmo

    has_post = post_scale is not None
    res_mode = 'none'
    extra_in, extra_specs = [], []
    if has_post:
        extra_in += [jnp.tile(post_scale.reshape(1, Cout).astype(jnp.float32), (1, fold)),
                     jnp.tile(post_shift.reshape(1, Cout).astype(jnp.float32), (1, fold))]
        extra_specs += [pl.BlockSpec((1, Co), lambda n, r: (0, 0))] * 2
    if residual is not None:
        res_mode = 'add'
        extra_in += [residual.astype(jnp.bfloat16).reshape(N, Mo_f, Co)]
        extra_specs += [pl.BlockSpec((1, tmo, Co), lambda n, r: (n, r, 0))]
    elif sc_x is not None:
        res_mode = 'conv'
        Csc = sc_x.shape[-1]
        scw = sc_w.astype(jnp.bfloat16)
        if fold > 1:
            scw = _block_diag(scw, fold)
        extra_in += [sc_x.astype(jnp.bfloat16).reshape(N, Mo_f, Csc * fold), scw]
        extra_specs += [pl.BlockSpec((1, tmo, Csc * fold), lambda n, r: (n, r, 0)),
                        pl.BlockSpec((Csc * fold, Co), lambda n, r: (0, 0))]

    flops = 2 * N * Mo * (9 * Cin) * Cout
    if sc_x is not None:
        flops += 2 * N * Mo * sc_x.shape[-1] * Cout
    bytes_acc = sum(int(a.size) * a.dtype.itemsize for a in srcs)
    bytes_acc += int(w3.size) * w3.dtype.itemsize
    bytes_acc += sum(int(a.size) * a.dtype.itemsize for a in extra_in)
    bytes_acc += N * Mo_f * Co * jnp.dtype(out_dtype).itemsize

    kernel = _make_conv_kernel(len(srcs), taps, tmo, has_post, res_mode)
    out = pl.pallas_call(
        kernel,
        out_shape=jax.ShapeDtypeStruct((N, Mo_f, Co), out_dtype),
        grid=(N, n_rt),
        in_specs=([pl.BlockSpec((1, R, Cs), lambda n, r: (n, 0, 0)) for _ in srcs]
                  + [pl.BlockSpec((3, Cs, Co), lambda n, r: (0, 0, 0))]
                  + extra_specs),
        out_specs=pl.BlockSpec((1, tmo, Co), lambda n, r: (n, r, 0)),
        compiler_params=pltpu.CompilerParams(
            dimension_semantics=("parallel", "arbitrary")),
        cost_estimate=pl.CostEstimate(flops=int(flops), transcendentals=0,
                                      bytes_accessed=int(bytes_acc)),
    )(*srcs, w3, *extra_in)
    return out.reshape(N, Ho, Wo, Cout)


# ---------------------------------------------------------------------------
# Parameter preparation (one-time, outside the forward) and block forward.
# ---------------------------------------------------------------------------
def prepare_block_params(raw, eps=1e-5):
    def bn_fold(bn):
        scale = bn['gamma'] * jax.lax.rsqrt(bn['var'] + eps)
        return (scale.astype(jnp.float32),
                (bn['beta'] - bn['mean'] * scale).astype(jnp.float32))

    def conv3_packed(w):
        # torch (Cout, Cin, 3, 3) -> (3, 3*Cin, Cout), channel order kx*Cin + ci
        cout, cin, kh, kw = w.shape
        return (jnp.transpose(w, (2, 3, 1, 0))          # (ky, kx, ci, co)
                .reshape(kh, kw * cin, cout).astype(jnp.bfloat16))

    p = {'stride': int(raw['stride'])}
    p['bn1_scale'], p['bn1_shift'] = bn_fold(raw['bn1'])
    p['bn2_scale'], p['bn2_shift'] = bn_fold(raw['bn2'])
    p['w1'] = conv3_packed(raw['conv1'])
    p['w2'] = conv3_packed(raw['conv2'])
    if 'shortcut' in raw:
        p['w_sc'] = jnp.transpose(raw['shortcut'][:, :, 0, 0]).astype(jnp.bfloat16)
    return p


def preact_block_forward(x_nchw, p):
    """PreActBlock forward (eval-mode BN), NCHW in / NCHW out."""
    x = jnp.transpose(x_nchw.astype(jnp.bfloat16), (0, 2, 3, 1))  # NHWC bf16
    N, H, W, Cin = x.shape
    s = p['stride']
    # h = relu(bn1(x))  (feeds both conv1 and the shortcut)
    h = bn_relu_pallas(x.reshape(N * H * W, Cin),
                       p['bn1_scale'], p['bn1_shift']).reshape(N, H, W, Cin)
    # out2 = relu(bn2(conv1(h)))  -- BN2+ReLU fused as the matmul epilogue
    out2 = conv3x3_fused(h, p['w1'], stride=s,
                         post_scale=p['bn2_scale'], post_shift=p['bn2_shift'])
    # out = conv2(out2) + shortcut  -- residual fused as the matmul epilogue
    if 'w_sc' in p:
        out = conv3x3_fused(out2, p['w2'], stride=1,
                            sc_x=h[:, ::s, ::s, :], sc_w=p['w_sc'])
    else:
        out = conv3x3_fused(out2, p['w2'], stride=1, residual=x)
    return jnp.transpose(out, (0, 3, 1, 2)).astype(jnp.float32)   # back to NCHW


# ---------------------------------------------------------------------------
# Reference (plain JAX) and test harness.
# ---------------------------------------------------------------------------
def make_raw_block_params(key, in_planes, planes, stride):
    ks = jax.random.split(key, 8)

    def conv_w(k, cout, cin, ksz):
        fan = cin * ksz * ksz
        return (jax.random.normal(k, (cout, cin, ksz, ksz), jnp.float32)
                * (2.0 / fan) ** 0.5)

    def bn_p(k, c):
        k1, k2, k3, k4 = jax.random.split(k, 4)
        return dict(gamma=1.0 + 0.1 * jax.random.normal(k1, (c,), jnp.float32),
                    beta=0.1 * jax.random.normal(k2, (c,), jnp.float32),
                    mean=0.1 * jax.random.normal(k3, (c,), jnp.float32),
                    var=1.0 + 0.1 * jnp.abs(jax.random.normal(k4, (c,), jnp.float32)))

    raw = dict(stride=stride,
               bn1=bn_p(ks[0], in_planes),
               conv1=conv_w(ks[1], planes, in_planes, 3),
               bn2=bn_p(ks[2], planes),
               conv2=conv_w(ks[3], planes, planes, 3))
    if stride != 1 or in_planes != planes:
        raw['shortcut'] = conv_w(ks[4], planes, in_planes, 1)
    return raw


def reference_block_forward(x_nchw, raw, eps=1e-5):
    x = jnp.transpose(x_nchw, (0, 2, 3, 1))

    def bn(v, b):
        return (v - b['mean']) * jax.lax.rsqrt(b['var'] + eps) * b['gamma'] + b['beta']

    def conv(v, w, s, pad):
        return jax.lax.conv_general_dilated(
            v, jnp.transpose(w, (2, 3, 1, 0)), (s, s), ((pad, pad), (pad, pad)),
            dimension_numbers=('NHWC', 'HWIO', 'NHWC'))

    h = jax.nn.relu(bn(x, raw['bn1']))
    sc = conv(h, raw['shortcut'], raw['stride'], 0) if 'shortcut' in raw else x
    o = conv(h, raw['conv1'], raw['stride'], 1)
    o = jax.nn.relu(bn(o, raw['bn2']))
    o = conv(o, raw['conv2'], 1, 1)
    return jnp.transpose(o + sc, (0, 3, 1, 2))


if __name__ == "__main__":
    key = jax.random.PRNGKey(0)
    kx, kb1, kb2 = jax.random.split(key, 3)
    N, C0, H, W = 2, 64, 16, 16
    x = jax.random.normal(kx, (N, C0, H, W), jnp.float32)

    configs = [
        ("identity", make_raw_block_params(kb1, 64, 64, 1), (N, 64, 16, 16)),
        ("projection", make_raw_block_params(kb2, 64, 128, 2), (N, 128, 8, 8)),
    ]
    for name, raw, expect_shape in configs:
        p = prepare_block_params(raw)
        fwd = jax.jit(lambda inp, p=p: preact_block_forward(inp, p))
        out = jax.block_until_ready(fwd(x))
        assert out.shape == expect_shape, (name, out.shape)
        assert bool(jnp.all(jnp.isfinite(out))), name
        ref = reference_block_forward(x, raw)
        err = float(jnp.max(jnp.abs(out - ref)))
        tol = 0.05 * max(1.0, float(jnp.max(jnp.abs(ref))))  # bf16 operands
        assert err <= tol, (name, err, tol)
    print("KERNEL_OK")
</pallas_src>

<mosaic_0001>
module attributes {stable_mosaic.version = 11 : i64} {
  func.func @_bn_relu_kernel(%arg0: i32, %arg1: memref<256x128xbf16, #tpu.memory_space<vmem>>, %arg2: memref<1x128xf32, #tpu.memory_space<vmem>>, %arg3: memref<1x128xf32, #tpu.memory_space<vmem>>, %arg4: memref<256x128xbf16, #tpu.memory_space<vmem>>) attributes {dimension_semantics = [#tpu.dimension_semantics<parallel>], iteration_bounds = array<i64: 1>, scalar_prefetch = 0 : i64, scratch_operands = 0 : i64, tpu.core_type = #tpu.core_type<tc>, window_params = [{transform_indices = @transform_0, window_bounds = array<i64: 256, 128>}, {pipeline_mode = #tpu.pipeline_mode<synchronous>, transform_indices = @transform_1, window_bounds = array<i64: 1, 128>}, {pipeline_mode = #tpu.pipeline_mode<synchronous>, transform_indices = @transform_2, window_bounds = array<i64: 1, 128>}, {transform_indices = @transform_3, window_bounds = array<i64: 256, 128>}]} {
    %c0 = arith.constant 0 : index
    %c0_0 = arith.constant 0 : index
    %0 = vector.load %arg1[%c0, %c0_0] : memref<256x128xbf16, #tpu.memory_space<vmem>>, vector<256x128xbf16>
    %1 = arith.extf %0 : vector<256x128xbf16> to vector<256x128xf32>
    %c0_1 = arith.constant 0 : index
    %c0_2 = arith.constant 0 : index
    %2 = vector.load %arg2[%c0_1, %c0_2] : memref<1x128xf32, #tpu.memory_space<vmem>>, vector<1x128xf32>
    %3 = vector.broadcast %2 : vector<1x128xf32> to vector<256x128xf32>
    %4 = arith.mulf %1, %3 : vector<256x128xf32>
    %c0_3 = arith.constant 0 : index
    %c0_4 = arith.constant 0 : index
    %5 = vector.load %arg3[%c0_3, %c0_4] : memref<1x128xf32, #tpu.memory_space<vmem>>, vector<1x128xf32>
    %6 = vector.broadcast %5 : vector<1x128xf32> to vector<256x128xf32>
    %7 = arith.addf %4, %6 : vector<256x128xf32>
    %cst = arith.constant 0.000000e+00 : f32
    %8 = vector.broadcast %cst : f32 to vector<256x128xf32>
    %9 = arith.maximumf %7, %8 : vector<256x128xf32>
    %10 = arith.truncf %9 : vector<256x128xf32> to vector<256x128xbf16>
    %c0_5 = arith.constant 0 : index
    %c0_6 = arith.constant 0 : index
    %11 = vector.load %arg4[%c0_5, %c0_6] : memref<256x128xbf16, #tpu.memory_space<vmem>>, vector<256x128xbf16>
    tpu.vector_store %arg4[%c0_5, %c0_6], %10 {strides = array<i32>} : memref<256x128xbf16, #tpu.memory_space<vmem>>, vector<256x128xbf16>,
    return
  }
  func.func @transform_0(%arg0: i32) -> (i32, i32) {
    %c0_i32 = arith.constant 0 : i32
    %c0_i32_0 = arith.constant 0 : i32
    return %arg0, %c0_i32 : i32, i32
  }
  func.func @transform_1(%arg0: i32) -> (i32, i32) {
    %c0_i32 = arith.constant 0 : i32
    %c0_i32_0 = arith.constant 0 : i32
    %c0_i32_1 = arith.constant 0 : i32
    return %c0_i32, %c0_i32_0 : i32, i32
  }
  func.func @transform_2(%arg0: i32) -> (i32, i32) {
    %c0_i32 = arith.constant 0 : i32
    %c0_i32_0 = arith.constant 0 : i32
    %c0_i32_1 = arith.constant 0 : i32
    return %c0_i32, %c0_i32_0 : i32, i32
  }
  func.func @transform_3(%arg0: i32) -> (i32, i32) {
    %c0_i32 = arith.constant 0 : i32
    %c0_i32_0 = arith.constant 0 : i32
    return %arg0, %c0_i32 : i32, i32
  }
}

module attributes {stable_mosaic.version = 11 : i64} {
  func.func @kernel(%arg0: i32, %arg1: i32, %arg2: memref<1x144x384xbf16, #tpu.memory_space<vmem>>, %arg3: memref<3x384x128xbf16, #tpu.memory_space<vmem>>, %arg4: memref<1x128xf32, #tpu.memory_space<vmem>>, %arg5: memref<1x128xf32, #tpu.memory_space<vmem>>, %arg6: memref<1x128x128xbf16, #tpu.memory_space<vmem>>) attributes {dimension_semantics = [#tpu.dimension_semantics<parallel>, #tpu.dimension_semantics<arbitrary>], iteration_bounds = array<i64: 2, 1>, scalar_prefetch = 0 : i64, scratch_operands = 0 : i64, tpu.core_type = #tpu.core_type<tc>, window_params = [{transform_indices = @transform_0, window_bounds = array<i64: 1, 144, 384>}, {pipeline_mode = #tpu.pipeline_mode<synchronous>, transform_indices = @transform_1, window_bounds = array<i64: 3, 384, 128>}, {pipeline_mode = #tpu.pipeline_mode<synchronous>, transform_indices = @transform_2, window_bounds = array<i64: 1, 128>}, {pipeline_mode = #tpu.pipeline_mode<synchronous>, transform_indices = @transform_3, window_bounds = array<i64: 1, 128>}, {transform_indices = @transform_4, window_bounds = array<i64: 1, 128, 128>}]} {
    %c128_i32 = arith.constant 128 : i32
    %0 = arith.muli %arg1, %c128_i32 : i32
    %1 = tpu.assume_multiple %0, 128 : i32
    %c0_i32 = arith.constant 0 : i32
    %2 = arith.addi %1, %c0_i32 : i32
    %c0 = arith.constant 0 : index
    %3 = arith.index_cast %2 : i32 to index
    %c0_0 = arith.constant 0 : index
    %4 = vector.load %arg2[%c0, %3, %c0_0] : memref<1x144x384xbf16, #tpu.memory_space<vmem>>, vector<1x128x384xbf16>
    %5 = vector.shape_cast %4 : vector<1x128x384xbf16> to vector<128x384xbf16>
    %c0_1 = arith.constant 0 : index
    %c0_2 = arith.constant 0 : index
    %c0_3 = arith.constant 0 : index
    %6 = vector.load %arg3[%c0_1, %c0_2, %c0_3] : memref<3x384x128xbf16, #tpu.memory_space<vmem>>, vector<1x384x128xbf16>
    %7 = vector.shape_cast %6 : vector<1x384x128xbf16> to vector<384x128xbf16>
    %cst = arith.constant dense<0.000000e+00> : vector<128x128xf32>
    %8 = tpu.matmul %5, %7, %cst {dimension_numbers = #tpu.dot_dimension_numbers<[1], [0], [0], [1], [0, 0, 1, 1], [], []>} : vector<128x384xbf16>, vector<384x128xbf16>, vector<128x128xf32> -> vector<128x128xf32>
    %c8_i32 = arith.constant 8 : i32
    %9 = arith.addi %1, %c8_i32 : i32
    %c0_4 = arith.constant 0 : index
    %10 = arith.index_cast %9 : i32 to index
    %c0_5 = arith.constant 0 : index
    %11 = vector.load %arg2[%c0_4, %10, %c0_5] : memref<1x144x384xbf16, #tpu.memory_space<vmem>>, vector<1x128x384xbf16>
    %12 = vector.shape_cast %11 : vector<1x128x384xbf16> to vector<128x384xbf16>
    %c1 = arith.constant 1 : index
    %c0_6 = arith.constant 0 : index
    %c0_7 = arith.constant 0 : index
    %13 = vector.load %arg3[%c1, %c0_6, %c0_7] : memref<3x384x128xbf16, #tpu.memory_space<vmem>>, vector<1x384x128xbf16>
    %14 = vector.shape_cast %13 : vector<1x384x128xbf16> to vector<384x128xbf16>
    %cst_8 = arith.constant dense<0.000000e+00> : vector<128x128xf32>
    %15 = tpu.matmul %12, %14, %cst_8 {dimension_numbers = #tpu.dot_dimension_numbers<[1], [0], [0], [1], [0, 0, 1, 1], [], []>} : vector<128x384xbf16>, vector<384x128xbf16>, vector<128x128xf32> -> vector<128x128xf32>
    %16 = arith.addf %8, %15 : vector<128x128xf32>
    %c16_i32 = arith.constant 16 : i32
    %17 = arith.addi %1, %c16_i32 : i32
    %c0_9 = arith.constant 0 : index
    %18 = arith.index_cast %17 : i32 to index
    %c0_10 = arith.constant 0 : index
    %19 = vector.load %arg2[%c0_9, %18, %c0_10] : memref<1x144x384xbf16, #tpu.memory_space<vmem>>, vector<1x128x384xbf16>
    %20 = vector.shape_cast %19 : vector<1x128x384xbf16> to vector<128x384xbf16>
    %c2 = arith.constant 2 : index
    %c0_11 = arith.constant 0 : index
    %c0_12 = arith.constant 0 : index
    %21 = vector.load %arg3[%c2, %c0_11, %c0_12] : memref<3x384x128xbf16, #tpu.memory_space<vmem>>, vector<1x384x128xbf16>
    %22 = vector.shape_cast %21 : vector<1x384x128xbf16> to vector<384x128xbf16>
    %cst_13 = arith.constant dense<0.000000e+00> : vector<128x128xf32>
    %23 = tpu.matmul %20, %22, %cst_13 {dimension_numbers = #tpu.dot_dimension_numbers<[1], [0], [0], [1], [0, 0, 1, 1], [], []>} : vector<128x384xbf16>, vector<384x128xbf16>, vector<128x128xf32> -> vector<128x128xf32>
    %24 = arith.addf %16, %23 : vector<128x128xf32>
    %c0_14 = arith.constant 0 : index
    %c0_15 = arith.constant 0 : index
    %25 = vector.load %arg4[%c0_14, %c0_15] : memref<1x128xf32, #tpu.memory_space<vmem>>, vector<1x128xf32>
    %26 = vector.broadcast %25 : vector<1x128xf32> to vector<128x128xf32>
    %27 = arith.mulf %24, %26 : vector<128x128xf32>
    %c0_16 = arith.constant 0 : index
    %c0_17 = arith.constant 0 : index
    %28 = vector.load %arg5[%c0_16, %c0_17] : memref<1x128xf32, #tpu.memory_space<vmem>>, vector<1x128xf32>
    %29 = vector.broadcast %28 : vector<1x128xf32> to vector<128x128xf32>
    %30 = arith.addf %27, %29 : vector<128x128xf32>
    %cst_18 = arith.constant 0.000000e+00 : f32
    %31 = vector.broadcast %cst_18 : f32 to vector<128x128xf32>
    %32 = arith.maximumf %30, %31 : vector<128x128xf32>
    %33 = arith.truncf %32 : vector<128x128xf32> to vector<128x128xbf16>
    %c0_19 = arith.constant 0 : index
    %c0_20 = arith.constant 0 : index
    %c0_21 = arith.constant 0 : index
    %34 = vector.load %arg6[%c0_19, %c0_20, %c0_21] : memref<1x128x128xbf16, #tpu.memory_space<vmem>>, vector<1x128x128xbf16>
    %35 = vector.shape_cast %34 : vector<1x128x128xbf16> to vector<128x128xbf16>
    %36 = vector.shape_cast %33 : vector<128x128xbf16> to vector<1x128x128xbf16>
    tpu.vector_store %arg6[%c0_19, %c0_20, %c0_21], %36 {strides = array<i32>} : memref<1x128x128xbf16, #tpu.memory_space<vmem>>, vector<1x128x128xbf16>,
    return
  }
  func.func @transform_0(%arg0: i32, %arg1: i32) -> (i32, i32, i32) {
    %c0_i32 = arith.constant 0 : i32
    %c0_i32_0 = arith.constant 0 : i32
    %c0_i32_1 = arith.constant 0 : i32
    return %arg0, %c0_i32, %c0_i32_0 : i32, i32, i32
  }
  func.func @transform_1(%arg0: i32, %arg1: i32) -> (i32, i32, i32) {
    %c0_i32 = arith.constant 0 : i32
    %c0_i32_0 = arith.constant 0 : i32
    %c0_i32_1 = arith.constant 0 : i32
    %c0_i32_2 = arith.constant 0 : i32
    return %c0_i32, %c0_i32_0, %c0_i32_1 : i32, i32, i32
  }
  func.func @transform_2(%arg0: i32, %arg1: i32) -> (i32, i32) {
    %c0_i32 = arith.constant 0 : i32
    %c0_i32_0 = arith.constant 0 : i32
    %c0_i32_1 = arith.constant 0 : i32
    return %c0_i32, %c0_i32_0 : i32, i32
  }
  func.func @transform_3(%arg0: i32, %arg1: i32) -> (i32, i32) {
    %c0_i32 = arith.constant 0 : i32
    %c0_i32_0 = arith.constant 0 : i32
    %c0_i32_1 = arith.constant 0 : i32
    return %c0_i32, %c0_i32_0 : i32, i32
  }
  func.func @transform_4(%arg0: i32, %arg1: i32) -> (i32, i32, i32) {
    %c0_i32 = arith.constant 0 : i32
    %c0_i32_0 = arith.constant 0 : i32
    return %arg0, %arg1, %c0_i32 : i32, i32, i32
  }
}

module attributes {stable_mosaic.version = 11 : i64} {
  func.func @kernel(%arg0: i32, %arg1: i32, %arg2: memref<1x144x384xbf16, #tpu.memory_space<vmem>>, %arg3: memref<3x384x128xbf16, #tpu.memory_space<vmem>>, %arg4: memref<1x128x128xbf16, #tpu.memory_space<vmem>>, %arg5: memref<1x128x128xbf16, #tpu.memory_space<vmem>>) attributes {dimension_semantics = [#tpu.dimension_semantics<parallel>, #tpu.dimension_semantics<arbitrary>], iteration_bounds = array<i64: 2, 1>, scalar_prefetch = 0 : i64, scratch_operands = 0 : i64, tpu.core_type = #tpu.core_type<tc>, window_params = [{transform_indices = @transform_0, window_bounds = array<i64: 1, 144, 384>}, {pipeline_mode = #tpu.pipeline_mode<synchronous>, transform_indices = @transform_1, window_bounds = array<i64: 3, 384, 128>}, {transform_indices = @transform_2, window_bounds = array<i64: 1, 128, 128>}, {transform_indices = @transform_3, window_bounds = array<i64: 1, 128, 128>}]} {
    %c128_i32 = arith.constant 128 : i32
    %0 = arith.muli %arg1, %c128_i32 : i32
    %1 = tpu.assume_multiple %0, 128 : i32
    %c0_i32 = arith.constant 0 : i32
    %2 = arith.addi %1, %c0_i32 : i32
    %c0 = arith.constant 0 : index
    %3 = arith.index_cast %2 : i32 to index
    %c0_0 = arith.constant 0 : index
    %4 = vector.load %arg2[%c0, %3, %c0_0] : memref<1x144x384xbf16, #tpu.memory_space<vmem>>, vector<1x128x384xbf16>
    %5 = vector.shape_cast %4 : vector<1x128x384xbf16> to vector<128x384xbf16>
    %c0_1 = arith.constant 0 : index
    %c0_2 = arith.constant 0 : index
    %c0_3 = arith.constant 0 : index
    %6 = vector.load %arg3[%c0_1, %c0_2, %c0_3] : memref<3x384x128xbf16, #tpu.memory_space<vmem>>, vector<1x384x128xbf16>
    %7 = vector.shape_cast %6 : vector<1x384x128xbf16> to vector<384x128xbf16>
    %cst = arith.constant dense<0.000000e+00> : vector<128x128xf32>
    %8 = tpu.matmul %5, %7, %cst {dimension_numbers = #tpu.dot_dimension_numbers<[1], [0], [0], [1], [0, 0, 1, 1], [], []>} : vector<128x384xbf16>, vector<384x128xbf16>, vector<128x128xf32> -> vector<128x128xf32>
    %c8_i32 = arith.constant 8 : i32
    %9 = arith.addi %1, %c8_i32 : i32
    %c0_4 = arith.constant 0 : index
    %10 = arith.index_cast %9 : i32 to index
    %c0_5 = arith.constant 0 : index
    %11 = vector.load %arg2[%c0_4, %10, %c0_5] : memref<1x144x384xbf16, #tpu.memory_space<vmem>>, vector<1x128x384xbf16>
    %12 = vector.shape_cast %11 : vector<1x128x384xbf16> to vector<128x384xbf16>
    %c1 = arith.constant 1 : index
    %c0_6 = arith.constant 0 : index
    %c0_7 = arith.constant 0 : index
    %13 = vector.load %arg3[%c1, %c0_6, %c0_7] : memref<3x384x128xbf16, #tpu.memory_space<vmem>>, vector<1x384x128xbf16>
    %14 = vector.shape_cast %13 : vector<1x384x128xbf16> to vector<384x128xbf16>
    %cst_8 = arith.constant dense<0.000000e+00> : vector<128x128xf32>
    %15 = tpu.matmul %12, %14, %cst_8 {dimension_numbers = #tpu.dot_dimension_numbers<[1], [0], [0], [1], [0, 0, 1, 1], [], []>} : vector<128x384xbf16>, vector<384x128xbf16>, vector<128x128xf32> -> vector<128x128xf32>
    %16 = arith.addf %8, %15 : vector<128x128xf32>
    %c16_i32 = arith.constant 16 : i32
    %17 = arith.addi %1, %c16_i32 : i32
    %c0_9 = arith.constant 0 : index
    %18 = arith.index_cast %17 : i32 to index
    %c0_10 = arith.constant 0 : index
    %19 = vector.load %arg2[%c0_9, %18, %c0_10] : memref<1x144x384xbf16, #tpu.memory_space<vmem>>, vector<1x128x384xbf16>
    %20 = vector.shape_cast %19 : vector<1x128x384xbf16> to vector<128x384xbf16>
    %c2 = arith.constant 2 : index
    %c0_11 = arith.constant 0 : index
    %c0_12 = arith.constant 0 : index
    %21 = vector.load %arg3[%c2, %c0_11, %c0_12] : memref<3x384x128xbf16, #tpu.memory_space<vmem>>, vector<1x384x128xbf16>
    %22 = vector.shape_cast %21 : vector<1x384x128xbf16> to vector<384x128xbf16>
    %cst_13 = arith.constant dense<0.000000e+00> : vector<128x128xf32>
    %23 = tpu.matmul %20, %22, %cst_13 {dimension_numbers = #tpu.dot_dimension_numbers<[1], [0], [0], [1], [0, 0, 1, 1], [], []>} : vector<128x384xbf16>, vector<384x128xbf16>, vector<128x128xf32> -> vector<128x128xf32>
    %24 = arith.addf %16, %23 : vector<128x128xf32>
    %c0_14 = arith.constant 0 : index
    %c0_15 = arith.constant 0 : index
    %c0_16 = arith.constant 0 : index
    %25 = vector.load %arg4[%c0_14, %c0_15, %c0_16] : memref<1x128x128xbf16, #tpu.memory_space<vmem>>, vector<1x128x128xbf16>
    %26 = vector.shape_cast %25 : vector<1x128x128xbf16> to vector<128x128xbf16>
    %27 = arith.extf %26 : vector<128x128xbf16> to vector<128x128xf32>
    %28 = arith.addf %24, %27 : vector<128x128xf32>
    %29 = arith.truncf %28 : vector<128x128xf32> to vector<128x128xbf16>
    %c0_17 = arith.constant 0 : index
    %c0_18 = arith.constant 0 : index
    %c0_19 = arith.constant 0 : index
    %30 = vector.load %arg5[%c0_17, %c0_18, %c0_19] : memref<1x128x128xbf16, #tpu.memory_space<vmem>>, vector<1x128x128xbf16>
    %31 = vector.shape_cast %30 : vector<1x128x128xbf16> to vector<128x128xbf16>
    %32 = vector.shape_cast %29 : vector<128x128xbf16> to vector<1x128x128xbf16>
    tpu.vector_store %arg5[%c0_17, %c0_18, %c0_19], %32 {strides = array<i32>} : memref<1x128x128xbf16, #tpu.memory_space<vmem>>, vector<1x128x128xbf16>,
    return
  }
  func.func @transform_0(%arg0: i32, %arg1: i32) -> (i32, i32, i32) {
    %c0_i32 = arith.constant 0 : i32
    %c0_i32_0 = arith.constant 0 : i32
    %c0_i32_1 = arith.constant 0 : i32
    return %arg0, %c0_i32, %c0_i32_0 : i32, i32, i32
  }
  func.func @transform_1(%arg0: i32, %arg1: i32) -> (i32, i32, i32) {
    %c0_i32 = arith.constant 0 : i32
    %c0_i32_0 = arith.constant 0 : i32
    %c0_i32_1 = arith.constant 0 : i32
    %c0_i32_2 = arith.constant 0 : i32
    return %c0_i32, %c0_i32_0, %c0_i32_1 : i32, i32, i32
  }
  func.func @transform_2(%arg0: i32, %arg1: i32) -> (i32, i32, i32) {
    %c0_i32 = arith.constant 0 : i32
    %c0_i32_0 = arith.constant 0 : i32
    return %arg0, %arg1, %c0_i32 : i32, i32, i32
  }
  func.func @transform_3(%arg0: i32, %arg1: i32) -> (i32, i32, i32) {
    %c0_i32 = arith.constant 0 : i32
    %c0_i32_0 = arith.constant 0 : i32
    return %arg0, %arg1, %c0_i32 : i32, i32, i32
  }
}

</mosaic_0001>

<llo_original>
// kernel: _lambda_.3
$region0: #{_lambda_.3}
  #allocation0 [shape = 'u32[]', space=smem, size = 0x4, offset = 0x4, fixed_abs, tag = 'smem constant byte address 0x4 - core index']
  #allocation1 [shape = 'u32[144,128]{1,0:T(1,128)}', space=vmem, size = 0x12000, scoped, tag = 'internal scratch']
  %s0 = inlined_call_operand.vmem [shape: bf16[256,128], index: 0, kind: input, shape index: {}]
  %s1 = inlined_call_operand.vmem [shape: f32[1,128], index: 1, kind: input, shape index: {}]
  %s2 = inlined_call_operand.vmem [shape: f32[1,128], index: 2, kind: input, shape index: {}]
  %s3 = inlined_call_operand.vmem [shape: bf16[256,128], index: 3, kind: output, shape index: {}]
  %s4 = sld [smem:[#allocation0]]
  $region22: #{_lambda_.3} parent=0
    _
  %s6 = ssub.s32 1, %s4
  %s7 = scalar_select 0, %s6, %s4
  // Predicated region
  $region2: #{_lambda_.3} parent=0 // pred_check
    _
  $region3: #{_lambda_.3} parent=0 // pred_check_branch
    %9 = sbr.rel (0) target = $region5
  $region4: #{_lambda_.3} parent=0 // pred_region
    _
  $region5: #{_lambda_.3} parent=0 // pred_fallthru
    _
  // Predicated region
  $region6: #{_lambda_.3} parent=0 // pred_check
    _
  $region7: #{_lambda_.3} parent=0 // pred_check_branch
    %11 = sbr.rel (0) target = $region9
  $region8: #{_lambda_.3} parent=0 // pred_region
    _
  $region9: #{_lambda_.3} parent=0 // pred_fallthru
    _
  // Predicated region
  $region10: #{_lambda_.3} parent=0 // pred_check
    _
  $region11: #{_lambda_.3} parent=0 // pred_check_branch
    %13 = sbr.rel (0) target = $region13
  $region12: #{_lambda_.3} parent=0 // pred_region
    _
  $region13: #{_lambda_.3} parent=0 // pred_fallthru
    _
  %v14 = vld [vmem:[%s0] sm:$0xf]
  %v15 = vld [vmem:[%s0 + $0x4] sm:$0xf]
  %v16 = vld [vmem:[%s0 + $0x8] sm:$0xf]
  %v17 = vld [vmem:[%s0 + $0xc] sm:$0xf]
  %v18 = vld [vmem:[%s0 + $0x10] sm:$0xf]
  %v19 = vld [vmem:[%s0 + $0x14] sm:$0xf]
  %v20 = vld [vmem:[%s0 + $0x18] sm:$0xf]
  %v21 = vld [vmem:[%s0 + $0x1c] sm:$0xf]
  %v22 = vld [vmem:[%s0 + $0x20] sm:$0xf]
  %v23 = vld [vmem:[%s0 + $0x24] sm:$0xf]
  %v24 = vld [vmem:[%s0 + $0x28] sm:$0xf]
  %v25 = vld [vmem:[%s0 + $0x2c] sm:$0xf]
  %v26 = vld [vmem:[%s0 + $0x30] sm:$0xf]
  %v27 = vld [vmem:[%s0 + $0x34] sm:$0xf]
  %v28 = vld [vmem:[%s0 + $0x38] sm:$0xf]
  %v29 = vld [vmem:[%s0 + $0x3c] sm:$0xf]
  %v30 = vld [vmem:[%s0 + $0x40] sm:$0xf]
  %v31 = vld [vmem:[%s0 + $0x44] sm:$0xf]
  %v32 = vld [vmem:[%s0 + $0x48] sm:$0xf]
  %v33 = vld [vmem:[%s0 + $0x4c] sm:$0xf]
  %v34 = vld [vmem:[%s0 + $0x50] sm:$0xf]
  %v35 = vld [vmem:[%s0 + $0x54] sm:$0xf]
  %v36 = vld [vmem:[%s0 + $0x58] sm:$0xf]
  %v37 = vld [vmem:[%s0 + $0x5c] sm:$0xf]
  %v38 = vld [vmem:[%s0 + $0x60] sm:$0xf]
  %v39 = vld [vmem:[%s0 + $0x64] sm:$0xf]
  %v40 = vld [vmem:[%s0 + $0x68] sm:$0xf]
  %v41 = vld [vmem:[%s0 + $0x6c] sm:$0xf]
  %v42 = vld [vmem:[%s0 + $0x70] sm:$0xf]
  %v43 = vld [vmem:[%s0 + $0x74] sm:$0xf]
  %v44 = vld [vmem:[%s0 + $0x78] sm:$0xf]
  %v45 = vld [vmem:[%s0 + $0x7c] sm:$0xf]
  %v46 = vunpack.c.l.bf16 %v14
  %v47 = vunpack.c.l.bf16 %v15
  %v48 = vunpack.c.l.bf16 %v16
  %v49 = vunpack.c.l.bf16 %v17
  %v50 = vunpack.c.l.bf16 %v18
  %v51 = vunpack.c.l.bf16 %v19
  %v52 = vunpack.c.l.bf16 %v20
  %v53 = vunpack.c.l.bf16 %v21
  %v54 = vunpack.c.l.bf16 %v22
  %v55 = vunpack.c.l.bf16 %v23
  %v56 = vunpack.c.l.bf16 %v24
  %v57 = vunpack.c.l.bf16 %v25
  %v58 = vunpack.c.l.bf16 %v26
  %v59 = vunpack.c.l.bf16 %v27
  %v60 = vunpack.c.l.bf16 %v28
  %v61 = vunpack.c.l.bf16 %v29
  %v62 = vunpack.c.l.bf16 %v30
  %v63 = vunpack.c.l.bf16 %v31
  %v64 = vunpack.c.l.bf16 %v32
  %v65 = vunpack.c.l.bf16 %v33
  %v66 = vunpack.c.l.bf16 %v34
  %v67 = vunpack.c.l.bf16 %v35
  %v68 = vunpack.c.l.bf16 %v36
  %v69 = vunpack.c.l.bf16 %v37
  %v70 = vunpack.c.l.bf16 %v38
  %v71 = vunpack.c.l.bf16 %v39
  %v72 = vunpack.c.l.bf16 %v40
  %v73 = vunpack.c.l.bf16 %v41
  %v74 = vunpack.c.l.bf16 %v42
  %v75 = vunpack.c.l.bf16 %v43
  %v76 = vunpack.c.l.bf16 %v44
  %v77 = vunpack.c.l.bf16 %v45
  %v78 = vld [vmem:[%s1] sm:$0x1]
  %v80 = vlaneseq
  %v81 = vshrl.u32 %v80, 7
  %v82 = vsub.s32 0, %v81
  %v83 = vrot.slane %v78, %v82
  %v85 = vmul.f32 %v46, %v83
  %v86 = vmul.f32 %v47, %v83
  %v87 = vmul.f32 %v48, %v83
  %v88 = vmul.f32 %v49, %v83
  %v89 = vmul.f32 %v50, %v83
  %v90 = vmul.f32 %v51, %v83
  %v91 = vmul.f32 %v52, %v83
  %v92 = vmul.f32 %v53, %v83
  %v93 = vmul.f32 %v54, %v83
  %v94 = vmul.f32 %v55, %v83
  %v95 = vmul.f32 %v56, %v83
  %v96 = vmul.f32 %v57, %v83
  %v97 = vmul.f32 %v58, %v83
  %v98 = vmul.f32 %v59, %v83
  %v99 = vmul.f32 %v60, %v83
  %v100 = vmul.f32 %v61, %v83
  %v101 = vmul.f32 %v62, %v83
  %v102 = vmul.f32 %v63, %v83
  %v103 = vmul.f32 %v64, %v83
  %v104 = vmul.f32 %v65, %v83
  %v105 = vmul.f32 %v66, %v83
  %v106 = vmul.f32 %v67, %v83
  %v107 = vmul.f32 %v68, %v83
  %v108 = vmul.f32 %v69, %v83
  %v109 = vmul.f32 %v70, %v83
  %v110 = vmul.f32 %v71, %v83
  %v111 = vmul.f32 %v72, %v83
  %v112 = vmul.f32 %v73, %v83
  %v113 = vmul.f32 %v74, %v83
  %v114 = vmul.f32 %v75, %v83
  %v115 = vmul.f32 %v76, %v83
  %v116 = vmul.f32 %v77, %v83
  %v117 = vld [vmem:[%s2] sm:$0x1]
  %v119 = vlaneseq
  %v120 = vshrl.u32 %v119, 7
  %v121 = vsub.s32 0, %v120
  %v122 = vrot.slane %v117, %v121
  %v124 = vadd.f32 %v85, %v122
  %v125 = vadd.f32 %v86, %v122
  %v126 = vadd.f32 %v87, %v122
  %v127 = vadd.f32 %v88, %v122
  %v128 = vadd.f32 %v89, %v122
  %v129 = vadd.f32 %v90, %v122
  %v130 = vadd.f32 %v91, %v122
  %v131 = vadd.f32 %v92, %v122
  %v132 = vadd.f32 %v93, %v122
  %v133 = vadd.f32 %v94, %v122
  %v134 = vadd.f32 %v95, %v122
  %v135 = vadd.f32 %v96, %v122
  %v136 = vadd.f32 %v97, %v122
  %v137 = vadd.f32 %v98, %v122
  %v138 = vadd.f32 %v99, %v122
  %v139 = vadd.f32 %v100, %v122
  %v140 = vadd.f32 %v101, %v122
  %v141 = vadd.f32 %v102, %v122
  %v142 = vadd.f32 %v103, %v122
  %v143 = vadd.f32 %v104, %v122
  %v144 = vadd.f32 %v105, %v122
  %v145 = vadd.f32 %v106, %v122
  %v146 = vadd.f32 %v107, %v122
  %v147 = vadd.f32 %v108, %v122
  %v148 = vadd.f32 %v109, %v122
  %v149 = vadd.f32 %v110, %v122
  %v150 = vadd.f32 %v111, %v122
  %v151 = vadd.f32 %v112, %v122
  %v152 = vadd.f32 %v113, %v122
  %v153 = vadd.f32 %v114, %v122
  %v154 = vadd.f32 %v115, %v122
  %v155 = vadd.f32 %v116, %v122
  %v156 = vmax.f32 %v124, 0.0
  %v157 = vmax.f32 %v125, 0.0
  %v158 = vmax.f32 %v126, 0.0
  %v159 = vmax.f32 %v127, 0.0
  %v160 = vmax.f32 %v128, 0.0
  %v161 = vmax.f32 %v129, 0.0
  %v162 = vmax.f32 %v130, 0.0
  %v163 = vmax.f32 %v131, 0.0
  %v164 = vmax.f32 %v132, 0.0
  %v165 = vmax.f32 %v133, 0.0
  %v166 = vmax.f32 %v134, 0.0
  %v167 = vmax.f32 %v135, 0.0
  %v168 = vmax.f32 %v136, 0.0
  %v169 = vmax.f32 %v137, 0.0
  %v170 = vmax.f32 %v138, 0.0
  %v171 = vmax.f32 %v139, 0.0
  %v172 = vmax.f32 %v140, 0.0
  %v173 = vmax.f32 %v141, 0.0
  %v174 = vmax.f32 %v142, 0.0
  %v175 = vmax.f32 %v143, 0.0
  %v176 = vmax.f32 %v144, 0.0
  %v177 = vmax.f32 %v145, 0.0
  %v178 = vmax.f32 %v146, 0.0
  %v179 = vmax.f32 %v147, 0.0
  %v180 = vmax.f32 %v148, 0.0
  %v181 = vmax.f32 %v149, 0.0
  %v182 = vmax.f32 %v150, 0.0
  %v183 = vmax.f32 %v151, 0.0
  %v184 = vmax.f32 %v152, 0.0
  %v185 = vmax.f32 %v153, 0.0
  %v186 = vmax.f32 %v154, 0.0
  %v187 = vmax.f32 %v155, 0.0
  %v188 = vpack.c.bf16 %v157, %v156
  %v189 = vpack.c.bf16 %v159, %v158
  %v190 = vpack.c.bf16 %v161, %v160
  %v191 = vpack.c.bf16 %v163, %v162
  %v192 = vpack.c.bf16 %v165, %v164
  %v193 = vpack.c.bf16 %v167, %v166
  %v194 = vpack.c.bf16 %v169, %v168
  %v195 = vpack.c.bf16 %v171, %v170
  %v196 = vpack.c.bf16 %v173, %v172
  %v197 = vpack.c.bf16 %v175, %v174
  %v198 = vpack.c.bf16 %v177, %v176
  %v199 = vpack.c.bf16 %v179, %v178
  %v200 = vpack.c.bf16 %v181, %v180
  %v201 = vpack.c.bf16 %v183, %v182
  %v202 = vpack.c.bf16 %v185, %v184
  %v203 = vpack.c.bf16 %v187, %v186
  %v220 = vunpack.c.l.b16 %v188
  %v221 = vunpack.c.h.b16 %v188
  %v222 = vunpack.c.l.b16 %v189
  %v223 = vunpack.c.h.b16 %v189
  %v224 = vunpack.c.l.b16 %v190
  %v225 = vunpack.c.h.b16 %v190
  %v226 = vunpack.c.l.b16 %v191
  %v227 = vunpack.c.h.b16 %v191
  %v228 = vunpack.c.l.b16 %v192
  %v229 = vunpack.c.h.b16 %v192
  %v230 = vunpack.c.l.b16 %v193
  %v231 = vunpack.c.h.b16 %v193
  %v232 = vunpack.c.l.b16 %v194
  %v233 = vunpack.c.h.b16 %v194
  %v234 = vunpack.c.l.b16 %v195
  %v235 = vunpack.c.h.b16 %v195
  %v236 = vunpack.c.l.b16 %v196
  %v237 = vunpack.c.h.b16 %v196
  %v238 = vunpack.c.l.b16 %v197
  %v239 = vunpack.c.h.b16 %v197
  %v240 = vunpack.c.l.b16 %v198
  %v241 = vunpack.c.h.b16 %v198
  %v242 = vunpack.c.l.b16 %v199
  %v243 = vunpack.c.h.b16 %v199
  %v244 = vunpack.c.l.b16 %v200
  %v245 = vunpack.c.h.b16 %v200
  %v246 = vunpack.c.l.b16 %v201
  %v247 = vunpack.c.h.b16 %v201
  %v248 = vunpack.c.l.b16 %v202
  %v249 = vunpack.c.h.b16 %v202
  %v250 = vunpack.c.l.b16 %v203
  %v251 = vunpack.c.h.b16 %v203
  %v252 = vpack.c.b16 %v220, %v220
  %v253 = vpack.c.b16 %v221, %v221
  %v254 = vpack.c.b16 %v222, %v222
  %v255 = vpack.c.b16 %v223, %v223
  %v256 = vpack.c.b16 %v224, %v224
  %v257 = vpack.c.b16 %v225, %v225
  %v258 = vpack.c.b16 %v226, %v226
  %v259 = vpack.c.b16 %v227, %v227
  %v260 = vpack.c.b16 %v228, %v228
  %v261 = vpack.c.b16 %v229, %v229
  %v262 = vpack.c.b16 %v230, %v230
  %v263 = vpack.c.b16 %v231, %v231
  %v264 = vpack.c.b16 %v232, %v232
  %v265 = vpack.c.b16 %v233, %v233
  %v266 = vpack.c.b16 %v234, %v234
  %v267 = vpack.c.b16 %v235, %v235
  %v268 = vpack.c.b16 %v236, %v236
  %v269 = vpack.c.b16 %v237, %v237
  %v270 = vpack.c.b16 %v238, %v238
  %v271 = vpack.c.b16 %v239, %v239
  %v272 = vpack.c.b16 %v240, %v240
  %v273 = vpack.c.b16 %v241, %v241
  %v274 = vpack.c.b16 %v242, %v242
  %v275 = vpack.c.b16 %v243, %v243
  %v276 = vpack.c.b16 %v244, %v244
  %v277 = vpack.c.b16 %v245, %v245
  %v278 = vpack.c.b16 %v246, %v246
  %v279 = vpack.c.b16 %v247, %v247
  %v280 = vpack.c.b16 %v248, %v248
  %v281 = vpack.c.b16 %v249, %v249
  %v282 = vpack.c.b16 %v250, %v250
  %v283 = vpack.c.b16 %v251, %v251
  %316 = vst [vmem:[%s3] sm:$0xf] %v252
  %317 = vst [vmem:[%s3 + $0x4] sm:$0xf] %v253
  %318 = vst [vmem:[%s3 + $0x8] sm:$0xf] %v254
  %319 = vst [vmem:[%s3 + $0xc] sm:$0xf] %v255
  %320 = vst [vmem:[%s3 + $0x10] sm:$0xf] %v256
  %321 = vst [vmem:[%s3 + $0x14] sm:$0xf] %v257
  %322 = vst [vmem:[%s3 + $0x18] sm:$0xf] %v258
  %323 = vst [vmem:[%s3 + $0x1c] sm:$0xf] %v259
  %324 = vst [vmem:[%s3 + $0x20] sm:$0xf] %v260
  %325 = vst [vmem:[%s3 + $0x24] sm:$0xf] %v261
  %326 = vst [vmem:[%s3 + $0x28] sm:$0xf] %v262
  %327 = vst [vmem:[%s3 + $0x2c] sm:$0xf] %v263
  %328 = vst [vmem:[%s3 + $0x30] sm:$0xf] %v264
  %329 = vst [vmem:[%s3 + $0x34] sm:$0xf] %v265
  %330 = vst [vmem:[%s3 + $0x38] sm:$0xf] %v266
  %331 = vst [vmem:[%s3 + $0x3c] sm:$0xf] %v267
  %332 = vst [vmem:[%s3 + $0x40] sm:$0xf] %v268
  %333 = vst [vmem:[%s3 + $0x44] sm:$0xf] %v269
  %334 = vst [vmem:[%s3 + $0x48] sm:$0xf] %v270
  %335 = vst [vmem:[%s3 + $0x4c] sm:$0xf] %v271
  %336 = vst [vmem:[%s3 + $0x50] sm:$0xf] %v272
  %337 = vst [vmem:[%s3 + $0x54] sm:$0xf] %v273
  %338 = vst [vmem:[%s3 + $0x58] sm:$0xf] %v274
  %339 = vst [vmem:[%s3 + $0x5c] sm:$0xf] %v275
  %340 = vst [vmem:[%s3 + $0x60] sm:$0xf] %v276
  %341 = vst [vmem:[%s3 + $0x64] sm:$0xf] %v277
  %342 = vst [vmem:[%s3 + $0x68] sm:$0xf] %v278
  %343 = vst [vmem:[%s3 + $0x6c] sm:$0xf] %v279
  %344 = vst [vmem:[%s3 + $0x70] sm:$0xf] %v280
  %345 = vst [vmem:[%s3 + $0x74] sm:$0xf] %v281
  %346 = vst [vmem:[%s3 + $0x78] sm:$0xf] %v282
  %347 = vst [vmem:[%s3 + $0x7c] sm:$0xf] %v283
  // Predicated region
  $region14: #{_lambda_.3} parent=0 // pred_check
    _
  $region15: #{_lambda_.3} parent=0 // pred_check_branch
    %349 = sbr.rel (0) target = $region17
  $region16: #{_lambda_.3} parent=0 // pred_region
    _
  $region17: #{_lambda_.3} parent=0 // pred_fallthru
    _
  // Predicated region
  $region18: #{_lambda_.3} parent=0 // pred_check
    _
  $region19: #{_lambda_.3} parent=0 // pred_check_branch
    %351 = sbr.rel (0) target = $region21
  $region20: #{_lambda_.3} parent=0 // pred_region
    _
  $region21: #{_lambda_.3} parent=0 // pred_fallthru
    _

// kernel: _lambda_.4
$region0: #{_lambda_.4}
  #allocation0 [shape = 'u32[]', space=smem, size = 0x4, offset = 0x4, fixed_abs, tag = 'smem constant byte address 0x4 - core index']
  #allocation1 [shape = 'u32[144,128]{1,0:T(1,128)}', space=vmem, size = 0x12000, scoped, tag = 'internal scratch']
  %s0 = inlined_call_operand.vmem [shape: bf16[2,144,384], index: 0, kind: input, shape index: {}]
  %s1 = inlined_call_operand.vmem [shape: bf16[3,384,128], index: 1, kind: input, shape index: {}]
  %s2 = inlined_call_operand.vmem [shape: f32[1,128], index: 2, kind: input, shape index: {}]
  %s3 = inlined_call_operand.vmem [shape: f32[1,128], index: 3, kind: input, shape index: {}]
  %s4 = inlined_call_operand.vmem [shape: bf16[2,128,128], index: 4, kind: output, shape index: {}]
  %s5 = sld [smem:[#allocation0]]
  $region49: #{_lambda_.4} parent=0
    _
  %s7 = ssub.s32 1, %s5
  %s8 = scalar_select 0, %s7, %s5
  loop: start=0, step=1, limit=4
  $region2: #{_lambda_.4} parent=0 // loop_pre_header
    _
  $region3: #{_lambda_.4} parent=0 // loop_header
    %s10 = sphi 0, %s14
    %p11 = scmp.ge.s32.totalorder %s10, 4
    %s17 = sphi 0, %s29
    %s18 = sphi 0, %s25
    %s19 = sphi 0, %s17
    %s20 = sphi 0, %s18
    %s21 = sphi 0, %s19
    %s22 = sphi 0, %s20
    %s32 = sphi 0, %s34
    %s35 = sphi 0, %s32
    %s36 = sphi 0, %s35
    %s52 = sphi 0, %s36
    %s56 = sphi 0, %s56
    %s58 = sphi 0, %s56
    %s59 = sphi 0, %s58
    %s73 = sphi 0, %s59
    %s77 = sphi 0, %s77
    %s79 = sphi 0, %s77
    %s80 = sphi 0, %s79
    %s94 = sphi 0, %s80
    %s98 = sphi 0, %s98
    %s100 = sphi 0, %s98
    %s101 = sphi 0, %s100
    %s115 = sphi 0, %s101
    %s123 = sphi 0, %s125
    %s126 = sphi 0, %s123
    %s127 = sphi 0, %s126
    %s143 = sphi 0, %s127
  $region4: #{_lambda_.4} parent=0 // loop_header_branch
    %13 = sbr.rel (%p11) target = $region8
  $region5: #{_lambda_.4} parent=0 // loop_body
    %s15 = ssub.s32 %s10, 1
    %s16 = ssub.s32 %s10, 2
    %s23 = sadd.s32 1, %s18
    %p24 = scmp.ge.s32.totalorder %s23, 1
    %s25 = scalar_select %p24, 0, %s23
    %s26 = sadd.s32 1, %s17
    %s27 = scalar_select %p24, %s26, %s17
    %p28 = scmp.ge.s32.totalorder %s27, 2
    %s29 = scalar_select %p28, 0, %s27
    %s30 = ssub.s32 %s17, %s29
    %p31 = scmp.eq.s32.totalorder %s30, 0
    %s33 = sadd.s32 %s32, 1
    %s34 = scalar_select %p31, %s32, %s33
    %p37 = pneg %p31
    %p38 = scmp.eq.s32.totalorder %s10, 1
    %p39 = por %p37, %p38
    %p40 = scmp.ne.s32.totalorder %s32, %s35
    %p41 = scmp.eq.s32.totalorder %s10, 0
    %p42 = por %p40, %p41
    %p43 = scmp.ne.s32.totalorder %s32, %s35
    %p44 = scmp.eq.s32.totalorder %s15, 1
    %p45 = por %p43, %p44
    %p46 = scmp.ne.s32.totalorder %s35, %s36
    %p47 = scmp.eq.s32.totalorder %s15, 0
    %p48 = por %p46, %p47
    %p49 = scmp.ne.s32.totalorder %s35, %s36
    %p50 = scmp.eq.s32.totalorder %s16, 1
    %p51 = por %p49, %p50
    %p53 = scmp.ne.s32.totalorder %s36, %s52
    %p54 = scmp.eq.s32.totalorder %s16, 0
    %p55 = por %p53, %p54
    %s57 = sadd.s32 %s56, 1
    %p60 = scmp.eq.s32.totalorder %s10, 1
    %p61 = scmp.ne.s32.totalorder %s56, %s58
    %p62 = scmp.eq.s32.totalorder %s10, 0
    %p63 = por %p61, %p62
    %p64 = scmp.ne.s32.totalorder %s56, %s58
    %p65 = scmp.eq.s32.totalorder %s15, 1
    %p66 = por %p64, %p65
    %p67 = scmp.ne.s32.totalorder %s58, %s59
    %p68 = scmp.eq.s32.totalorder %s15, 0
    %p69 = por %p67, %p68
    %p70 = scmp.ne.s32.totalorder %s58, %s59
    %p71 = scmp.eq.s32.totalorder %s16, 1
    %p72 = por %p70, %p71
    %p74 = scmp.ne.s32.totalorder %s59, %s73
    %p75 = scmp.eq.s32.totalorder %s16, 0
    %p76 = por %p74, %p75
    %s78 = sadd.s32 %s77, 1
    %p81 = scmp.eq.s32.totalorder %s10, 1
    %p82 = scmp.ne.s32.totalorder %s77, %s79
    %p83 = scmp.eq.s32.totalorder %s10, 0
    %p84 = por %p82, %p83
    %p85 = scmp.ne.s32.totalorder %s77, %s79
    %p86 = scmp.eq.s32.totalorder %s15, 1
    %p87 = por %p85, %p86
    %p88 = scmp.ne.s32.totalorder %s79, %s80
    %p89 = scmp.eq.s32.totalorder %s15, 0
    %p90 = por %p88, %p89
    %p91 = scmp.ne.s32.totalorder %s79, %s80
    %p92 = scmp.eq.s32.totalorder %s16, 1
    %p93 = por %p91, %p92
    %p95 = scmp.ne.s32.totalorder %s80, %s94
    %p96 = scmp.eq.s32.totalorder %s16, 0
    %p97 = por %p95, %p96
    %s99 = sadd.s32 %s98, 1
    %p102 = scmp.eq.s32.totalorder %s10, 1
    %p103 = scmp.ne.s32.totalorder %s98, %s100
    %p104 = scmp.eq.s32.totalorder %s10, 0
    %p105 = por %p103, %p104
    %p106 = scmp.ne.s32.totalorder %s98, %s100
    %p107 = scmp.eq.s32.totalorder %s15, 1
    %p108 = por %p106, %p107
    %p109 = scmp.ne.s32.totalorder %s100, %s101
    %p110 = scmp.eq.s32.totalorder %s15, 0
    %p111 = por %p109, %p110
    %p112 = scmp.ne.s32.totalorder %s100, %s101
    %p113 = scmp.eq.s32.totalorder %s16, 1
    %p114 = por %p112, %p113
    %p116 = scmp.ne.s32.totalorder %s101, %s115
    %p117 = scmp.eq.s32.totalorder %s16, 0
    %p118 = por %p116, %p117
    %s119 = ssub.s32 %s17, %s29
    %s120 = ssub.s32 %s18, %s25
    %s121 = sor.u32 %s119, %s120
    %p122 = scmp.eq.s32.totalorder %s121, 0
    %s124 = sadd.s32 %s123, 1
    %s125 = scalar_select %p122, %s123, %s124
    %p128 = pneg %p122
    %p129 = scmp.eq.s32.totalorder %s10, 1
    %p130 = por %p128, %p129
    %p131 = scmp.ne.s32.totalorder %s123, %s126
    %p132 = scmp.eq.s32.totalorder %s10, 0
    %p133 = por %p131, %p132
    %p134 = scmp.ne.s32.totalorder %s123, %s126
    %p135 = scmp.eq.s32.totalorder %s15, 1
    %p136 = por %p134, %p135
    %p137 = scmp.ne.s32.totalorder %s126, %s127
    %p138 = scmp.eq.s32.totalorder %s15, 0
    %p139 = por %p137, %p138
    %p140 = scmp.ne.s32.totalorder %s126, %s127
    %p141 = scmp.eq.s32.totalorder %s16, 1
    %p142 = por %p140, %p141
    %p144 = scmp.ne.s32.totalorder %s127, %s143
    %p145 = scmp.eq.s32.totalorder %s16, 0
    %p146 = por %p144, %p145
    %p147 = scmp.le.s32.totalorder 1, %s10
    %p148 = scmp.lt.s32.totalorder %s10, 3
    %p149 = pnand %p147, %p148
    %p150 = pneg %p149
    // Predicated region
    $region9: #{_lambda_.4} parent=5 // pred_check
      _
    $region10: #{_lambda_.4} parent=5 // pred_check_branch
      %152 = sbr.rel (%p149) target = $region12
    $region11: #{_lambda_.4} parent=5 // pred_region
      %s153 = ssub.s32 %s10, 1
      // Predicated region
      $region13: #{_lambda_.4} parent=11 // pred_check
        %p154 = pneg %p69
      $region14: #{_lambda_.4} parent=11 // pred_check_branch
        %156 = sbr.rel (%p154) target = $region16
      $region15: #{_lambda_.4} parent=11 // pred_region
        _
      $region16: #{_lambda_.4} parent=11 // pred_fallthru
        _
      // Predicated region
      $region17: #{_lambda_.4} parent=11 // pred_check
        %p157 = pneg %p90
      $region18: #{_lambda_.4} parent=11 // pred_check_branch
        %159 = sbr.rel (%p157) target = $region20
      $region19: #{_lambda_.4} parent=11 // pred_region
        _
      $region20: #{_lambda_.4} parent=11 // pred_fallthru
        _
      // Predicated region
      $region21: #{_lambda_.4} parent=11 // pred_check
        %p160 = pneg %p111
      $region22: #{_lambda_.4} parent=11 // pred_check_branch
        %162 = sbr.rel (%p160) target = $region24
      $region23: #{_lambda_.4} parent=11 // pred_region
        _
      $region24: #{_lambda_.4} parent=11 // pred_fallthru
        _
    $region12: #{_lambda_.4} parent=5 // pred_fallthru
      _
    %p163 = scmp.lt.s32.totalorder %s10, 2
    // Predicated region
    $region25: #{_lambda_.4} parent=5 // pred_check
      %p164 = pneg %p163
    $region26: #{_lambda_.4} parent=5 // pred_check_branch
      %166 = sbr.rel (%p164) target = $region28
    $region27: #{_lambda_.4} parent=5 // pred_region
      // Predicated region
      $region29: #{_lambda_.4} parent=27 // pred_check
        %p167 = pneg %p42
      $region30: #{_lambda_.4} parent=27 // pred_check_branch
        %169 = sbr.rel (%p167) target = $region32
      $region31: #{_lambda_.4} parent=27 // pred_region
        %p170 = scmp.lt.s32.totalorder %s17, 1
        %s171 = scalar_select %p170, %s17, 1
        %s172 = smul.addr %s171, 54
        %s173 = smul.addr %s172, 4
        %s174 = scalar_lea.vmem %s0, %s173
      $region32: #{_lambda_.4} parent=27 // pred_fallthru
        _
    $region28: #{_lambda_.4} parent=5 // pred_fallthru
      _
    %p175 = scmp.le.s32.totalorder 1, %s10
    %p176 = scmp.lt.s32.totalorder %s10, 3
    %p177 = pnand %p175, %p176
    %p178 = pneg %p177
    // Predicated region
    $region33: #{_lambda_.4} parent=5 // pred_check
      _
    $region34: #{_lambda_.4} parent=5 // pred_check_branch
      %180 = sbr.rel (%p177) target = $region36
    $region35: #{_lambda_.4} parent=5 // pred_region
      %s181 = ssub.s32 %s10, 1
      %p182 = scmp.lt.s32.totalorder %s19, 1
      %s183 = scalar_select %p182, %s19, 1
      %s184 = smul.addr %s183, 54
      %s185 = smul.addr %s184, 4
      %s186 = scalar_lea.vmem %s0, %s185
      %p187 = pneg %p48
      %p188 = pneg %p45
      %p189 = pneg %p69
      %p190 = pneg %p66
      %p191 = pneg %p90
      %p192 = pneg %p87
      %p193 = pneg %p111
      %p194 = pneg %p108
      %p195 = pneg %p139
      %p196 = pneg %p136
      %s197 = smul.u32 16, %s20
      %p198 = scmp.lt.s32.totalorder %s19, 1
      %s199 = scalar_select %p198, %s19, 1
      %p200 = scmp.lt.s32.totalorder %s197, 15
      %s201 = scalar_select %p200, %s197, 15
      %s202 = smul.addr %s199, 16
      %s203 = sadd.s32 %s201, %s202
      %s204 = smul.addr %s203, 4
      %s205 = scalar_lea.vmem %s4, %s204
      %p206 = scmp.lt.s32.totalorder %s19, 1
      %s207 = scalar_select %p206, %s19, 1
      %s208 = smul.addr %s207, 54
      %s209 = smul.addr %s208, 4
      %s210 = scalar_lea.vmem %s0, %s209
      %s211 = smul.u32 16, %s20
      %p212 = scmp.lt.s32.totalorder %s19, 1
      %s213 = scalar_select %p212, %s19, 1
      %p214 = scmp.lt.s32.totalorder %s211, 15
      %s215 = scalar_select %p214, %s211, 15
      %s216 = smul.addr %s213, 16
      %s217 = sadd.s32 %s215, %s216
      %s218 = smul.addr %s217, 4
      %s219 = scalar_lea.vmem %s4, %s218
      %s220 = smul.u32 16, %s20
      %s222 = smul.u32 %s20, 128
      %s223 = sshra.s32 %s222, 3
      %s224 = sand.u32 %s222, 7
      %s225 = smul.u32 %s223, 3
      %s226 = smul.addr %s225, 4
      %s227 = scalar_lea.vmem %s210, %s226
      %v228 = vld [vmem:[%s227] sm:$0xff]
      %v229 = vld [vmem:[%s227 + $0x8] sm:$0xf]
      %v230 = vld [vmem:[%s227 + $0xc] sm:$0xff]
      %v231 = vld [vmem:[%s227 + $0x14] sm:$0xf]
      %v232 = vld [vmem:[%s227 + $0x18] sm:$0xff]
      %v233 = vld [vmem:[%s227 + $0x20] sm:$0xf]
      %v234 = vld [vmem:[%s227 + $0x24] sm:$0xff]
      %v235 = vld [vmem:[%s227 + $0x2c] sm:$0xf]
      %v236 = vld [vmem:[%s227 + $0x30] sm:$0xff]
      %v237 = vld [vmem:[%s227 + $0x38] sm:$0xf]
      %v238 = vld [vmem:[%s227 + $0x3c] sm:$0xff]
      %v239 = vld [vmem:[%s227 + $0x44] sm:$0xf]
      %v240 = vld [vmem:[%s227 + $0x48] sm:$0xff]
      %v241 = vld [vmem:[%s227 + $0x50] sm:$0xf]
      %v242 = vld [vmem:[%s227 + $0x54] sm:$0xff]
      %v243 = vld [vmem:[%s227 + $0x5c] sm:$0xf]
      %v244 = vld [vmem:[%s227 + $0x60] sm:$0xff]
      %v245 = vld [vmem:[%s227 + $0x68] sm:$0xf]
      %v246 = vld [vmem:[%s227 + $0x6c] sm:$0xff]
      %v247 = vld [vmem:[%s227 + $0x74] sm:$0xf]
      %v248 = vld [vmem:[%s227 + $0x78] sm:$0xff]
      %v249 = vld [vmem:[%s227 + $0x80] sm:$0xf]
      %v250 = vld [vmem:[%s227 + $0x84] sm:$0xff]
      %v251 = vld [vmem:[%s227 + $0x8c] sm:$0xf]
      %v252 = vld [vmem:[%s227 + $0x90] sm:$0xff]
      %v253 = vld [vmem:[%s227 + $0x98] sm:$0xf]
      %v254 = vld [vmem:[%s227 + $0x9c] sm:$0xff]
      %v255 = vld [vmem:[%s227 + $0xa4] sm:$0xf]
      %v256 = vld [vmem:[%s227 + $0xa8] sm:$0xff]
      %v257 = vld [vmem:[%s227 + $0xb0] sm:$0xf]
      %v258 = vld [vmem:[%s227 + $0xb4] sm:$0xff]
      %v259 = vld [vmem:[%s227 + $0xbc] sm:$0xf]
      %v260 = vld [vmem:[%s1] sm:$0xf]
      %v261 = vld [vmem:[%s1 + $0x4] sm:$0xf]
      %v262 = vld [vmem:[%s1 + $0x8] sm:$0xf]
      %v263 = vld [vmem:[%s1 + $0xc] sm:$0xf]
      %v264 = vld [vmem:[%s1 + $0x10] sm:$0xf]
      %v265 = vld [vmem:[%s1 + $0x14] sm:$0xf]
      %v266 = vld [vmem:[%s1 + $0x18] sm:$0xf]
      %v267 = vld [vmem:[%s1 + $0x1c] sm:$0xf]
      %v268 = vld [vmem:[%s1 + $0x20] sm:$0xf]
      %v269 = vld [vmem:[%s1 + $0x24] sm:$0xf]
      %v270 = vld [vmem:[%s1 + $0x28] sm:$0xf]
      %v271 = vld [vmem:[%s1 + $0x2c] sm:$0xf]
      %v272 = vld [vmem:[%s1 + $0x30] sm:$0xf]
      %v273 = vld [vmem:[%s1 + $0x34] sm:$0xf]
      %v274 = vld [vmem:[%s1 + $0x38] sm:$0xf]
      %v275 = vld [vmem:[%s1 + $0x3c] sm:$0xf]
      %v276 = vld [vmem:[%s1 + $0x40] sm:$0xf]
      %v277 = vld [vmem:[%s1 + $0x44] sm:$0xf]
      %v278 = vld [vmem:[%s1 + $0x48] sm:$0xf]
      %v279 = vld [vmem:[%s1 + $0x4c] sm:$0xf]
      %v280 = vld [vmem:[%s1 + $0x50] sm:$0xf]
      %v281 = vld [vmem:[%s1 + $0x54] sm:$0xf]
      %v282 = vld [vmem:[%s1 + $0x58] sm:$0xf]
      %v283 = vld [vmem:[%s1 + $0x5c] sm:$0xf]
      %v284 = vld [vmem:[%s1 + $0x60] sm:$0xf]
      %v285 = vld [vmem:[%s1 + $0x64] sm:$0xf]
      %v286 = vld [vmem:[%s1 + $0x68] sm:$0xf]
      %v287 = vld [vmem:[%s1 + $0x6c] sm:$0xf]
      %v288 = vld [vmem:[%s1 + $0x70] sm:$0xf]
      %v289 = vld [vmem:[%s1 + $0x74] sm:$0xf]
      %v290 = vld [vmem:[%s1 + $0x78] sm:$0xf]
      %v291 = vld [vmem:[%s1 + $0x7c] sm:$0xf]
      %v292 = vld [vmem:[%s1 + $0x80] sm:$0xf]
      %v293 = vld [vmem:[%s1 + $0x84] sm:$0xf]
      %v294 = vld [vmem:[%s1 + $0x88] sm:$0xf]
      %v295 = vld [vmem:[%s1 + $0x8c] sm:$0xf]
      %v296 = vld [vmem:[%s1 + $0x90] sm:$0xf]
      %v297 = vld [vmem:[%s1 + $0x94] sm:$0xf]
      %v298 = vld [vmem:[%s1 + $0x98] sm:$0xf]
      %v299 = vld [vmem:[%s1 + $0x9c] sm:$0xf]
      %v300 = vld [vmem:[%s1 + $0xa0] sm:$0xf]
      %v301 = vld [vmem:[%s1 + $0xa4] sm:$0xf]
      %v302 = vld [vmem:[%s1 + $0xa8] sm:$0xf]
      %v303 = vld [vmem:[%s1 + $0xac] sm:$0xf]
      %v304 = vld [vmem:[%s1 + $0xb0] sm:$0xf]
      %v305 = vld [vmem:[%s1 + $0xb4] sm:$0xf]
      %v306 = vld [vmem:[%s1 + $0xb8] sm:$0xf]
      %v307 = vld [vmem:[%s1 + $0xbc] sm:$0xf]
      %s308 = sadd.s32 %s222, 8
      %s309 = sshra.s32 %s308, 3
      %s310 = sand.u32 %s308, 7
      %s311 = smul.u32 %s309, 3
      %s312 = smul.addr %s311, 4
      %s313 = scalar_lea.vmem %s210, %s312
      %v314 = vld [vmem:[%s313] sm:$0xff]
      %v315 = vld [vmem:[%s313 + $0x8] sm:$0xf]
      %v316 = vld [vmem:[%s313 + $0xc] sm:$0xff]
      %v317 = vld [vmem:[%s313 + $0x14] sm:$0xf]
      %v318 = vld [vmem:[%s313 + $0x18] sm:$0xff]
      %v319 = vld [vmem:[%s313 + $0x20] sm:$0xf]
      %v320 = vld [vmem:[%s313 + $0x24] sm:$0xff]
      %v321 = vld [vmem:[%s313 + $0x2c] sm:$0xf]
      %v322 = vld [vmem:[%s313 + $0x30] sm:$0xff]
      %v323 = vld [vmem:[%s313 + $0x38] sm:$0xf]
      %v324 = vld [vmem:[%s313 + $0x3c] sm:$0xff]
      %v325 = vld [vmem:[%s313 + $0x44] sm:$0xf]
      %v326 = vld [vmem:[%s313 + $0x48] sm:$0xff]
      %v327 = vld [vmem:[%s313 + $0x50] sm:$0xf]
      %v328 = vld [vmem:[%s313 + $0x54] sm:$0xff]
      %v329 = vld [vmem:[%s313 + $0x5c] sm:$0xf]
      %v330 = vld [vmem:[%s313 + $0x60] sm:$0xff]
      %v331 = vld [vmem:[%s313 + $0x68] sm:$0xf]
      %v332 = vld [vmem:[%s313 + $0x6c] sm:$0xff]
      %v333 = vld [vmem:[%s313 + $0x74] sm:$0xf]
      %v334 = vld [vmem:[%s313 + $0x78] sm:$0xff]
      %v335 = vld [vmem:[%s313 + $0x80] sm:$0xf]
      %v336 = vld [vmem:[%s313 + $0x84] sm:$0xff]
      %v337 = vld [vmem:[%s313 + $0x8c] sm:$0xf]
      %v338 = vld [vmem:[%s313 + $0x90] sm:$0xff]
      %v339 = vld [vmem:[%s313 + $0x98] sm:$0xf]
      %v340 = vld [vmem:[%s313 + $0x9c] sm:$0xff]
      %v341 = vld [vmem:[%s313 + $0xa4] sm:$0xf]
      %v342 = vld [vmem:[%s313 + $0xa8] sm:$0xff]
      %v343 = vld [vmem:[%s313 + $0xb0] sm:$0xf]
      %v344 = vld [vmem:[%s313 + $0xb4] sm:$0xff]
      %v345 = vld [vmem:[%s313 + $0xbc] sm:$0xf]
      %s346 = scalar_lea.vmem %s1, 192
      %v347 = vld [vmem:[%s346] sm:$0xf]
      %v348 = vld [vmem:[%s346 + $0x4] sm:$0xf]
      %v349 = vld [vmem:[%s346 + $0x8] sm:$0xf]
      %v350 = vld [vmem:[%s346 + $0xc] sm:$0xf]
      %v351 = vld [vmem:[%s346 + $0x10] sm:$0xf]
      %v352 = vld [vmem:[%s346 + $0x14] sm:$0xf]
      %v353 = vld [vmem:[%s346 + $0x18] sm:$0xf]
      %v354 = vld [vmem:[%s346 + $0x1c] sm:$0xf]
      %v355 = vld [vmem:[%s346 + $0x20] sm:$0xf]
      %v356 = vld [vmem:[%s346 + $0x24] sm:$0xf]
      %v357 = vld [vmem:[%s346 + $0x28] sm:$0xf]
      %v358 = vld [vmem:[%s346 + $0x2c] sm:$0xf]
      %v359 = vld [vmem:[%s346 + $0x30] sm:$0xf]
      %v360 = vld [vmem:[%s346 + $0x34] sm:$0xf]
      %v361 = vld [vmem:[%s346 + $0x38] sm:$0xf]
      %v362 = vld [vmem:[%s346 + $0x3c] sm:$0xf]
      %v363 = vld [vmem:[%s346 + $0x40] sm:$0xf]
      %v364 = vld [vmem:[%s346 + $0x44] sm:$0xf]
      %v365 = vld [vmem:[%s346 + $0x48] sm:$0xf]
      %v366 = vld [vmem:[%s346 + $0x4c] sm:$0xf]
      %v367 = vld [vmem:[%s346 + $0x50] sm:$0xf]
      %v368 = vld [vmem:[%s346 + $0x54] sm:$0xf]
      %v369 = vld [vmem:[%s346 + $0x58] sm:$0xf]
      %v370 = vld [vmem:[%s346 + $0x5c] sm:$0xf]
      %v371 = vld [vmem:[%s346 + $0x60] sm:$0xf]
      %v372 = vld [vmem:[%s346 + $0x64] sm:$0xf]
      %v373 = vld [vmem:[%s346 + $0x68] sm:$0xf]
      %v374 = vld [vmem:[%s346 + $0x6c] sm:$0xf]
      %v375 = vld [vmem:[%s346 + $0x70] sm:$0xf]
      %v376 = vld [vmem:[%s346 + $0x74] sm:$0xf]
      %v377 = vld [vmem:[%s346 + $0x78] sm:$0xf]
      %v378 = vld [vmem:[%s346 + $0x7c] sm:$0xf]
      %v379 = vld [vmem:[%s346 + $0x80] sm:$0xf]
      %v380 = vld [vmem:[%s346 + $0x84] sm:$0xf]
      %v381 = vld [vmem:[%s346 + $0x88] sm:$0xf]
      %v382 = vld [vmem:[%s346 + $0x8c] sm:$0xf]
      %v383 = vld [vmem:[%s346 + $0x90] sm:$0xf]
      %v384 = vld [vmem:[%s346 + $0x94] sm:$0xf]
      %v385 = vld [vmem:[%s346 + $0x98] sm:$0xf]
      %v386 = vld [vmem:[%s346 + $0x9c] sm:$0xf]
      %v387 = vld [vmem:[%s346 + $0xa0] sm:$0xf]
      %v388 = vld [vmem:[%s346 + $0xa4] sm:$0xf]
      %v389 = vld [vmem:[%s346 + $0xa8] sm:$0xf]
      %v390 = vld [vmem:[%s346 + $0xac] sm:$0xf]
      %v391 = vld [vmem:[%s346 + $0xb0] sm:$0xf]
      %v392 = vld [vmem:[%s346 + $0xb4] sm:$0xf]
      %v393 = vld [vmem:[%s346 + $0xb8] sm:$0xf]
      %v394 = vld [vmem:[%s346 + $0xbc] sm:$0xf]
      %v427 = vunpack.c.l.b16 %v314
      %v428 = vunpack.c.h.b16 %v314
      %v429 = vunpack.c.l.b16 %v315
      %v430 = vunpack.c.l.b16 %v316
      %v431 = vunpack.c.h.b16 %v316
      %v432 = vunpack.c.l.b16 %v317
      %v433 = vunpack.c.l.b16 %v318
      %v434 = vunpack.c.h.b16 %v318
      %v435 = vunpack.c.l.b16 %v319
      %v436 = vunpack.c.l.b16 %v320
      %v437 = vunpack.c.h.b16 %v320
      %v438 = vunpack.c.l.b16 %v321
      %v439 = vunpack.c.l.b16 %v322
      %v440 = vunpack.c.h.b16 %v322
      %v441 = vunpack.c.l.b16 %v323
      %v442 = vunpack.c.l.b16 %v324
      %v443 = vunpack.c.h.b16 %v324
      %v444 = vunpack.c.l.b16 %v325
      %v445 = vunpack.c.l.b16 %v326
      %v446 = vunpack.c.h.b16 %v326
      %v447 = vunpack.c.l.b16 %v327
      %v448 = vunpack.c.l.b16 %v328
      %v449 = vunpack.c.h.b16 %v328
      %v450 = vunpack.c.l.b16 %v329
      %v451 = vunpack.c.l.b16 %v330
      %v452 = vunpack.c.h.b16 %v330
      %v453 = vunpack.c.l.b16 %v331
      %v454 = vunpack.c.l.b16 %v332
      %v455 = vunpack.c.h.b16 %v332
      %v456 = vunpack.c.l.b16 %v333
      %v457 = vunpack.c.l.b16 %v334
      %v458 = vunpack.c.h.b16 %v334
      %v459 = vunpack.c.l.b16 %v335
      %v460 = vunpack.c.l.b16 %v336
      %v461 = vunpack.c.h.b16 %v336
      %v462 = vunpack.c.l.b16 %v337
      %v463 = vunpack.c.l.b16 %v338
      %v464 = vunpack.c.h.b16 %v338
      %v465 = vunpack.c.l.b16 %v339
      %v466 = vunpack.c.l.b16 %v340
      %v467 = vunpack.c.h.b16 %v340
      %v468 = vunpack.c.l.b16 %v341
      %v469 = vunpack.c.l.b16 %v342
      %v470 = vunpack.c.h.b16 %v342
      %v471 = vunpack.c.l.b16 %v343
      %v472 = vunpack.c.l.b16 %v344
      %v473 = vunpack.c.h.b16 %v344
      %v474 = vunpack.c.l.b16 %v345
      %v475 = vpack.c.b16 %v430, %v427
      %v476 = vpack.c.b16 %v431, %v428
      %v477 = vpack.c.b16 %v432, %v429
      %v478 = vpack.c.b16 %v436, %v433
      %v479 = vpack.c.b16 %v437, %v434
      %v480 = vpack.c.b16 %v438, %v435
      %v481 = vpack.c.b16 %v442, %v439
      %v482 = vpack.c.b16 %v443, %v440
      %v483 = vpack.c.b16 %v444, %v441
      %v484 = vpack.c.b16 %v448, %v445
      %v485 = vpack.c.b16 %v449, %v446
      %v486 = vpack.c.b16 %v450, %v447
      %v487 = vpack.c.b16 %v454, %v451
      %v488 = vpack.c.b16 %v455, %v452
      %v489 = vpack.c.b16 %v456, %v453
      %v490 = vpack.c.b16 %v460, %v457
      %v491 = vpack.c.b16 %v461, %v458
      %v492 = vpack.c.b16 %v462, %v459
      %v493 = vpack.c.b16 %v466, %v463
      %v494 = vpack.c.b16 %v467, %v464
      %v495 = vpack.c.b16 %v468, %v465
      %v496 = vpack.c.b16 %v472, %v469
      %v497 = vpack.c.b16 %v473, %v470
      %v498 = vpack.c.b16 %v474, %v471
      %v571 = vunpack.c.l.b16 %v347
      %v572 = vunpack.c.l.b16 %v348
      %v573 = vunpack.c.l.b16 %v349
      %v574 = vunpack.c.l.b16 %v350
      %v575 = vunpack.c.l.b16 %v351
      %v576 = vunpack.c.l.b16 %v352
      %v577 = vunpack.c.l.b16 %v353
      %v578 = vunpack.c.l.b16 %v354
      %v579 = vunpack.c.l.b16 %v355
      %v580 = vunpack.c.l.b16 %v356
      %v581 = vunpack.c.l.b16 %v357
      %v582 = vunpack.c.l.b16 %v358
      %v583 = vunpack.c.l.b16 %v359
      %v584 = vunpack.c.l.b16 %v360
      %v585 = vunpack.c.l.b16 %v361
      %v586 = vunpack.c.l.b16 %v362
      %v587 = vunpack.c.l.b16 %v363
      %v588 = vunpack.c.l.b16 %v364
      %v589 = vunpack.c.l.b16 %v365
      %v590 = vunpack.c.l.b16 %v366
      %v591 = vunpack.c.l.b16 %v367
      %v592 = vunpack.c.l.b16 %v368
      %v593 = vunpack.c.l.b16 %v369
      %v594 = vunpack.c.l.b16 %v370
      %v595 = vunpack.c.l.b16 %v371
      %v596 = vunpack.c.l.b16 %v372
      %v597 = vunpack.c.l.b16 %v373
      %v598 = vunpack.c.l.b16 %v374
      %v599 = vunpack.c.l.b16 %v375
      %v600 = vunpack.c.l.b16 %v376
      %v601 = vunpack.c.l.b16 %v377
      %v602 = vunpack.c.l.b16 %v378
      %v603 = vunpack.c.l.b16 %v379
      %v604 = vunpack.c.l.b16 %v380
      %v605 = vunpack.c.l.b16 %v381
      %v606 = vunpack.c.l.b16 %v382
      %v607 = vunpack.c.l.b16 %v383
      %v608 = vunpack.c.l.b16 %v384
      %v609 = vunpack.c.l.b16 %v385
      %v610 = vunpack.c.l.b16 %v386
      %v611 = vunpack.c.l.b16 %v387
      %v612 = vunpack.c.l.b16 %v388
      %v613 = vunpack.c.l.b16 %v389
      %v614 = vunpack.c.l.b16 %v390
      %v615 = vunpack.c.l.b16 %v391
      %v616 = vunpack.c.l.b16 %v392
      %v617 = vunpack.c.l.b16 %v393
      %v618 = vunpack.c.l.b16 %v394
      %v619 = vpack.c.b16 %v572, %v571
      %v620 = vpack.c.b16 %v574, %v573
      %v621 = vpack.c.b16 %v576, %v575
      %v622 = vpack.c.b16 %v578, %v577
      %v623 = vpack.c.b16 %v580, %v579
      %v624 = vpack.c.b16 %v582, %v581
      %v625 = vpack.c.b16 %v584, %v583
      %v626 = vpack.c.b16 %v586, %v585
      %v627 = vpack.c.b16 %v588, %v587
      %v628 = vpack.c.b16 %v590, %v589
      %v629 = vpack.c.b16 %v592, %v591
      %v630 = vpack.c.b16 %v594, %v593
      %v631 = vpack.c.b16 %v596, %v595
      %v632 = vpack.c.b16 %v598, %v597
      %v633 = vpack.c.b16 %v600, %v599
      %v634 = vpack.c.b16 %v602, %v601
      %v635 = vpack.c.b16 %v604, %v603
      %v636 = vpack.c.b16 %v606, %v605
      %v637 = vpack.c.b16 %v608, %v607
      %v638 = vpack.c.b16 %v610, %v609
      %v639 = vpack.c.b16 %v612, %v611
      %v640 = vpack.c.b16 %v614, %v613
      %v641 = vpack.c.b16 %v616, %v615
      %v642 = vpack.c.b16 %v618, %v617
      %667 = vmatprep.subr.bf16.mxu0 0
      %668 = vmatpush1.bf16.msra.mxu0 %v626
      %669 = vmatprep.subr.bf16.mxu0 0
      %670 = vmatpush1.bf16.msra.mxu0 %v625
      %671 = vmatprep.subr.bf16.mxu0 0
      %672 = vmatpush1.bf16.msra.mxu0 %v624
      %673 = vmatprep.subr.bf16.mxu0 0
      %674 = vmatpush1.bf16.msra.mxu0 %v623
      %675 = vmatprep.subr.bf16.mxu0 0
      %676 = vmatpush1.bf16.msra.mxu0 %v622
      %677 = vmatprep.subr.bf16.mxu0 0
      %678 = vmatpush1.bf16.msra.mxu0 %v621
      %679 = vmatprep.subr.bf16.mxu0 0
      %680 = vmatpush1.bf16.msra.mxu0 %v620
      %681 = vmatprep.subr.bf16.mxu0 0
      %682 = vmatpush1.bf16.msra.mxu0 %v619
      %683 = vmatprep.subr.bf16.mxu0 0
      %684 = vmatpush2.bf16.msra.mxu0 %v634
      %685 = vmatprep.subr.bf16.mxu0 0
      %686 = vmatpush2.bf16.msra.mxu0 %v633
      %687 = vmatprep.subr.bf16.mxu0 0
      %688 = vmatpush2.bf16.msra.mxu0 %v632
      %689 = vmatprep.subr.bf16.mxu0 0
      %690 = vmatpush2.bf16.msra.mxu0 %v631
      %691 = vmatprep.subr.bf16.mxu0 0
      %692 = vmatpush2.bf16.msra.mxu0 %v630
      %693 = vmatprep.subr.bf16.mxu0 0
      %694 = vmatpush2.bf16.msra.mxu0 %v629
      %695 = vmatprep.subr.bf16.mxu0 0
      %696 = vmatpush2.bf16.msra.mxu0 %v628
      %697 = vmatprep.subr.bf16.mxu0 0
      %698 = vmatpush2.bf16.msra.mxu0 %v627
      %699 = vmatprep.mubr.bf16.mxu0 %v476
      %700 = vmatmul.mubr.bf16.gmra.mxu0 %v475
      %v701 = vpop.f32.mrf.mxu0
      %v702 = vadd.f32 0.0, %v701
      %v703 = vpop.f32.mrf.mxu0
      %v704 = vpop.f32.mrf.mxu0
      %v705 = vadd.f32 0.0, %v704
      %v706 = vpop.f32.mrf.mxu0
      %707 = vmatprep.mubr.bf16.mxu0 %v479
      %708 = vmatmul.mubr.bf16.gmra.mxu0 %v478
      %v709 = vpop.f32.mrf.mxu0
      %v710 = vadd.f32 0.0, %v709
      %v711 = vpop.f32.mrf.mxu0
      %v712 = vpop.f32.mrf.mxu0
      %v713 = vadd.f32 0.0, %v712
      %v714 = vpop.f32.mrf.mxu0
      %715 = vmatprep.mubr.bf16.mxu0 %v482
      %716 = vmatmul.mubr.bf16.gmra.mxu0 %v481
      %v717 = vpop.f32.mrf.mxu0
      %v718 = vadd.f32 0.0, %v717
      %v719 = vpop.f32.mrf.mxu0
      %v720 = vpop.f32.mrf.mxu0
      %v721 = vadd.f32 0.0, %v720
      %v722 = vpop.f32.mrf.mxu0
      %723 = vmatprep.mubr.bf16.mxu0 %v485
      %724 = vmatmul.mubr.bf16.gmra.mxu0 %v484
      %v725 = vpop.f32.mrf.mxu0
      %v726 = vadd.f32 0.0, %v725
      %v727 = vpop.f32.mrf.mxu0
      %v728 = vpop.f32.mrf.mxu0
      %v729 = vadd.f32 0.0, %v728
      %v730 = vpop.f32.mrf.mxu0
      %731 = vmatprep.mubr.bf16.mxu0 %v488
      %732 = vmatmul.mubr.bf16.gmra.mxu0 %v487
      %v733 = vpop.f32.mrf.mxu0
      %v734 = vadd.f32 0.0, %v733
      %v735 = vpop.f32.mrf.mxu0
      %v736 = vpop.f32.mrf.mxu0
      %v737 = vadd.f32 0.0, %v736
      %v738 = vpop.f32.mrf.mxu0
      %739 = vmatprep.mubr.bf16.mxu0 %v491
      %740 = vmatmul.mubr.bf16.gmra.mxu0 %v490
      %v741 = vpop.f32.mrf.mxu0
      %v742 = vadd.f32 0.0, %v741
      %v743 = vpop.f32.mrf.mxu0
      %v744 = vpop.f32.mrf.mxu0
      %v745 = vadd.f32 0.0, %v744
      %v746 = vpop.f32.mrf.mxu0
      %747 = vmatprep.mubr.bf16.mxu0 %v494
      %748 = vmatmul.mubr.bf16.gmra.mxu0 %v493
      %v749 = vpop.f32.mrf.mxu0
      %v750 = vadd.f32 0.0, %v749
      %v751 = vpop.f32.mrf.mxu0
      %v752 = vpop.f32.mrf.mxu0
      %v753 = vadd.f32 0.0, %v752
      %v754 = vpop.f32.mrf.mxu0
      %755 = vmatprep.mubr.bf16.mxu0 %v497
      %756 = vmatmul.mubr.bf16.gmra.mxu0 %v496
      %v757 = vpop.f32.mrf.mxu0
      %v758 = vadd.f32 0.0, %v757
      %v759 = vpop.f32.mrf.mxu0
      %v760 = vpop.f32.mrf.mxu0
      %v761 = vadd.f32 0.0, %v760
      %v762 = vpop.f32.mrf.mxu0
      %763 = vdwg.mxu0
      %764 = vmatprep.subr.bf16.mxu0 0
      %765 = vmatpush1.bf16.msra.mxu0 %v642
      %766 = vmatprep.subr.bf16.mxu0 0
      %767 = vmatpush1.bf16.msra.mxu0 %v641
      %768 = vmatprep.subr.bf16.mxu0 0
      %769 = vmatpush1.bf16.msra.mxu0 %v640
      %770 = vmatprep.subr.bf16.mxu0 0
      %771 = vmatpush1.bf16.msra.mxu0 %v639
      %772 = vmatprep.subr.bf16.mxu0 0
      %773 = vmatpush1.bf16.msra.mxu0 %v638
      %774 = vmatprep.subr.bf16.mxu0 0
      %775 = vmatpush1.bf16.msra.mxu0 %v637
      %776 = vmatprep.subr.bf16.mxu0 0
      %777 = vmatpush1.bf16.msra.mxu0 %v636
      %778 = vmatprep.subr.bf16.mxu0 0
      %779 = vmatpush1.bf16.msra.mxu0 %v635
      %780 = vmatprep.subr.bf16.mxu0 0
      %781 = vmatpush2.bf16.msra.mxu0 0
      %782 = vmatprep.subr.bf16.mxu0 0
      %783 = vmatpush2.bf16.msra.mxu0 0
      %784 = vmatprep.subr.bf16.mxu0 0
      %785 = vmatpush2.bf16.msra.mxu0 0
      %786 = vmatprep.subr.bf16.mxu0 0
      %787 = vmatpush2.bf16.msra.mxu0 0
      %788 = vmatprep.subr.bf16.mxu0 0
      %789 = vmatpush2.bf16.msra.mxu0 0
      %790 = vmatprep.subr.bf16.mxu0 0
      %791 = vmatpush2.bf16.msra.mxu0 0
      %792 = vmatprep.subr.bf16.mxu0 0
      %793 = vmatpush2.bf16.msra.mxu0 0
      %794 = vmatprep.subr.bf16.mxu0 0
      %795 = vmatpush2.bf16.msra.mxu0 0
      %796 = vmatprep.mubr.bf16.mxu0 0
      %797 = vmatmul.mubr.bf16.gmra.mxu0 %v477
      %v798 = vpop.f32.mrf.mxu0
      %v799 = vadd.f32 %v702, %v798
      %v800 = vpop.f32.mrf.mxu0
      %v801 = vpop.f32.mrf.mxu0
      %v802 = vadd.f32 %v705, %v801
      %v803 = vpop.f32.mrf.mxu0
      %804 = vmatprep.mubr.bf16.mxu0 0
      %805 = vmatmul.mubr.bf16.gmra.mxu0 %v480
      %v806 = vpop.f32.mrf.mxu0
      %v807 = vadd.f32 %v710, %v806
      %v808 = vpop.f32.mrf.mxu0
      %v809 = vpop.f32.mrf.mxu0
      %v810 = vadd.f32 %v713, %v809
      %v811 = vpop.f32.mrf.mxu0
      %812 = vmatprep.mubr.bf16.mxu0 0
      %813 = vmatmul.mubr.bf16.gmra.mxu0 %v483
      %v814 = vpop.f32.mrf.mxu0
      %v815 = vadd.f32 %v718, %v814
      %v816 = vpop.f32.mrf.mxu0
      %v817 = vpop.f32.mrf.mxu0
      %v818 = vadd.f32 %v721, %v817
      %v819 = vpop.f32.mrf.mxu0
      %820 = vmatprep.mubr.bf16.mxu0 0
      %821 = vmatmul.mubr.bf16.gmra.mxu0 %v486
      %v822 = vpop.f32.mrf.mxu0
      %v823 = vadd.f32 %v726, %v822
      %v824 = vpop.f32.mrf.mxu0
      %v825 = vpop.f32.mrf.mxu0
      %v826 = vadd.f32 %v729, %v825
      %v827 = vpop.f32.mrf.mxu0
      %828 = vmatprep.mubr.bf16.mxu0 0
      %829 = vmatmul.mubr.bf16.gmra.mxu0 %v489
      %v830 = vpop.f32.mrf.mxu0
      %v831 = vadd.f32 %v734, %v830
      %v832 = vpop.f32.mrf.mxu0
      %v833 = vpop.f32.mrf.mxu0
      %v834 = vadd.f32 %v737, %v833
      %v835 = vpop.f32.mrf.mxu0
      %836 = vmatprep.mubr.bf16.mxu0 0
      %837 = vmatmul.mubr.bf16.gmra.mxu0 %v492
      %v838 = vpop.f32.mrf.mxu0
      %v839 = vadd.f32 %v742, %v838
      %v840 = vpop.f32.mrf.mxu0
      %v841 = vpop.f32.mrf.mxu0
      %v842 = vadd.f32 %v745, %v841
      %v843 = vpop.f32.mrf.mxu0
      %844 = vmatprep.mubr.bf16.mxu0 0
      %845 = vmatmul.mubr.bf16.gmra.mxu0 %v495
      %v846 = vpop.f32.mrf.mxu0
      %v847 = vadd.f32 %v750, %v846
      %v848 = vpop.f32.mrf.mxu0
      %v849 = vpop.f32.mrf.mxu0
      %v850 = vadd.f32 %v753, %v849
      %v851 = vpop.f32.mrf.mxu0
      %852 = vmatprep.mubr.bf16.mxu0 0
      %853 = vmatmul.mubr.bf16.gmra.mxu0 %v498
      %v854 = vpop.f32.mrf.mxu0
      %v855 = vadd.f32 %v758, %v854
      %v856 = vpop.f32.mrf.mxu0
      %v857 = vpop.f32.mrf.mxu0
      %v858 = vadd.f32 %v761, %v857
      %v859 = vpop.f32.mrf.mxu0
      %860 = vdwg.mxu0
      %v893 = vunpack.c.l.b16 %v228
      %v894 = vunpack.c.h.b16 %v228
      %v895 = vunpack.c.l.b16 %v229
      %v896 = vunpack.c.l.b16 %v230
      %v897 = vunpack.c.h.b16 %v230
      %v898 = vunpack.c.l.b16 %v231
      %v899 = vunpack.c.l.b16 %v232
      %v900 = vunpack.c.h.b16 %v232
      %v901 = vunpack.c.l.b16 %v233
      %v902 = vunpack.c.l.b16 %v234
      %v903 = vunpack.c.h.b16 %v234
      %v904 = vunpack.c.l.b16 %v235
      %v905 = vunpack.c.l.b16 %v236
      %v906 = vunpack.c.h.b16 %v236
      %v907 = vunpack.c.l.b16 %v237
      %v908 = vunpack.c.l.b16 %v238
      %v909 = vunpack.c.h.b16 %v238
      %v910 = vunpack.c.l.b16 %v239
      %v911 = vunpack.c.l.b16 %v240
      %v912 = vunpack.c.h.b16 %v240
      %v913 = vunpack.c.l.b16 %v241
      %v914 = vunpack.c.l.b16 %v242
      %v915 = vunpack.c.h.b16 %v242
      %v916 = vunpack.c.l.b16 %v243
      %v917 = vunpack.c.l.b16 %v244
      %v918 = vunpack.c.h.b16 %v244
      %v919 = vunpack.c.l.b16 %v245
      %v920 = vunpack.c.l.b16 %v246
      %v921 = vunpack.c.h.b16 %v246
      %v922 = vunpack.c.l.b16 %v247
      %v923 = vunpack.c.l.b16 %v248
      %v924 = vunpack.c.h.b16 %v248
      %v925 = vunpack.c.l.b16 %v249
      %v926 = vunpack.c.l.b16 %v250
      %v927 = vunpack.c.h.b16 %v250
      %v928 = vunpack.c.l.b16 %v251
      %v929 = vunpack.c.l.b16 %v252
      %v930 = vunpack.c.h.b16 %v252
      %v931 = vunpack.c.l.b16 %v253
      %v932 = vunpack.c.l.b16 %v254
      %v933 = vunpack.c.h.b16 %v254
      %v934 = vunpack.c.l.b16 %v255
      %v935 = vunpack.c.l.b16 %v256
      %v936 = vunpack.c.h.b16 %v256
      %v937 = vunpack.c.l.b16 %v257
      %v938 = vunpack.c.l.b16 %v258
      %v939 = vunpack.c.h.b16 %v258
      %v940 = vunpack.c.l.b16 %v259
      %v941 = vpack.c.b16 %v896, %v893
      %v942 = vpack.c.b16 %v897, %v894
      %v943 = vpack.c.b16 %v898, %v895
      %v944 = vpack.c.b16 %v902, %v899
      %v945 = vpack.c.b16 %v903, %v900
      %v946 = vpack.c.b16 %v904, %v901
      %v947 = vpack.c.b16 %v908, %v905
      %v948 = vpack.c.b16 %v909, %v906
      %v949 = vpack.c.b16 %v910, %v907
      %v950 = vpack.c.b16 %v914, %v911
      %v951 = vpack.c.b16 %v915, %v912
      %v952 = vpack.c.b16 %v916, %v913
      %v953 = vpack.c.b16 %v920, %v917
      %v954 = vpack.c.b16 %v921, %v918
      %v955 = vpack.c.b16 %v922, %v919
      %v956 = vpack.c.b16 %v926, %v923
      %v957 = vpack.c.b16 %v927, %v924
      %v958 = vpack.c.b16 %v928, %v925
      %v959 = vpack.c.b16 %v932, %v929
      %v960 = vpack.c.b16 %v933, %v930
      %v961 = vpack.c.b16 %v934, %v931
      %v962 = vpack.c.b16 %v938, %v935
      %v963 = vpack.c.b16 %v939, %v936
      %v964 = vpack.c.b16 %v940, %v937
      %v1037 = vunpack.c.l.b16 %v260
      %v1038 = vunpack.c.l.b16 %v261
      %v1039 = vunpack.c.l.b16 %v262
      %v1040 = vunpack.c.l.b16 %v263
      %v1041 = vunpack.c.l.b16 %v264
      %v1042 = vunpack.c.l.b16 %v265
      %v1043 = vunpack.c.l.b16 %v266
      %v1044 = vunpack.c.l.b16 %v267
      %v1045 = vunpack.c.l.b16 %v268
      %v1046 = vunpack.c.l.b16 %v269
      %v1047 = vunpack.c.l.b16 %v270
      %v1048 = vunpack.c.l.b16 %v271
      %v1049 = vunpack.c.l.b16 %v272
      %v1050 = vunpack.c.l.b16 %v273
      %v1051 = vunpack.c.l.b16 %v274
      %v1052 = vunpack.c.l.b16 %v275
      %v1053 = vunpack.c.l.b16 %v276
      %v1054 = vunpack.c.l.b16 %v277
      %v1055 = vunpack.c.l.b16 %v278
      %v1056 = vunpack.c.l.b16 %v279
      %v1057 = vunpack.c.l.b16 %v280
      %v1058 = vunpack.c.l.b16 %v281
      %v1059 = vunpack.c.l.b16 %v282
      %v1060 = vunpack.c.l.b16 %v283
      %v1061 = vunpack.c.l.b16 %v284
      %v1062 = vunpack.c.l.b16 %v285
      %v1063 = vunpack.c.l.b16 %v286
      %v1064 = vunpack.c.l.b16 %v287
      %v1065 = vunpack.c.l.b16 %v288
      %v1066 = vunpack.c.l.b16 %v289
      %v1067 = vunpack.c.l.b16 %v290
      %v1068 = vunpack.c.l.b16 %v291
      %v1069 = vunpack.c.l.b16 %v292
      %v1070 = vunpack.c.l.b16 %v293
      %v1071 = vunpack.c.l.b16 %v294
      %v1072 = vunpack.c.l.b16 %v295
      %v1073 = vunpack.c.l.b16 %v296
      %v1074 = vunpack.c.l.b16 %v297
      %v1075 = vunpack.c.l.b16 %v298
      %v1076 = vunpack.c.l.b16 %v299
      %v1077 = vunpack.c.l.b16 %v300
      %v1078 = vunpack.c.l.b16 %v301
      %v1079 = vunpack.c.l.b16 %v302
      %v1080 = vunpack.c.l.b16 %v303
      %v1081 = vunpack.c.l.b16 %v304
      %v1082 = vunpack.c.l.b16 %v305
      %v1083 = vunpack.c.l.b16 %v306
      %v1084 = vunpack.c.l.b16 %v307
      %v1085 = vpack.c.b16 %v1038, %v1037
      %v1086 = vpack.c.b16 %v1040, %v1039
      %v1087 = vpack.c.b16 %v1042, %v1041
      %v1088 = vpack.c.b16 %v1044, %v1043
      %v1089 = vpack.c.b16 %v1046, %v1045
      %v1090 = vpack.c.b16 %v1048, %v1047
      %v1091 = vpack.c.b16 %v1050, %v1049
      %v1092 = vpack.c.b16 %v1052, %v1051
      %v1093 = vpack.c.b16 %v1054, %v1053
      %v1094 = vpack.c.b16 %v1056, %v1055
      %v1095 = vpack.c.b16 %v1058, %v1057
      %v1096 = vpack.c.b16 %v1060, %v1059
      %v1097 = vpack.c.b16 %v1062, %v1061
      %v1098 = vpack.c.b16 %v1064, %v1063
      %v1099 = vpack.c.b16 %v1066, %v1065
      %v1100 = vpack.c.b16 %v1068, %v1067
      %v1101 = vpack.c.b16 %v1070, %v1069
      %v1102 = vpack.c.b16 %v1072, %v1071
      %v1103 = vpack.c.b16 %v1074, %v1073
      %v1104 = vpack.c.b16 %v1076, %v1075
      %v1105 = vpack.c.b16 %v1078, %v1077
      %v1106 = vpack.c.b16 %v1080, %v1079
      %v1107 = vpack.c.b16 %v1082, %v1081
      %v1108 = vpack.c.b16 %v1084, %v1083
      %1133 = vmatprep.subr.bf16.mxu0 0
      %1134 = vmatpush1.bf16.msra.mxu0 %v1092
      %1135 = vmatprep.subr.bf16.mxu0 0
      %1136 = vmatpush1.bf16.msra.mxu0 %v1091
      %1137 = vmatprep.subr.bf16.mxu0 0
      %1138 = vmatpush1.bf16.msra.mxu0 %v1090
      %1139 = vmatprep.subr.bf16.mxu0 0
      %1140 = vmatpush1.bf16.msra.mxu0 %v1089
      %1141 = vmatprep.subr.bf16.mxu0 0
      %1142 = vmatpush1.bf16.msra.mxu0 %v1088
      %1143 = vmatprep.subr.bf16.mxu0 0
      %1144 = vmatpush1.bf16.msra.mxu0 %v1087
      %1145 = vmatprep.subr.bf16.mxu0 0
      %1146 = vmatpush1.bf16.msra.mxu0 %v1086
      %1147 = vmatprep.subr.bf16.mxu0 0
      %1148 = vmatpush1.bf16.msra.mxu0 %v1085
      %1149 = vmatprep.subr.bf16.mxu0 0
      %1150 = vmatpush2.bf16.msra.mxu0 %v1100
      %1151 = vmatprep.subr.bf16.mxu0 0
      %1152 = vmatpush2.bf16.msra.mxu0 %v1099
      %1153 = vmatprep.subr.bf16.mxu0 0
      %1154 = vmatpush2.bf16.msra.mxu0 %v1098
      %1155 = vmatprep.subr.bf16.mxu0 0
      %1156 = vmatpush2.bf16.msra.mxu0 %v1097
      %1157 = vmatprep.subr.bf16.mxu0 0
      %1158 = vmatpush2.bf16.msra.mxu0 %v1096
      %1159 = vmatprep.subr.bf16.mxu0 0
      %1160 = vmatpush2.bf16.msra.mxu0 %v1095
      %1161 = vmatprep.subr.bf16.mxu0 0
      %1162 = vmatpush2.bf16.msra.mxu0 %v1094
      %1163 = vmatprep.subr.bf16.mxu0 0
      %1164 = vmatpush2.bf16.msra.mxu0 %v1093
      %1165 = vmatprep.mubr.bf16.mxu0 %v942
      %1166 = vmatmul.mubr.bf16.gmra.mxu0 %v941
      %v1167 = vpop.f32.mrf.mxu0
      %v1168 = vadd.f32 %v799, %v1167
      %v1169 = vpop.f32.mrf.mxu0
      %v1170 = vpop.f32.mrf.mxu0
      %v1171 = vadd.f32 %v802, %v1170
      %v1172 = vpop.f32.mrf.mxu0
      %1173 = vmatprep.mubr.bf16.mxu0 %v945
      %1174 = vmatmul.mubr.bf16.gmra.mxu0 %v944
      %v1175 = vpop.f32.mrf.mxu0
      %v1176 = vadd.f32 %v807, %v1175
      %v1177 = vpop.f32.mrf.mxu0
      %v1178 = vpop.f32.mrf.mxu0
      %v1179 = vadd.f32 %v810, %v1178
      %v1180 = vpop.f32.mrf.mxu0
      %1181 = vmatprep.mubr.bf16.mxu0 %v948
      %1182 = vmatmul.mubr.bf16.gmra.mxu0 %v947
      %v1183 = vpop.f32.mrf.mxu0
      %v1184 = vadd.f32 %v815, %v1183
      %v1185 = vpop.f32.mrf.mxu0
      %v1186 = vpop.f32.mrf.mxu0
      %v1187 = vadd.f32 %v818, %v1186
      %v1188 = vpop.f32.mrf.mxu0
      %1189 = vmatprep.mubr.bf16.mxu0 %v951
      %1190 = vmatmul.mubr.bf16.gmra.mxu0 %v950
      %v1191 = vpop.f32.mrf.mxu0
      %v1192 = vadd.f32 %v823, %v1191
      %v1193 = vpop.f32.mrf.mxu0
      %v1194 = vpop.f32.mrf.mxu0
      %v1195 = vadd.f32 %v826, %v1194
      %v1196 = vpop.f32.mrf.mxu0
      %1197 = vmatprep.mubr.bf16.mxu0 %v954
      %1198 = vmatmul.mubr.bf16.gmra.mxu0 %v953
      %v1199 = vpop.f32.mrf.mxu0
      %v1200 = vadd.f32 %v831, %v1199
      %v1201 = vpop.f32.mrf.mxu0
      %v1202 = vpop.f32.mrf.mxu0
      %v1203 = vadd.f32 %v834, %v1202
      %v1204 = vpop.f32.mrf.mxu0
      %1205 = vmatprep.mubr.bf16.mxu0 %v957
      %1206 = vmatmul.mubr.bf16.gmra.mxu0 %v956
      %v1207 = vpop.f32.mrf.mxu0
      %v1208 = vadd.f32 %v839, %v1207
      %v1209 = vpop.f32.mrf.mxu0
      %v1210 = vpop.f32.mrf.mxu0
      %v1211 = vadd.f32 %v842, %v1210
      %v1212 = vpop.f32.mrf.mxu0
      %1213 = vmatprep.mubr.bf16.mxu0 %v960
      %1214 = vmatmul.mubr.bf16.gmra.mxu0 %v959
      %v1215 = vpop.f32.mrf.mxu0
      %v1216 = vadd.f32 %v847, %v1215
      %v1217 = vpop.f32.mrf.mxu0
      %v1218 = vpop.f32.mrf.mxu0
      %v1219 = vadd.f32 %v850, %v1218
      %v1220 = vpop.f32.mrf.mxu0
      %1221 = vmatprep.mubr.bf16.mxu0 %v963
      %1222 = vmatmul.mubr.bf16.gmra.mxu0 %v962
      %v1223 = vpop.f32.mrf.mxu0
      %v1224 = vadd.f32 %v855, %v1223
      %v1225 = vpop.f32.mrf.mxu0
      %v1226 = vpop.f32.mrf.mxu0
      %v1227 = vadd.f32 %v858, %v1226
      %v1228 = vpop.f32.mrf.mxu0
      %1229 = vdwg.mxu0
      %1230 = vmatprep.subr.bf16.mxu0 0
      %1231 = vmatpush1.bf16.msra.mxu0 %v1108
      %1232 = vmatprep.subr.bf16.mxu0 0
      %1233 = vmatpush1.bf16.msra.mxu0 %v1107
      %1234 = vmatprep.subr.bf16.mxu0 0
      %1235 = vmatpush1.bf16.msra.mxu0 %v1106
      %1236 = vmatprep.subr.bf16.mxu0 0
      %1237 = vmatpush1.bf16.msra.mxu0 %v1105
      %1238 = vmatprep.subr.bf16.mxu0 0
      %1239 = vmatpush1.bf16.msra.mxu0 %v1104
      %1240 = vmatprep.subr.bf16.mxu0 0
      %1241 = vmatpush1.bf16.msra.mxu0 %v1103
      %1242 = vmatprep.subr.bf16.mxu0 0
      %1243 = vmatpush1.bf16.msra.mxu0 %v1102
      %1244 = vmatprep.subr.bf16.mxu0 0
      %1245 = vmatpush1.bf16.msra.mxu0 %v1101
      %1246 = vmatprep.subr.bf16.mxu0 0
      %1247 = vmatpush2.bf16.msra.mxu0 0
      %1248 = vmatprep.subr.bf16.mxu0 0
      %1249 = vmatpush2.bf16.msra.mxu0 0
      %1250 = vmatprep.subr.bf16.mxu0 0
      %1251 = vmatpush2.bf16.msra.mxu0 0
      %1252 = vmatprep.subr.bf16.mxu0 0
      %1253 = vmatpush2.bf16.msra.mxu0 0
      %1254 = vmatprep.subr.bf16.mxu0 0
      %1255 = vmatpush2.bf16.msra.mxu0 0
      %1256 = vmatprep.subr.bf16.mxu0 0
      %1257 = vmatpush2.bf16.msra.mxu0 0
      %1258 = vmatprep.subr.bf16.mxu0 0
      %1259 = vmatpush2.bf16.msra.mxu0 0
      %1260 = vmatprep.subr.bf16.mxu0 0
      %1261 = vmatpush2.bf16.msra.mxu0 0
      %1262 = vmatprep.mubr.bf16.mxu0 0
      %1263 = vmatmul.mubr.bf16.gmra.mxu0 %v943
      %v1264 = vpop.f32.mrf.mxu0
      %v1265 = vadd.f32 %v1168, %v1264
      %v1266 = vpop.f32.mrf.mxu0
      %v1267 = vpop.f32.mrf.mxu0
      %v1268 = vadd.f32 %v1171, %v1267
      %v1269 = vpop.f32.mrf.mxu0
      %1270 = vmatprep.mubr.bf16.mxu0 0
      %1271 = vmatmul.mubr.bf16.gmra.mxu0 %v946
      %v1272 = vpop.f32.mrf.mxu0
      %v1273 = vadd.f32 %v1176, %v1272
      %v1274 = vpop.f32.mrf.mxu0
      %v1275 = vpop.f32.mrf.mxu0
      %v1276 = vadd.f32 %v1179, %v1275
      %v1277 = vpop.f32.mrf.mxu0
      %1278 = vmatprep.mubr.bf16.mxu0 0
      %1279 = vmatmul.mubr.bf16.gmra.mxu0 %v949
      %v1280 = vpop.f32.mrf.mxu0
      %v1281 = vadd.f32 %v1184, %v1280
      %v1282 = vpop.f32.mrf.mxu0
      %v1283 = vpop.f32.mrf.mxu0
      %v1284 = vadd.f32 %v1187, %v1283
      %v1285 = vpop.f32.mrf.mxu0
      %1286 = vmatprep.mubr.bf16.mxu0 0
      %1287 = vmatmul.mubr.bf16.gmra.mxu0 %v952
      %v1288 = vpop.f32.mrf.mxu0
      %v1289 = vadd.f32 %v1192, %v1288
      %v1290 = vpop.f32.mrf.mxu0
      %v1291 = vpop.f32.mrf.mxu0
      %v1292 = vadd.f32 %v1195, %v1291
      %v1293 = vpop.f32.mrf.mxu0
      %1294 = vmatprep.mubr.bf16.mxu0 0
      %1295 = vmatmul.mubr.bf16.gmra.mxu0 %v955
      %v1296 = vpop.f32.mrf.mxu0
      %v1297 = vadd.f32 %v1200, %v1296
      %v1298 = vpop.f32.mrf.mxu0
      %v1299 = vpop.f32.mrf.mxu0
      %v1300 = vadd.f32 %v1203, %v1299
      %v1301 = vpop.f32.mrf.mxu0
      %1302 = vmatprep.mubr.bf16.mxu0 0
      %1303 = vmatmul.mubr.bf16.gmra.mxu0 %v958
      %v1304 = vpop.f32.mrf.mxu0
      %v1305 = vadd.f32 %v1208, %v1304
      %v1306 = vpop.f32.mrf.mxu0
      %v1307 = vpop.f32.mrf.mxu0
      %v1308 = vadd.f32 %v1211, %v1307
      %v1309 = vpop.f32.mrf.mxu0
      %1310 = vmatprep.mubr.bf16.mxu0 0
      %1311 = vmatmul.mubr.bf16.gmra.mxu0 %v961
      %v1312 = vpop.f32.mrf.mxu0
      %v1313 = vadd.f32 %v1216, %v1312
      %v1314 = vpop.f32.mrf.mxu0
      %v1315 = vpop.f32.mrf.mxu0
      %v1316 = vadd.f32 %v1219, %v1315
      %v1317 = vpop.f32.mrf.mxu0
      %1318 = vmatprep.mubr.bf16.mxu0 0
      %1319 = vmatmul.mubr.bf16.gmra.mxu0 %v964
      %v1320 = vpop.f32.mrf.mxu0
      %v1321 = vadd.f32 %v1224, %v1320
      %v1322 = vpop.f32.mrf.mxu0
      %v1323 = vpop.f32.mrf.mxu0
      %v1324 = vadd.f32 %v1227, %v1323
      %v1325 = vpop.f32.mrf.mxu0
      %1326 = vdwg.mxu0
      %s1327 = sadd.s32 %s222, 16
      %s1328 = sshra.s32 %s1327, 3
      %s1329 = sand.u32 %s1327, 7
      %s1330 = smul.u32 %s1328, 3
      %s1331 = smul.addr %s1330, 4
      %s1332 = scalar_lea.vmem %s210, %s1331
      %v1333 = vld [vmem:[%s1332] sm:$0xff]
      %v1334 = vld [vmem:[%s1332 + $0x8] sm:$0xf]
      %v1335 = vld [vmem:[%s1332 + $0xc] sm:$0xff]
      %v1336 = vld [vmem:[%s1332 + $0x14] sm:$0xf]
      %v1337 = vld [vmem:[%s1332 + $0x18] sm:$0xff]
      %v1338 = vld [vmem:[%s1332 + $0x20] sm:$0xf]
      %v1339 = vld [vmem:[%s1332 + $0x24] sm:$0xff]
      %v1340 = vld [vmem:[%s1332 + $0x2c] sm:$0xf]
      %v1341 = vld [vmem:[%s1332 + $0x30] sm:$0xff]
      %v1342 = vld [vmem:[%s1332 + $0x38] sm:$0xf]
      %v1343 = vld [vmem:[%s1332 + $0x3c] sm:$0xff]
      %v1344 = vld [vmem:[%s1332 + $0x44] sm:$0xf]
      %v1345 = vld [vmem:[%s1332 + $0x48] sm:$0xff]
      %v1346 = vld [vmem:[%s1332 + $0x50] sm:$0xf]
      %v1347 = vld [vmem:[%s1332 + $0x54] sm:$0xff]
      %v1348 = vld [vmem:[%s1332 + $0x5c] sm:$0xf]
      %v1349 = vld [vmem:[%s1332 + $0x60] sm:$0xff]
      %v1350 = vld [vmem:[%s1332 + $0x68] sm:$0xf]
      %v1351 = vld [vmem:[%s1332 + $0x6c] sm:$0xff]
      %v1352 = vld [vmem:[%s1332 + $0x74] sm:$0xf]
      %v1353 = vld [vmem:[%s1332 + $0x78] sm:$0xff]
      %v1354 = vld [vmem:[%s1332 + $0x80] sm:$0xf]
      %v1355 = vld [vmem:[%s1332 + $0x84] sm:$0xff]
      %v1356 = vld [vmem:[%s1332 + $0x8c] sm:$0xf]
      %v1357 = vld [vmem:[%s1332 + $0x90] sm:$0xff]
      %v1358 = vld [vmem:[%s1332 + $0x98] sm:$0xf]
      %v1359 = vld [vmem:[%s1332 + $0x9c] sm:$0xff]
      %v1360 = vld [vmem:[%s1332 + $0xa4] sm:$0xf]
      %v1361 = vld [vmem:[%s1332 + $0xa8] sm:$0xff]
      %v1362 = vld [vmem:[%s1332 + $0xb0] sm:$0xf]
      %v1363 = vld [vmem:[%s1332 + $0xb4] sm:$0xff]
      %v1364 = vld [vmem:[%s1332 + $0xbc] sm:$0xf]
      %s1365 = scalar_lea.vmem %s1, 384
      %v1366 = vld [vmem:[%s1365] sm:$0xf]
      %v1367 = vld [vmem:[%s1365 + $0x4] sm:$0xf]
      %v1368 = vld [vmem:[%s1365 + $0x8] sm:$0xf]
      %v1369 = vld [vmem:[%s1365 + $0xc] sm:$0xf]
      %v1370 = vld [vmem:[%s1365 + $0x10] sm:$0xf]
      %v1371 = vld [vmem:[%s1365 + $0x14] sm:$0xf]
      %v1372 = vld [vmem:[%s1365 + $0x18] sm:$0xf]
      %v1373 = vld [vmem:[%s1365 + $0x1c] sm:$0xf]
      %v1374 = vld [vmem:[%s1365 + $0x20] sm:$0xf]
      %v1375 = vld [vmem:[%s1365 + $0x24] sm:$0xf]
      %v1376 = vld [vmem:[%s1365 + $0x28] sm:$0xf]
      %v1377 = vld [vmem:[%s1365 + $0x2c] sm:$0xf]
      %v1378 = vld [vmem:[%s1365 + $0x30] sm:$0xf]
      %v1379 = vld [vmem:[%s1365 + $0x34] sm:$0xf]
      %v1380 = vld [vmem:[%s1365 + $0x38] sm:$0xf]
      %v1381 = vld [vmem:[%s1365 + $0x3c] sm:$0xf]
      %v1382 = vld [vmem:[%s1365 + $0x40] sm:$0xf]
      %v1383 = vld [vmem:[%s1365 + $0x44] sm:$0xf]
      %v1384 = vld [vmem:[%s1365 + $0x48] sm:$0xf]
      %v1385 = vld [vmem:[%s1365 + $0x4c] sm:$0xf]
      %v1386 = vld [vmem:[%s1365 + $0x50] sm:$0xf]
      %v1387 = vld [vmem:[%s1365 + $0x54] sm:$0xf]
      %v1388 = vld [vmem:[%s1365 + $0x58] sm:$0xf]
      %v1389 = vld [vmem:[%s1365 + $0x5c] sm:$0xf]
      %v1390 = vld [vmem:[%s1365 + $0x60] sm:$0xf]
      %v1391 = vld [vmem:[%s1365 + $0x64] sm:$0xf]
      %v1392 = vld [vmem:[%s1365 + $0x68] sm:$0xf]
      %v1393 = vld [vmem:[%s1365 + $0x6c] sm:$0xf]
      %v1394 = vld [vmem:[%s1365 + $0x70] sm:$0xf]
      %v1395 = vld [vmem:[%s1365 + $0x74] sm:$0xf]
      %v1396 = vld [vmem:[%s1365 + $0x78] sm:$0xf]
      %v1397 = vld [vmem:[%s1365 + $0x7c] sm:$0xf]
      %v1398 = vld [vmem:[%s1365 + $0x80] sm:$0xf]
      %v1399 = vld [vmem:[%s1365 + $0x84] sm:$0xf]
      %v1400 = vld [vmem:[%s1365 + $0x88] sm:$0xf]
      %v1401 = vld [vmem:[%s1365 + $0x8c] sm:$0xf]
      %v1402 = vld [vmem:[%s1365 + $0x90] sm:$0xf]
      %v1403 = vld [vmem:[%s1365 + $0x94] sm:$0xf]
      %v1404 = vld [vmem:[%s1365 + $0x98] sm:$0xf]
      %v1405 = vld [vmem:[%s1365 + $0x9c] sm:$0xf]
      %v1406 = vld [vmem:[%s1365 + $0xa0] sm:$0xf]
      %v1407 = vld [vmem:[%s1365 + $0xa4] sm:$0xf]
      %v1408 = vld [vmem:[%s1365 + $0xa8] sm:$0xf]
      %v1409 = vld [vmem:[%s1365 + $0xac] sm:$0xf]
      %v1410 = vld [vmem:[%s1365 + $0xb0] sm:$0xf]
      %v1411 = vld [vmem:[%s1365 + $0xb4] sm:$0xf]
      %v1412 = vld [vmem:[%s1365 + $0xb8] sm:$0xf]
      %v1413 = vld [vmem:[%s1365 + $0xbc] sm:$0xf]
      %v1446 = vunpack.c.l.b16 %v1333
      %v1447 = vunpack.c.h.b16 %v1333
      %v1448 = vunpack.c.l.b16 %v1334
      %v1449 = vunpack.c.l.b16 %v1335
      %v1450 = vunpack.c.h.b16 %v1335
      %v1451 = vunpack.c.l.b16 %v1336
      %v1452 = vunpack.c.l.b16 %v1337
      %v1453 = vunpack.c.h.b16 %v1337
      %v1454 = vunpack.c.l.b16 %v1338
      %v1455 = vunpack.c.l.b16 %v1339
      %v1456 = vunpack.c.h.b16 %v1339
      %v1457 = vunpack.c.l.b16 %v1340
      %v1458 = vunpack.c.l.b16 %v1341
      %v1459 = vunpack.c.h.b16 %v1341
      %v1460 = vunpack.c.l.b16 %v1342
      %v1461 = vunpack.c.l.b16 %v1343
      %v1462 = vunpack.c.h.b16 %v1343
      %v1463 = vunpack.c.l.b16 %v1344
      %v1464 = vunpack.c.l.b16 %v1345
      %v1465 = vunpack.c.h.b16 %v1345
      %v1466 = vunpack.c.l.b16 %v1346
      %v1467 = vunpack.c.l.b16 %v1347
      %v1468 = vunpack.c.h.b16 %v1347
      %v1469 = vunpack.c.l.b16 %v1348
      %v1470 = vunpack.c.l.b16 %v1349
      %v1471 = vunpack.c.h.b16 %v1349
      %v1472 = vunpack.c.l.b16 %v1350
      %v1473 = vunpack.c.l.b16 %v1351
      %v1474 = vunpack.c.h.b16 %v1351
      %v1475 = vunpack.c.l.b16 %v1352
      %v1476 = vunpack.c.l.b16 %v1353
      %v1477 = vunpack.c.h.b16 %v1353
      %v1478 = vunpack.c.l.b16 %v1354
      %v1479 = vunpack.c.l.b16 %v1355
      %v1480 = vunpack.c.h.b16 %v1355
      %v1481 = vunpack.c.l.b16 %v1356
      %v1482 = vunpack.c.l.b16 %v1357
      %v1483 = vunpack.c.h.b16 %v1357
      %v1484 = vunpack.c.l.b16 %v1358
      %v1485 = vunpack.c.l.b16 %v1359
      %v1486 = vunpack.c.h.b16 %v1359
      %v1487 = vunpack.c.l.b16 %v1360
      %v1488 = vunpack.c.l.b16 %v1361
      %v1489 = vunpack.c.h.b16 %v1361
      %v1490 = vunpack.c.l.b16 %v1362
      %v1491 = vunpack.c.l.b16 %v1363
      %v1492 = vunpack.c.h.b16 %v1363
      %v1493 = vunpack.c.l.b16 %v1364
      %v1494 = vpack.c.b16 %v1449, %v1446
      %v1495 = vpack.c.b16 %v1450, %v1447
      %v1496 = vpack.c.b16 %v1451, %v1448
      %v1497 = vpack.c.b16 %v1455, %v1452
      %v1498 = vpack.c.b16 %v1456, %v1453
      %v1499 = vpack.c.b16 %v1457, %v1454
      %v1500 = vpack.c.b16 %v1461, %v1458
      %v1501 = vpack.c.b16 %v1462, %v1459
      %v1502 = vpack.c.b16 %v1463, %v1460
      %v1503 = vpack.c.b16 %v1467, %v1464
      %v1504 = vpack.c.b16 %v1468, %v1465
      %v1505 = vpack.c.b16 %v1469, %v1466
      %v1506 = vpack.c.b16 %v1473, %v1470
      %v1507 = vpack.c.b16 %v1474, %v1471
      %v1508 = vpack.c.b16 %v1475, %v1472
      %v1509 = vpack.c.b16 %v1479, %v1476
      %v1510 = vpack.c.b16 %v1480, %v1477
      %v1511 = vpack.c.b16 %v1481, %v1478
      %v1512 = vpack.c.b16 %v1485, %v1482
      %v1513 = vpack.c.b16 %v1486, %v1483
      %v1514 = vpack.c.b16 %v1487, %v1484
      %v1515 = vpack.c.b16 %v1491, %v1488
      %v1516 = vpack.c.b16 %v1492, %v1489
      %v1517 = vpack.c.b16 %v1493, %v1490
      %v1590 = vunpack.c.l.b16 %v1366
      %v1591 = vunpack.c.l.b16 %v1367
      %v1592 = vunpack.c.l.b16 %v1368
      %v1593 = vunpack.c.l.b16 %v1369
      %v1594 = vunpack.c.l.b16 %v1370
      %v1595 = vunpack.c.l.b16 %v1371
      %v1596 = vunpack.c.l.b16 %v1372
      %v1597 = vunpack.c.l.b16 %v1373
      %v1598 = vunpack.c.l.b16 %v1374
      %v1599 = vunpack.c.l.b16 %v1375
      %v1600 = vunpack.c.l.b16 %v1376
      %v1601 = vunpack.c.l.b16 %v1377
      %v1602 = vunpack.c.l.b16 %v1378
      %v1603 = vunpack.c.l.b16 %v1379
      %v1604 = vunpack.c.l.b16 %v1380
      %v1605 = vunpack.c.l.b16 %v1381
      %v1606 = vunpack.c.l.b16 %v1382
      %v1607 = vunpack.c.l.b16 %v1383
      %v1608 = vunpack.c.l.b16 %v1384
      %v1609 = vunpack.c.l.b16 %v1385
      %v1610 = vunpack.c.l.b16 %v1386
      %v1611 = vunpack.c.l.b16 %v1387
      %v1612 = vunpack.c.l.b16 %v1388
      %v1613 = vunpack.c.l.b16 %v1389
      %v1614 = vunpack.c.l.b16 %v1390
      %v1615 = vunpack.c.l.b16 %v1391
      %v1616 = vunpack.c.l.b16 %v1392
      %v1617 = vunpack.c.l.b16 %v1393
      %v1618 = vunpack.c.l.b16 %v1394
      %v1619 = vunpack.c.l.b16 %v1395
      %v1620 = vunpack.c.l.b16 %v1396
      %v1621 = vunpack.c.l.b16 %v1397
      %v1622 = vunpack.c.l.b16 %v1398
      %v1623 = vunpack.c.l.b16 %v1399
      %v1624 = vunpack.c.l.b16 %v1400
      %v1625 = vunpack.c.l.b16 %v1401
      %v1626 = vunpack.c.l.b16 %v1402
      %v1627 = vunpack.c.l.b16 %v1403
      %v1628 = vunpack.c.l.b16 %v1404
      %v1629 = vunpack.c.l.b16 %v1405
      %v1630 = vunpack.c.l.b16 %v1406
      %v1631 = vunpack.c.l.b16 %v1407
      %v1632 = vunpack.c.l.b16 %v1408
      %v1633 = vunpack.c.l.b16 %v1409
      %v1634 = vunpack.c.l.b16 %v1410
      %v1635 = vunpack.c.l.b16 %v1411
      %v1636 = vunpack.c.l.b16 %v1412
      %v1637 = vunpack.c.l.b16 %v1413
      %v1638 = vpack.c.b16 %v1591, %v1590
      %v1639 = vpack.c.b16 %v1593, %v1592
      %v1640 = vpack.c.b16 %v1595, %v1594
      %v1641 = vpack.c.b16 %v1597, %v1596
      %v1642 = vpack.c.b16 %v1599, %v1598
      %v1643 = vpack.c.b16 %v1601, %v1600
      %v1644 = vpack.c.b16 %v1603, %v1602
      %v1645 = vpack.c.b16 %v1605, %v1604
      %v1646 = vpack.c.b16 %v1607, %v1606
      %v1647 = vpack.c.b16 %v1609, %v1608
      %v1648 = vpack.c.b16 %v1611, %v1610
      %v1649 = vpack.c.b16 %v1613, %v1612
      %v1650 = vpack.c.b16 %v1615, %v1614
      %v1651 = vpack.c.b16 %v1617, %v1616
      %v1652 = vpack.c.b16 %v1619, %v1618
      %v1653 = vpack.c.b16 %v1621, %v1620
      %v1654 = vpack.c.b16 %v1623, %v1622
      %v1655 = vpack.c.b16 %v1625, %v1624
      %v1656 = vpack.c.b16 %v1627, %v1626
      %v1657 = vpack.c.b16 %v1629, %v1628
      %v1658 = vpack.c.b16 %v1631, %v1630
      %v1659 = vpack.c.b16 %v1633, %v1632
      %v1660 = vpack.c.b16 %v1635, %v1634
      %v1661 = vpack.c.b16 %v1637, %v1636
      %1686 = vmatprep.subr.bf16.mxu0 0
      %1687 = vmatpush1.bf16.msra.mxu0 %v1645
      %1688 = vmatprep.subr.bf16.mxu0 0
      %1689 = vmatpush1.bf16.msra.mxu0 %v1644
      %1690 = vmatprep.subr.bf16.mxu0 0
      %1691 = vmatpush1.bf16.msra.mxu0 %v1643
      %1692 = vmatprep.subr.bf16.mxu0 0
      %1693 = vmatpush1.bf16.msra.mxu0 %v1642
      %1694 = vmatprep.subr.bf16.mxu0 0
      %1695 = vmatpush1.bf16.msra.mxu0 %v1641
      %1696 = vmatprep.subr.bf16.mxu0 0
      %1697 = vmatpush1.bf16.msra.mxu0 %v1640
      %1698 = vmatprep.subr.bf16.mxu0 0
      %1699 = vmatpush1.bf16.msra.mxu0 %v1639
      %1700 = vmatprep.subr.bf16.mxu0 0
      %1701 = vmatpush1.bf16.msra.mxu0 %v1638
      %1702 = vmatprep.subr.bf16.mxu0 0
      %1703 = vmatpush2.bf16.msra.mxu0 %v1653
      %1704 = vmatprep.subr.bf16.mxu0 0
      %1705 = vmatpush2.bf16.msra.mxu0 %v1652
      %1706 = vmatprep.subr.bf16.mxu0 0
      %1707 = vmatpush2.bf16.msra.mxu0 %v1651
      %1708 = vmatprep.subr.bf16.mxu0 0
      %1709 = vmatpush2.bf16.msra.mxu0 %v1650
      %1710 = vmatprep.subr.bf16.mxu0 0
      %1711 = vmatpush2.bf16.msra.mxu0 %v1649
      %1712 = vmatprep.subr.bf16.mxu0 0
      %1713 = vmatpush2.bf16.msra.mxu0 %v1648
      %1714 = vmatprep.subr.bf16.mxu0 0
      %1715 = vmatpush2.bf16.msra.mxu0 %v1647
      %1716 = vmatprep.subr.bf16.mxu0 0
      %1717 = vmatpush2.bf16.msra.mxu0 %v1646
      %1718 = vmatprep.mubr.bf16.mxu0 %v1495
      %1719 = vmatmul.mubr.bf16.gmra.mxu0 %v1494
      %v1720 = vpop.f32.mrf.mxu0
      %v1721 = vadd.f32 0.0, %v1720
      %v1722 = vpop.f32.mrf.mxu0
      %v1723 = vpop.f32.mrf.mxu0
      %v1724 = vadd.f32 0.0, %v1723
      %v1725 = vpop.f32.mrf.mxu0
      %1726 = vmatprep.mubr.bf16.mxu0 %v1498
      %1727 = vmatmul.mubr.bf16.gmra.mxu0 %v1497
      %v1728 = vpop.f32.mrf.mxu0
      %v1729 = vadd.f32 0.0, %v1728
      %v1730 = vpop.f32.mrf.mxu0
      %v1731 = vpop.f32.mrf.mxu0
      %v1732 = vadd.f32 0.0, %v1731
      %v1733 = vpop.f32.mrf.mxu0
      %1734 = vmatprep.mubr.bf16.mxu0 %v1501
      %1735 = vmatmul.mubr.bf16.gmra.mxu0 %v1500
      %v1736 = vpop.f32.mrf.mxu0
      %v1737 = vadd.f32 0.0, %v1736
      %v1738 = vpop.f32.mrf.mxu0
      %v1739 = vpop.f32.mrf.mxu0
      %v1740 = vadd.f32 0.0, %v1739
      %v1741 = vpop.f32.mrf.mxu0
      %1742 = vmatprep.mubr.bf16.mxu0 %v1504
      %1743 = vmatmul.mubr.bf16.gmra.mxu0 %v1503
      %v1744 = vpop.f32.mrf.mxu0
      %v1745 = vadd.f32 0.0, %v1744
      %v1746 = vpop.f32.mrf.mxu0
      %v1747 = vpop.f32.mrf.mxu0
      %v1748 = vadd.f32 0.0, %v1747
      %v1749 = vpop.f32.mrf.mxu0
      %1750 = vmatprep.mubr.bf16.mxu0 %v1507
      %1751 = vmatmul.mubr.bf16.gmra.mxu0 %v1506
      %v1752 = vpop.f32.mrf.mxu0
      %v1753 = vadd.f32 0.0, %v1752
      %v1754 = vpop.f32.mrf.mxu0
      %v1755 = vpop.f32.mrf.mxu0
      %v1756 = vadd.f32 0.0, %v1755
      %v1757 = vpop.f32.mrf.mxu0
      %1758 = vmatprep.mubr.bf16.mxu0 %v1510
      %1759 = vmatmul.mubr.bf16.gmra.mxu0 %v1509
      %v1760 = vpop.f32.mrf.mxu0
      %v1761 = vadd.f32 0.0, %v1760
      %v1762 = vpop.f32.mrf.mxu0
      %v1763 = vpop.f32.mrf.mxu0
      %v1764 = vadd.f32 0.0, %v1763
      %v1765 = vpop.f32.mrf.mxu0
      %1766 = vmatprep.mubr.bf16.mxu0 %v1513
      %1767 = vmatmul.mubr.bf16.gmra.mxu0 %v1512
      %v1768 = vpop.f32.mrf.mxu0
      %v1769 = vadd.f32 0.0, %v1768
      %v1770 = vpop.f32.mrf.mxu0
      %v1771 = vpop.f32.mrf.mxu0
      %v1772 = vadd.f32 0.0, %v1771
      %v1773 = vpop.f32.mrf.mxu0
      %1774 = vmatprep.mubr.bf16.mxu0 %v1516
      %1775 = vmatmul.mubr.bf16.gmra.mxu0 %v1515
      %v1776 = vpop.f32.mrf.mxu0
      %v1777 = vadd.f32 0.0, %v1776
      %v1778 = vpop.f32.mrf.mxu0
      %v1779 = vpop.f32.mrf.mxu0
      %v1780 = vadd.f32 0.0, %v1779
      %v1781 = vpop.f32.mrf.mxu0
      %1782 = vdwg.mxu0
      %1783 = vmatprep.subr.bf16.mxu0 0
      %1784 = vmatpush1.bf16.msra.mxu0 %v1661
      %1785 = vmatprep.subr.bf16.mxu0 0
      %1786 = vmatpush1.bf16.msra.mxu0 %v1660
      %1787 = vmatprep.subr.bf16.mxu0 0
      %1788 = vmatpush1.bf16.msra.mxu0 %v1659
      %1789 = vmatprep.subr.bf16.mxu0 0
      %1790 = vmatpush1.bf16.msra.mxu0 %v1658
      %1791 = vmatprep.subr.bf16.mxu0 0
      %1792 = vmatpush1.bf16.msra.mxu0 %v1657
      %1793 = vmatprep.subr.bf16.mxu0 0
      %1794 = vmatpush1.bf16.msra.mxu0 %v1656
      %1795 = vmatprep.subr.bf16.mxu0 0
      %1796 = vmatpush1.bf16.msra.mxu0 %v1655
      %1797 = vmatprep.subr.bf16.mxu0 0
      %1798 = vmatpush1.bf16.msra.mxu0 %v1654
      %1799 = vmatprep.subr.bf16.mxu0 0
      %1800 = vmatpush2.bf16.msra.mxu0 0
      %1801 = vmatprep.subr.bf16.mxu0 0
      %1802 = vmatpush2.bf16.msra.mxu0 0
      %1803 = vmatprep.subr.bf16.mxu0 0
      %1804 = vmatpush2.bf16.msra.mxu0 0
      %1805 = vmatprep.subr.bf16.mxu0 0
      %1806 = vmatpush2.bf16.msra.mxu0 0
      %1807 = vmatprep.subr.bf16.mxu0 0
      %1808 = vmatpush2.bf16.msra.mxu0 0
      %1809 = vmatprep.subr.bf16.mxu0 0
      %1810 = vmatpush2.bf16.msra.mxu0 0
      %1811 = vmatprep.subr.bf16.mxu0 0
      %1812 = vmatpush2.bf16.msra.mxu0 0
      %1813 = vmatprep.subr.bf16.mxu0 0
      %1814 = vmatpush2.bf16.msra.mxu0 0
      %1815 = vmatprep.mubr.bf16.mxu0 0
      %1816 = vmatmul.mubr.bf16.gmra.mxu0 %v1496
      %v1817 = vpop.f32.mrf.mxu0
      %v1818 = vadd.f32 %v1721, %v1817
      %v1819 = vpop.f32.mrf.mxu0
      %v1820 = vpop.f32.mrf.mxu0
      %v1821 = vadd.f32 %v1724, %v1820
      %v1822 = vpop.f32.mrf.mxu0
      %1823 = vmatprep.mubr.bf16.mxu0 0
      %1824 = vmatmul.mubr.bf16.gmra.mxu0 %v1499
      %v1825 = vpop.f32.mrf.mxu0
      %v1826 = vadd.f32 %v1729, %v1825
      %v1827 = vpop.f32.mrf.mxu0
      %v1828 = vpop.f32.mrf.mxu0
      %v1829 = vadd.f32 %v1732, %v1828
      %v1830 = vpop.f32.mrf.mxu0
      %1831 = vmatprep.mubr.bf16.mxu0 0
      %1832 = vmatmul.mubr.bf16.gmra.mxu0 %v1502
      %v1833 = vpop.f32.mrf.mxu0
      %v1834 = vadd.f32 %v1737, %v1833
      %v1835 = vpop.f32.mrf.mxu0
      %v1836 = vpop.f32.mrf.mxu0
      %v1837 = vadd.f32 %v1740, %v1836
      %v1838 = vpop.f32.mrf.mxu0
      %1839 = vmatprep.mubr.bf16.mxu0 0
      %1840 = vmatmul.mubr.bf16.gmra.mxu0 %v1505
      %v1841 = vpop.f32.mrf.mxu0
      %v1842 = vadd.f32 %v1745, %v1841
      %v1843 = vpop.f32.mrf.mxu0
      %v1844 = vpop.f32.mrf.mxu0
      %v1845 = vadd.f32 %v1748, %v1844
      %v1846 = vpop.f32.mrf.mxu0
      %1847 = vmatprep.mubr.bf16.mxu0 0
      %1848 = vmatmul.mubr.bf16.gmra.mxu0 %v1508
      %v1849 = vpop.f32.mrf.mxu0
      %v1850 = vadd.f32 %v1753, %v1849
      %v1851 = vpop.f32.mrf.mxu0
      %v1852 = vpop.f32.mrf.mxu0
      %v1853 = vadd.f32 %v1756, %v1852
      %v1854 = vpop.f32.mrf.mxu0
      %1855 = vmatprep.mubr.bf16.mxu0 0
      %1856 = vmatmul.mubr.bf16.gmra.mxu0 %v1511
      %v1857 = vpop.f32.mrf.mxu0
      %v1858 = vadd.f32 %v1761, %v1857
      %v1859 = vpop.f32.mrf.mxu0
      %v1860 = vpop.f32.mrf.mxu0
      %v1861 = vadd.f32 %v1764, %v1860
      %v1862 = vpop.f32.mrf.mxu0
      %1863 = vmatprep.mubr.bf16.mxu0 0
      %1864 = vmatmul.mubr.bf16.gmra.mxu0 %v1514
      %v1865 = vpop.f32.mrf.mxu0
      %v1866 = vadd.f32 %v1769, %v1865
      %v1867 = vpop.f32.mrf.mxu0
      %v1868 = vpop.f32.mrf.mxu0
      %v1869 = vadd.f32 %v1772, %v1868
      %v1870 = vpop.f32.mrf.mxu0
      %1871 = vmatprep.mubr.bf16.mxu0 0
      %1872 = vmatmul.mubr.bf16.gmra.mxu0 %v1517
      %v1873 = vpop.f32.mrf.mxu0
      %v1874 = vadd.f32 %v1777, %v1873
      %v1875 = vpop.f32.mrf.mxu0
      %v1876 = vpop.f32.mrf.mxu0
      %v1877 = vadd.f32 %v1780, %v1876
      %v1878 = vpop.f32.mrf.mxu0
      %1879 = vdwg.mxu0
      %v1880 = vadd.f32 %v1265, %v1818
      %v1881 = vadd.f32 %v1268, %v1821
      %v1882 = vadd.f32 %v1273, %v1826
      %v1883 = vadd.f32 %v1276, %v1829
      %v1884 = vadd.f32 %v1281, %v1834
      %v1885 = vadd.f32 %v1284, %v1837
      %v1886 = vadd.f32 %v1289, %v1842
      %v1887 = vadd.f32 %v1292, %v1845
      %v1888 = vadd.f32 %v1297, %v1850
      %v1889 = vadd.f32 %v1300, %v1853
      %v1890 = vadd.f32 %v1305, %v1858
      %v1891 = vadd.f32 %v1308, %v1861
      %v1892 = vadd.f32 %v1313, %v1866
      %v1893 = vadd.f32 %v1316, %v1869
      %v1894 = vadd.f32 %v1321, %v1874
      %v1895 = vadd.f32 %v1324, %v1877
      %v1896 = vld [vmem:[%s2] sm:$0x1]
      %v1898 = vlaneseq
      %v1899 = vshrl.u32 %v1898, 7
      %v1900 = vsub.s32 0, %v1899
      %v1901 = vrot.slane %v1896, %v1900
      %v1903 = vmul.f32 %v1880, %v1901
      %v1904 = vmul.f32 %v1881, %v1901
      %v1905 = vmul.f32 %v1882, %v1901
      %v1906 = vmul.f32 %v1883, %v1901
      %v1907 = vmul.f32 %v1884, %v1901
      %v1908 = vmul.f32 %v1885, %v1901
      %v1909 = vmul.f32 %v1886, %v1901
      %v1910 = vmul.f32 %v1887, %v1901
      %v1911 = vmul.f32 %v1888, %v1901
      %v1912 = vmul.f32 %v1889, %v1901
      %v1913 = vmul.f32 %v1890, %v1901
      %v1914 = vmul.f32 %v1891, %v1901
      %v1915 = vmul.f32 %v1892, %v1901
      %v1916 = vmul.f32 %v1893, %v1901
      %v1917 = vmul.f32 %v1894, %v1901
      %v1918 = vmul.f32 %v1895, %v1901
      %v1919 = vld [vmem:[%s3] sm:$0x1]
      %v1921 = vlaneseq
      %v1922 = vshrl.u32 %v1921, 7
      %v1923 = vsub.s32 0, %v1922
      %v1924 = vrot.slane %v1919, %v1923
      %v1926 = vadd.f32 %v1903, %v1924
      %v1927 = vadd.f32 %v1904, %v1924
      %v1928 = vadd.f32 %v1905, %v1924
      %v1929 = vadd.f32 %v1906, %v1924
      %v1930 = vadd.f32 %v1907, %v1924
      %v1931 = vadd.f32 %v1908, %v1924
      %v1932 = vadd.f32 %v1909, %v1924
      %v1933 = vadd.f32 %v1910, %v1924
      %v1934 = vadd.f32 %v1911, %v1924
      %v1935 = vadd.f32 %v1912, %v1924
      %v1936 = vadd.f32 %v1913, %v1924
      %v1937 = vadd.f32 %v1914, %v1924
      %v1938 = vadd.f32 %v1915, %v1924
      %v1939 = vadd.f32 %v1916, %v1924
      %v1940 = vadd.f32 %v1917, %v1924
      %v1941 = vadd.f32 %v1918, %v1924
      %v1942 = vmax.f32 %v1926, 0.0
      %v1943 = vmax.f32 %v1927, 0.0
      %v1944 = vmax.f32 %v1928, 0.0
      %v1945 = vmax.f32 %v1929, 0.0
      %v1946 = vmax.f32 %v1930, 0.0
      %v1947 = vmax.f32 %v1931, 0.0
      %v1948 = vmax.f32 %v1932, 0.0
      %v1949 = vmax.f32 %v1933, 0.0
      %v1950 = vmax.f32 %v1934, 0.0
      %v1951 = vmax.f32 %v1935, 0.0
      %v1952 = vmax.f32 %v1936, 0.0
      %v1953 = vmax.f32 %v1937, 0.0
      %v1954 = vmax.f32 %v1938, 0.0
      %v1955 = vmax.f32 %v1939, 0.0
      %v1956 = vmax.f32 %v1940, 0.0
      %v1957 = vmax.f32 %v1941, 0.0
      %v1958 = vpack.c.bf16 %v1943, %v1942
      %v1959 = vpack.c.bf16 %v1945, %v1944
      %v1960 = vpack.c.bf16 %v1947, %v1946
      %v1961 = vpack.c.bf16 %v1949, %v1948
      %v1962 = vpack.c.bf16 %v1951, %v1950
      %v1963 = vpack.c.bf16 %v1953, %v1952
      %v1964 = vpack.c.bf16 %v1955, %v1954
      %v1965 = vpack.c.bf16 %v1957, %v1956
      %v1974 = vunpack.c.l.b16 %v1958
      %v1975 = vunpack.c.h.b16 %v1958
      %v1976 = vunpack.c.l.b16 %v1959
      %v1977 = vunpack.c.h.b16 %v1959
      %v1978 = vunpack.c.l.b16 %v1960
      %v1979 = vunpack.c.h.b16 %v1960
      %v1980 = vunpack.c.l.b16 %v1961
      %v1981 = vunpack.c.h.b16 %v1961
      %v1982 = vunpack.c.l.b16 %v1962
      %v1983 = vunpack.c.h.b16 %v1962
      %v1984 = vunpack.c.l.b16 %v1963
      %v1985 = vunpack.c.h.b16 %v1963
      %v1986 = vunpack.c.l.b16 %v1964
      %v1987 = vunpack.c.h.b16 %v1964
      %v1988 = vunpack.c.l.b16 %v1965
      %v1989 = vunpack.c.h.b16 %v1965
      %v1990 = vpack.c.b16 %v1974, %v1974
      %v1991 = vpack.c.b16 %v1975, %v1975
      %v1992 = vpack.c.b16 %v1976, %v1976
      %v1993 = vpack.c.b16 %v1977, %v1977
      %v1994 = vpack.c.b16 %v1978, %v1978
      %v1995 = vpack.c.b16 %v1979, %v1979
      %v1996 = vpack.c.b16 %v1980, %v1980
      %v1997 = vpack.c.b16 %v1981, %v1981
      %v1998 = vpack.c.b16 %v1982, %v1982
      %v1999 = vpack.c.b16 %v1983, %v1983
      %v2000 = vpack.c.b16 %v1984, %v1984
      %v2001 = vpack.c.b16 %v1985, %v1985
      %v2002 = vpack.c.b16 %v1986, %v1986
      %v2003 = vpack.c.b16 %v1987, %v1987
      %v2004 = vpack.c.b16 %v1988, %v1988
      %v2005 = vpack.c.b16 %v1989, %v1989
      %2022 = vst [vmem:[%s219] sm:$0xf] %v1990
      %2023 = vst [vmem:[%s219 + $0x4] sm:$0xf] %v1991
      %2024 = vst [vmem:[%s219 + $0x8] sm:$0xf] %v1992
      %2025 = vst [vmem:[%s219 + $0xc] sm:$0xf] %v1993
      %2026 = vst [vmem:[%s219 + $0x10] sm:$0xf] %v1994
      %2027 = vst [vmem:[%s219 + $0x14] sm:$0xf] %v1995
      %2028 = vst [vmem:[%s219 + $0x18] sm:$0xf] %v1996
      %2029 = vst [vmem:[%s219 + $0x1c] sm:$0xf] %v1997
      %2030 = vst [vmem:[%s219 + $0x20] sm:$0xf] %v1998
      %2031 = vst [vmem:[%s219 + $0x24] sm:$0xf] %v1999
      %2032 = vst [vmem:[%s219 + $0x28] sm:$0xf] %v2000
      %2033 = vst [vmem:[%s219 + $0x2c] sm:$0xf] %v2001
      %2034 = vst [vmem:[%s219 + $0x30] sm:$0xf] %v2002
      %2035 = vst [vmem:[%s219 + $0x34] sm:$0xf] %v2003
      %2036 = vst [vmem:[%s219 + $0x38] sm:$0xf] %v2004
      %2037 = vst [vmem:[%s219 + $0x3c] sm:$0xf] %v2005
      %s2038 = smul.u32 16, %s20
      %p2039 = scmp.lt.s32.totalorder %s19, 1
      %s2040 = scalar_select %p2039, %s19, 1
      %p2041 = scmp.lt.s32.totalorder %s2038, 15
      %s2042 = scalar_select %p2041, %s2038, 15
      %s2043 = smul.addr %s2040, 16
      %s2044 = sadd.s32 %s2042, %s2043
      %s2045 = smul.addr %s2044, 4
      %s2046 = scalar_lea.vmem %s4, %s2045
      // Predicated region
      $region37: #{_lambda_.4} parent=35 // pred_check
        %p2047 = pneg %p136
      $region38: #{_lambda_.4} parent=35 // pred_check_branch
        %2049 = sbr.rel (%p2047) target = $region40
      $region39: #{_lambda_.4} parent=35 // pred_region
        %s2050 = smul.u32 16, %s20
      $region40: #{_lambda_.4} parent=35 // pred_fallthru
        _
    $region36: #{_lambda_.4} parent=5 // pred_fallthru
      _
    %p2051 = scmp.le.s32.totalorder 2, %s10
    // Predicated region
    $region41: #{_lambda_.4} parent=5 // pred_check
      %p2052 = pneg %p2051
    $region42: #{_lambda_.4} parent=5 // pred_check_branch
      %2054 = sbr.rel (%p2052) target = $region44
    $region43: #{_lambda_.4} parent=5 // pred_region
      %s2055 = ssub.s32 %s10, 2
      // Predicated region
      $region45: #{_lambda_.4} parent=43 // pred_check
        %p2056 = pneg %p142
      $region46: #{_lambda_.4} parent=43 // pred_check_branch
        %2058 = sbr.rel (%p2056) target = $region48
      $region47: #{_lambda_.4} parent=43 // pred_region
        %s2059 = smul.u32 16, %s22
        %p2060 = scmp.lt.s32.totalorder %s21, 1
        %s2061 = scalar_select %p2060, %s21, 1
        %p2062 = scmp.lt.s32.totalorder %s2059, 15
        %s2063 = scalar_select %p2062, %s2059, 15
        %s2064 = smul.addr %s2061, 16
        %s2065 = sadd.s32 %s2063, %s2064
        %s2066 = smul.addr %s2065, 4
        %s2067 = scalar_lea.vmem %s4, %s2066
      $region48: #{_lambda_.4} parent=43 // pred_fallthru
        _
    $region44: #{_lambda_.4} parent=5 // pred_fallthru
      _
  $region6: #{_lambda_.4} parent=0 // loop_footer
    %s14 = sadd.s32 1, %s10
  $region7: #{_lambda_.4} parent=0 // loop_footer_branch
    %9 = sbr.rel target = $region3
  $region8: #{_lambda_.4} parent=0 // loop_exit
    _

// kernel: _lambda_.5
$region0: #{_lambda_.5}
  #allocation0 [shape = 'u32[]', space=smem, size = 0x4, offset = 0x4, fixed_abs, tag = 'smem constant byte address 0x4 - core index']
  #allocation1 [shape = 'u32[144,128]{1,0:T(1,128)}', space=vmem, size = 0x12000, scoped, tag = 'internal scratch']
  %s0 = inlined_call_operand.vmem [shape: bf16[2,144,384], index: 0, kind: input, shape index: {}]
  %s1 = inlined_call_operand.vmem [shape: bf16[3,384,128], index: 1, kind: input, shape index: {}]
  %s2 = inlined_call_operand.vmem [shape: bf16[2,128,128], index: 2, kind: input, shape index: {}]
  %s3 = inlined_call_operand.vmem [shape: bf16[2,128,128], index: 3, kind: output, shape index: {}]
  %s4 = sld [smem:[#allocation0]]
  $region45: #{_lambda_.5} parent=0
    _
  %s6 = ssub.s32 1, %s4
  %s7 = scalar_select 0, %s6, %s4
  loop: start=0, step=1, limit=4
  $region2: #{_lambda_.5} parent=0 // loop_pre_header
    _
  $region3: #{_lambda_.5} parent=0 // loop_header
    %s9 = sphi 0, %s13
    %p10 = scmp.ge.s32.totalorder %s9, 4
    %s16 = sphi 0, %s28
    %s17 = sphi 0, %s24
    %s18 = sphi 0, %s16
    %s19 = sphi 0, %s17
    %s20 = sphi 0, %s18
    %s21 = sphi 0, %s19
    %s31 = sphi 0, %s33
    %s34 = sphi 0, %s31
    %s35 = sphi 0, %s34
    %s51 = sphi 0, %s35
    %s55 = sphi 0, %s55
    %s57 = sphi 0, %s55
    %s58 = sphi 0, %s57
    %s72 = sphi 0, %s58
    %s80 = sphi 0, %s82
    %s83 = sphi 0, %s80
    %s84 = sphi 0, %s83
    %s100 = sphi 0, %s84
    %s108 = sphi 0, %s110
    %s111 = sphi 0, %s108
    %s112 = sphi 0, %s111
    %s128 = sphi 0, %s112
  $region4: #{_lambda_.5} parent=0 // loop_header_branch
    %12 = sbr.rel (%p10) target = $region8
  $region5: #{_lambda_.5} parent=0 // loop_body
    %s14 = ssub.s32 %s9, 1
    %s15 = ssub.s32 %s9, 2
    %s22 = sadd.s32 1, %s17
    %p23 = scmp.ge.s32.totalorder %s22, 1
    %s24 = scalar_select %p23, 0, %s22
    %s25 = sadd.s32 1, %s16
    %s26 = scalar_select %p23, %s25, %s16
    %p27 = scmp.ge.s32.totalorder %s26, 2
    %s28 = scalar_select %p27, 0, %s26
    %s29 = ssub.s32 %s16, %s28
    %p30 = scmp.eq.s32.totalorder %s29, 0
    %s32 = sadd.s32 %s31, 1
    %s33 = scalar_select %p30, %s31, %s32
    %p36 = pneg %p30
    %p37 = scmp.eq.s32.totalorder %s9, 1
    %p38 = por %p36, %p37
    %p39 = scmp.ne.s32.totalorder %s31, %s34
    %p40 = scmp.eq.s32.totalorder %s9, 0
    %p41 = por %p39, %p40
    %p42 = scmp.ne.s32.totalorder %s31, %s34
    %p43 = scmp.eq.s32.totalorder %s14, 1
    %p44 = por %p42, %p43
    %p45 = scmp.ne.s32.totalorder %s34, %s35
    %p46 = scmp.eq.s32.totalorder %s14, 0
    %p47 = por %p45, %p46
    %p48 = scmp.ne.s32.totalorder %s34, %s35
    %p49 = scmp.eq.s32.totalorder %s15, 1
    %p50 = por %p48, %p49
    %p52 = scmp.ne.s32.totalorder %s35, %s51
    %p53 = scmp.eq.s32.totalorder %s15, 0
    %p54 = por %p52, %p53
    %s56 = sadd.s32 %s55, 1
    %p59 = scmp.eq.s32.totalorder %s9, 1
    %p60 = scmp.ne.s32.totalorder %s55, %s57
    %p61 = scmp.eq.s32.totalorder %s9, 0
    %p62 = por %p60, %p61
    %p63 = scmp.ne.s32.totalorder %s55, %s57
    %p64 = scmp.eq.s32.totalorder %s14, 1
    %p65 = por %p63, %p64
    %p66 = scmp.ne.s32.totalorder %s57, %s58
    %p67 = scmp.eq.s32.totalorder %s14, 0
    %p68 = por %p66, %p67
    %p69 = scmp.ne.s32.totalorder %s57, %s58
    %p70 = scmp.eq.s32.totalorder %s15, 1
    %p71 = por %p69, %p70
    %p73 = scmp.ne.s32.totalorder %s58, %s72
    %p74 = scmp.eq.s32.totalorder %s15, 0
    %p75 = por %p73, %p74
    %s76 = ssub.s32 %s16, %s28
    %s77 = ssub.s32 %s17, %s24
    %s78 = sor.u32 %s76, %s77
    %p79 = scmp.eq.s32.totalorder %s78, 0
    %s81 = sadd.s32 %s80, 1
    %s82 = scalar_select %p79, %s80, %s81
    %p85 = pneg %p79
    %p86 = scmp.eq.s32.totalorder %s9, 1
    %p87 = por %p85, %p86
    %p88 = scmp.ne.s32.totalorder %s80, %s83
    %p89 = scmp.eq.s32.totalorder %s9, 0
    %p90 = por %p88, %p89
    %p91 = scmp.ne.s32.totalorder %s80, %s83
    %p92 = scmp.eq.s32.totalorder %s14, 1
    %p93 = por %p91, %p92
    %p94 = scmp.ne.s32.totalorder %s83, %s84
    %p95 = scmp.eq.s32.totalorder %s14, 0
    %p96 = por %p94, %p95
    %p97 = scmp.ne.s32.totalorder %s83, %s84
    %p98 = scmp.eq.s32.totalorder %s15, 1
    %p99 = por %p97, %p98
    %p101 = scmp.ne.s32.totalorder %s84, %s100
    %p102 = scmp.eq.s32.totalorder %s15, 0
    %p103 = por %p101, %p102
    %s104 = ssub.s32 %s16, %s28
    %s105 = ssub.s32 %s17, %s24
    %s106 = sor.u32 %s104, %s105
    %p107 = scmp.eq.s32.totalorder %s106, 0
    %s109 = sadd.s32 %s108, 1
    %s110 = scalar_select %p107, %s108, %s109
    %p113 = pneg %p107
    %p114 = scmp.eq.s32.totalorder %s9, 1
    %p115 = por %p113, %p114
    %p116 = scmp.ne.s32.totalorder %s108, %s111
    %p117 = scmp.eq.s32.totalorder %s9, 0
    %p118 = por %p116, %p117
    %p119 = scmp.ne.s32.totalorder %s108, %s111
    %p120 = scmp.eq.s32.totalorder %s14, 1
    %p121 = por %p119, %p120
    %p122 = scmp.ne.s32.totalorder %s111, %s112
    %p123 = scmp.eq.s32.totalorder %s14, 0
    %p124 = por %p122, %p123
    %p125 = scmp.ne.s32.totalorder %s111, %s112
    %p126 = scmp.eq.s32.totalorder %s15, 1
    %p127 = por %p125, %p126
    %p129 = scmp.ne.s32.totalorder %s112, %s128
    %p130 = scmp.eq.s32.totalorder %s15, 0
    %p131 = por %p129, %p130
    %p132 = scmp.le.s32.totalorder 1, %s9
    %p133 = scmp.lt.s32.totalorder %s9, 3
    %p134 = pnand %p132, %p133
    %p135 = pneg %p134
    // Predicated region
    $region9: #{_lambda_.5} parent=5 // pred_check
      _
    $region10: #{_lambda_.5} parent=5 // pred_check_branch
      %137 = sbr.rel (%p134) target = $region12
    $region11: #{_lambda_.5} parent=5 // pred_region
      %s138 = ssub.s32 %s9, 1
      // Predicated region
      $region13: #{_lambda_.5} parent=11 // pred_check
        %p139 = pneg %p68
      $region14: #{_lambda_.5} parent=11 // pred_check_branch
        %141 = sbr.rel (%p139) target = $region16
      $region15: #{_lambda_.5} parent=11 // pred_region
        _
      $region16: #{_lambda_.5} parent=11 // pred_fallthru
        _
    $region12: #{_lambda_.5} parent=5 // pred_fallthru
      _
    %p142 = scmp.lt.s32.totalorder %s9, 2
    // Predicated region
    $region17: #{_lambda_.5} parent=5 // pred_check
      %p143 = pneg %p142
    $region18: #{_lambda_.5} parent=5 // pred_check_branch
      %145 = sbr.rel (%p143) target = $region20
    $region19: #{_lambda_.5} parent=5 // pred_region
      // Predicated region
      $region21: #{_lambda_.5} parent=19 // pred_check
        %p146 = pneg %p41
      $region22: #{_lambda_.5} parent=19 // pred_check_branch
        %148 = sbr.rel (%p146) target = $region24
      $region23: #{_lambda_.5} parent=19 // pred_region
        %p149 = scmp.lt.s32.totalorder %s16, 1
        %s150 = scalar_select %p149, %s16, 1
        %s151 = smul.addr %s150, 54
        %s152 = smul.addr %s151, 4
        %s153 = scalar_lea.vmem %s0, %s152
      $region24: #{_lambda_.5} parent=19 // pred_fallthru
        _
      // Predicated region
      $region25: #{_lambda_.5} parent=19 // pred_check
        %p154 = pneg %p90
      $region26: #{_lambda_.5} parent=19 // pred_check_branch
        %156 = sbr.rel (%p154) target = $region28
      $region27: #{_lambda_.5} parent=19 // pred_region
        %s157 = smul.u32 16, %s17
        %p158 = scmp.lt.s32.totalorder %s16, 1
        %s159 = scalar_select %p158, %s16, 1
        %p160 = scmp.lt.s32.totalorder %s157, 15
        %s161 = scalar_select %p160, %s157, 15
        %s162 = smul.addr %s159, 16
        %s163 = sadd.s32 %s161, %s162
        %s164 = smul.addr %s163, 4
        %s165 = scalar_lea.vmem %s2, %s164
        %s166 = smul.u32 16, %s17
      $region28: #{_lambda_.5} parent=19 // pred_fallthru
        _
    $region20: #{_lambda_.5} parent=5 // pred_fallthru
      _
    %p167 = scmp.le.s32.totalorder 1, %s9
    %p168 = scmp.lt.s32.totalorder %s9, 3
    %p169 = pnand %p167, %p168
    %p170 = pneg %p169
    // Predicated region
    $region29: #{_lambda_.5} parent=5 // pred_check
      _
    $region30: #{_lambda_.5} parent=5 // pred_check_branch
      %172 = sbr.rel (%p169) target = $region32
    $region31: #{_lambda_.5} parent=5 // pred_region
      %s173 = ssub.s32 %s9, 1
      %p174 = scmp.lt.s32.totalorder %s18, 1
      %s175 = scalar_select %p174, %s18, 1
      %s176 = smul.addr %s175, 54
      %s177 = smul.addr %s176, 4
      %s178 = scalar_lea.vmem %s0, %s177
      %p179 = pneg %p47
      %p180 = pneg %p44
      %p181 = pneg %p68
      %p182 = pneg %p65
      %s183 = smul.u32 16, %s19
      %p184 = scmp.lt.s32.totalorder %s18, 1
      %s185 = scalar_select %p184, %s18, 1
      %p186 = scmp.lt.s32.totalorder %s183, 15
      %s187 = scalar_select %p186, %s183, 15
      %s188 = smul.addr %s185, 16
      %s189 = sadd.s32 %s187, %s188
      %s190 = smul.addr %s189, 4
      %s191 = scalar_lea.vmem %s2, %s190
      %p192 = pneg %p96
      %p193 = pneg %p93
      %p194 = pneg %p124
      %p195 = pneg %p121
      %s196 = smul.u32 16, %s19
      %p197 = scmp.lt.s32.totalorder %s18, 1
      %s198 = scalar_select %p197, %s18, 1
      %p199 = scmp.lt.s32.totalorder %s196, 15
      %s200 = scalar_select %p199, %s196, 15
      %s201 = smul.addr %s198, 16
      %s202 = sadd.s32 %s200, %s201
      %s203 = smul.addr %s202, 4
      %s204 = scalar_lea.vmem %s3, %s203
      %p205 = scmp.lt.s32.totalorder %s18, 1
      %s206 = scalar_select %p205, %s18, 1
      %s207 = smul.addr %s206, 54
      %s208 = smul.addr %s207, 4
      %s209 = scalar_lea.vmem %s0, %s208
      %s210 = smul.u32 16, %s19
      %p211 = scmp.lt.s32.totalorder %s18, 1
      %s212 = scalar_select %p211, %s18, 1
      %p213 = scmp.lt.s32.totalorder %s210, 15
      %s214 = scalar_select %p213, %s210, 15
      %s215 = smul.addr %s212, 16
      %s216 = sadd.s32 %s214, %s215
      %s217 = smul.addr %s216, 4
      %s218 = scalar_lea.vmem %s2, %s217
      %s219 = smul.u32 16, %s19
      %s220 = smul.u32 16, %s19
      %p221 = scmp.lt.s32.totalorder %s18, 1
      %s222 = scalar_select %p221, %s18, 1
      %p223 = scmp.lt.s32.totalorder %s220, 15
      %s224 = scalar_select %p223, %s220, 15
      %s225 = smul.addr %s222, 16
      %s226 = sadd.s32 %s224, %s225
      %s227 = smul.addr %s226, 4
      %s228 = scalar_lea.vmem %s3, %s227
      %s229 = smul.u32 16, %s19
      %s231 = smul.u32 %s19, 128
      %s232 = sshra.s32 %s231, 3
      %s233 = sand.u32 %s231, 7
      %s234 = smul.u32 %s232, 3
      %s235 = smul.addr %s234, 4
      %s236 = scalar_lea.vmem %s209, %s235
      %v237 = vld [vmem:[%s236] sm:$0xff]
      %v238 = vld [vmem:[%s236 + $0x8] sm:$0xf]
      %v239 = vld [vmem:[%s236 + $0xc] sm:$0xff]
      %v240 = vld [vmem:[%s236 + $0x14] sm:$0xf]
      %v241 = vld [vmem:[%s236 + $0x18] sm:$0xff]
      %v242 = vld [vmem:[%s236 + $0x20] sm:$0xf]
      %v243 = vld [vmem:[%s236 + $0x24] sm:$0xff]
      %v244 = vld [vmem:[%s236 + $0x2c] sm:$0xf]
      %v245 = vld [vmem:[%s236 + $0x30] sm:$0xff]
      %v246 = vld [vmem:[%s236 + $0x38] sm:$0xf]
      %v247 = vld [vmem:[%s236 + $0x3c] sm:$0xff]
      %v248 = vld [vmem:[%s236 + $0x44] sm:$0xf]
      %v249 = vld [vmem:[%s236 + $0x48] sm:$0xff]
      %v250 = vld [vmem:[%s236 + $0x50] sm:$0xf]
      %v251 = vld [vmem:[%s236 + $0x54] sm:$0xff]
      %v252 = vld [vmem:[%s236 + $0x5c] sm:$0xf]
      %v253 = vld [vmem:[%s236 + $0x60] sm:$0xff]
      %v254 = vld [vmem:[%s236 + $0x68] sm:$0xf]
      %v255 = vld [vmem:[%s236 + $0x6c] sm:$0xff]
      %v256 = vld [vmem:[%s236 + $0x74] sm:$0xf]
      %v257 = vld [vmem:[%s236 + $0x78] sm:$0xff]
      %v258 = vld [vmem:[%s236 + $0x80] sm:$0xf]
      %v259 = vld [vmem:[%s236 + $0x84] sm:$0xff]
      %v260 = vld [vmem:[%s236 + $0x8c] sm:$0xf]
      %v261 = vld [vmem:[%s236 + $0x90] sm:$0xff]
      %v262 = vld [vmem:[%s236 + $0x98] sm:$0xf]
      %v263 = vld [vmem:[%s236 + $0x9c] sm:$0xff]
      %v264 = vld [vmem:[%s236 + $0xa4] sm:$0xf]
      %v265 = vld [vmem:[%s236 + $0xa8] sm:$0xff]
      %v266 = vld [vmem:[%s236 + $0xb0] sm:$0xf]
      %v267 = vld [vmem:[%s236 + $0xb4] sm:$0xff]
      %v268 = vld [vmem:[%s236 + $0xbc] sm:$0xf]
      %v269 = vld [vmem:[%s1] sm:$0xf]
      %v270 = vld [vmem:[%s1 + $0x4] sm:$0xf]
      %v271 = vld [vmem:[%s1 + $0x8] sm:$0xf]
      %v272 = vld [vmem:[%s1 + $0xc] sm:$0xf]
      %v273 = vld [vmem:[%s1 + $0x10] sm:$0xf]
      %v274 = vld [vmem:[%s1 + $0x14] sm:$0xf]
      %v275 = vld [vmem:[%s1 + $0x18] sm:$0xf]
      %v276 = vld [vmem:[%s1 + $0x1c] sm:$0xf]
      %v277 = vld [vmem:[%s1 + $0x20] sm:$0xf]
      %v278 = vld [vmem:[%s1 + $0x24] sm:$0xf]
      %v279 = vld [vmem:[%s1 + $0x28] sm:$0xf]
      %v280 = vld [vmem:[%s1 + $0x2c] sm:$0xf]
      %v281 = vld [vmem:[%s1 + $0x30] sm:$0xf]
      %v282 = vld [vmem:[%s1 + $0x34] sm:$0xf]
      %v283 = vld [vmem:[%s1 + $0x38] sm:$0xf]
      %v284 = vld [vmem:[%s1 + $0x3c] sm:$0xf]
      %v285 = vld [vmem:[%s1 + $0x40] sm:$0xf]
      %v286 = vld [vmem:[%s1 + $0x44] sm:$0xf]
      %v287 = vld [vmem:[%s1 + $0x48] sm:$0xf]
      %v288 = vld [vmem:[%s1 + $0x4c] sm:$0xf]
      %v289 = vld [vmem:[%s1 + $0x50] sm:$0xf]
      %v290 = vld [vmem:[%s1 + $0x54] sm:$0xf]
      %v291 = vld [vmem:[%s1 + $0x58] sm:$0xf]
      %v292 = vld [vmem:[%s1 + $0x5c] sm:$0xf]
      %v293 = vld [vmem:[%s1 + $0x60] sm:$0xf]
      %v294 = vld [vmem:[%s1 + $0x64] sm:$0xf]
      %v295 = vld [vmem:[%s1 + $0x68] sm:$0xf]
      %v296 = vld [vmem:[%s1 + $0x6c] sm:$0xf]
      %v297 = vld [vmem:[%s1 + $0x70] sm:$0xf]
      %v298 = vld [vmem:[%s1 + $0x74] sm:$0xf]
      %v299 = vld [vmem:[%s1 + $0x78] sm:$0xf]
      %v300 = vld [vmem:[%s1 + $0x7c] sm:$0xf]
      %v301 = vld [vmem:[%s1 + $0x80] sm:$0xf]
      %v302 = vld [vmem:[%s1 + $0x84] sm:$0xf]
      %v303 = vld [vmem:[%s1 + $0x88] sm:$0xf]
      %v304 = vld [vmem:[%s1 + $0x8c] sm:$0xf]
      %v305 = vld [vmem:[%s1 + $0x90] sm:$0xf]
      %v306 = vld [vmem:[%s1 + $0x94] sm:$0xf]
      %v307 = vld [vmem:[%s1 + $0x98] sm:$0xf]
      %v308 = vld [vmem:[%s1 + $0x9c] sm:$0xf]
      %v309 = vld [vmem:[%s1 + $0xa0] sm:$0xf]
      %v310 = vld [vmem:[%s1 + $0xa4] sm:$0xf]
      %v311 = vld [vmem:[%s1 + $0xa8] sm:$0xf]
      %v312 = vld [vmem:[%s1 + $0xac] sm:$0xf]
      %v313 = vld [vmem:[%s1 + $0xb0] sm:$0xf]
      %v314 = vld [vmem:[%s1 + $0xb4] sm:$0xf]
      %v315 = vld [vmem:[%s1 + $0xb8] sm:$0xf]
      %v316 = vld [vmem:[%s1 + $0xbc] sm:$0xf]
      %s317 = sadd.s32 %s231, 8
      %s318 = sshra.s32 %s317, 3
      %s319 = sand.u32 %s317, 7
      %s320 = smul.u32 %s318, 3
      %s321 = smul.addr %s320, 4
      %s322 = scalar_lea.vmem %s209, %s321
      %v323 = vld [vmem:[%s322] sm:$0xff]
      %v324 = vld [vmem:[%s322 + $0x8] sm:$0xf]
      %v325 = vld [vmem:[%s322 + $0xc] sm:$0xff]
      %v326 = vld [vmem:[%s322 + $0x14] sm:$0xf]
      %v327 = vld [vmem:[%s322 + $0x18] sm:$0xff]
      %v328 = vld [vmem:[%s322 + $0x20] sm:$0xf]
      %v329 = vld [vmem:[%s322 + $0x24] sm:$0xff]
      %v330 = vld [vmem:[%s322 + $0x2c] sm:$0xf]
      %v331 = vld [vmem:[%s322 + $0x30] sm:$0xff]
      %v332 = vld [vmem:[%s322 + $0x38] sm:$0xf]
      %v333 = vld [vmem:[%s322 + $0x3c] sm:$0xff]
      %v334 = vld [vmem:[%s322 + $0x44] sm:$0xf]
      %v335 = vld [vmem:[%s322 + $0x48] sm:$0xff]
      %v336 = vld [vmem:[%s322 + $0x50] sm:$0xf]
      %v337 = vld [vmem:[%s322 + $0x54] sm:$0xff]
      %v338 = vld [vmem:[%s322 + $0x5c] sm:$0xf]
      %v339 = vld [vmem:[%s322 + $0x60] sm:$0xff]
      %v340 = vld [vmem:[%s322 + $0x68] sm:$0xf]
      %v341 = vld [vmem:[%s322 + $0x6c] sm:$0xff]
      %v342 = vld [vmem:[%s322 + $0x74] sm:$0xf]
      %v343 = vld [vmem:[%s322 + $0x78] sm:$0xff]
      %v344 = vld [vmem:[%s322 + $0x80] sm:$0xf]
      %v345 = vld [vmem:[%s322 + $0x84] sm:$0xff]
      %v346 = vld [vmem:[%s322 + $0x8c] sm:$0xf]
      %v347 = vld [vmem:[%s322 + $0x90] sm:$0xff]
      %v348 = vld [vmem:[%s322 + $0x98] sm:$0xf]
      %v349 = vld [vmem:[%s322 + $0x9c] sm:$0xff]
      %v350 = vld [vmem:[%s322 + $0xa4] sm:$0xf]
      %v351 = vld [vmem:[%s322 + $0xa8] sm:$0xff]
      %v352 = vld [vmem:[%s322 + $0xb0] sm:$0xf]
      %v353 = vld [vmem:[%s322 + $0xb4] sm:$0xff]
      %v354 = vld [vmem:[%s322 + $0xbc] sm:$0xf]
      %s355 = scalar_lea.vmem %s1, 192
      %v356 = vld [vmem:[%s355] sm:$0xf]
      %v357 = vld [vmem:[%s355 + $0x4] sm:$0xf]
      %v358 = vld [vmem:[%s355 + $0x8] sm:$0xf]
      %v359 = vld [vmem:[%s355 + $0xc] sm:$0xf]
      %v360 = vld [vmem:[%s355 + $0x10] sm:$0xf]
      %v361 = vld [vmem:[%s355 + $0x14] sm:$0xf]
      %v362 = vld [vmem:[%s355 + $0x18] sm:$0xf]
      %v363 = vld [vmem:[%s355 + $0x1c] sm:$0xf]
      %v364 = vld [vmem:[%s355 + $0x20] sm:$0xf]
      %v365 = vld [vmem:[%s355 + $0x24] sm:$0xf]
      %v366 = vld [vmem:[%s355 + $0x28] sm:$0xf]
      %v367 = vld [vmem:[%s355 + $0x2c] sm:$0xf]
      %v368 = vld [vmem:[%s355 + $0x30] sm:$0xf]
      %v369 = vld [vmem:[%s355 + $0x34] sm:$0xf]
      %v370 = vld [vmem:[%s355 + $0x38] sm:$0xf]
      %v371 = vld [vmem:[%s355 + $0x3c] sm:$0xf]
      %v372 = vld [vmem:[%s355 + $0x40] sm:$0xf]
      %v373 = vld [vmem:[%s355 + $0x44] sm:$0xf]
      %v374 = vld [vmem:[%s355 + $0x48] sm:$0xf]
      %v375 = vld [vmem:[%s355 + $0x4c] sm:$0xf]
      %v376 = vld [vmem:[%s355 + $0x50] sm:$0xf]
      %v377 = vld [vmem:[%s355 + $0x54] sm:$0xf]
      %v378 = vld [vmem:[%s355 + $0x58] sm:$0xf]
      %v379 = vld [vmem:[%s355 + $0x5c] sm:$0xf]
      %v380 = vld [vmem:[%s355 + $0x60] sm:$0xf]
      %v381 = vld [vmem:[%s355 + $0x64] sm:$0xf]
      %v382 = vld [vmem:[%s355 + $0x68] sm:$0xf]
      %v383 = vld [vmem:[%s355 + $0x6c] sm:$0xf]
      %v384 = vld [vmem:[%s355 + $0x70] sm:$0xf]
      %v385 = vld [vmem:[%s355 + $0x74] sm:$0xf]
      %v386 = vld [vmem:[%s355 + $0x78] sm:$0xf]
      %v387 = vld [vmem:[%s355 + $0x7c] sm:$0xf]
      %v388 = vld [vmem:[%s355 + $0x80] sm:$0xf]
      %v389 = vld [vmem:[%s355 + $0x84] sm:$0xf]
      %v390 = vld [vmem:[%s355 + $0x88] sm:$0xf]
      %v391 = vld [vmem:[%s355 + $0x8c] sm:$0xf]
      %v392 = vld [vmem:[%s355 + $0x90] sm:$0xf]
      %v393 = vld [vmem:[%s355 + $0x94] sm:$0xf]
      %v394 = vld [vmem:[%s355 + $0x98] sm:$0xf]
      %v395 = vld [vmem:[%s355 + $0x9c] sm:$0xf]
      %v396 = vld [vmem:[%s355 + $0xa0] sm:$0xf]
      %v397 = vld [vmem:[%s355 + $0xa4] sm:$0xf]
      %v398 = vld [vmem:[%s355 + $0xa8] sm:$0xf]
      %v399 = vld [vmem:[%s355 + $0xac] sm:$0xf]
      %v400 = vld [vmem:[%s355 + $0xb0] sm:$0xf]
      %v401 = vld [vmem:[%s355 + $0xb4] sm:$0xf]
      %v402 = vld [vmem:[%s355 + $0xb8] sm:$0xf]
      %v403 = vld [vmem:[%s355 + $0xbc] sm:$0xf]
      %v436 = vunpack.c.l.b16 %v323
      %v437 = vunpack.c.h.b16 %v323
      %v438 = vunpack.c.l.b16 %v324
      %v439 = vunpack.c.l.b16 %v325
      %v440 = vunpack.c.h.b16 %v325
      %v441 = vunpack.c.l.b16 %v326
      %v442 = vunpack.c.l.b16 %v327
      %v443 = vunpack.c.h.b16 %v327
      %v444 = vunpack.c.l.b16 %v328
      %v445 = vunpack.c.l.b16 %v329
      %v446 = vunpack.c.h.b16 %v329
      %v447 = vunpack.c.l.b16 %v330
      %v448 = vunpack.c.l.b16 %v331
      %v449 = vunpack.c.h.b16 %v331
      %v450 = vunpack.c.l.b16 %v332
      %v451 = vunpack.c.l.b16 %v333
      %v452 = vunpack.c.h.b16 %v333
      %v453 = vunpack.c.l.b16 %v334
      %v454 = vunpack.c.l.b16 %v335
      %v455 = vunpack.c.h.b16 %v335
      %v456 = vunpack.c.l.b16 %v336
      %v457 = vunpack.c.l.b16 %v337
      %v458 = vunpack.c.h.b16 %v337
      %v459 = vunpack.c.l.b16 %v338
      %v460 = vunpack.c.l.b16 %v339
      %v461 = vunpack.c.h.b16 %v339
      %v462 = vunpack.c.l.b16 %v340
      %v463 = vunpack.c.l.b16 %v341
      %v464 = vunpack.c.h.b16 %v341
      %v465 = vunpack.c.l.b16 %v342
      %v466 = vunpack.c.l.b16 %v343
      %v467 = vunpack.c.h.b16 %v343
      %v468 = vunpack.c.l.b16 %v344
      %v469 = vunpack.c.l.b16 %v345
      %v470 = vunpack.c.h.b16 %v345
      %v471 = vunpack.c.l.b16 %v346
      %v472 = vunpack.c.l.b16 %v347
      %v473 = vunpack.c.h.b16 %v347
      %v474 = vunpack.c.l.b16 %v348
      %v475 = vunpack.c.l.b16 %v349
      %v476 = vunpack.c.h.b16 %v349
      %v477 = vunpack.c.l.b16 %v350
      %v478 = vunpack.c.l.b16 %v351
      %v479 = vunpack.c.h.b16 %v351
      %v480 = vunpack.c.l.b16 %v352
      %v481 = vunpack.c.l.b16 %v353
      %v482 = vunpack.c.h.b16 %v353
      %v483 = vunpack.c.l.b16 %v354
      %v484 = vpack.c.b16 %v439, %v436
      %v485 = vpack.c.b16 %v440, %v437
      %v486 = vpack.c.b16 %v441, %v438
      %v487 = vpack.c.b16 %v445, %v442
      %v488 = vpack.c.b16 %v446, %v443
      %v489 = vpack.c.b16 %v447, %v444
      %v490 = vpack.c.b16 %v451, %v448
      %v491 = vpack.c.b16 %v452, %v449
      %v492 = vpack.c.b16 %v453, %v450
      %v493 = vpack.c.b16 %v457, %v454
      %v494 = vpack.c.b16 %v458, %v455
      %v495 = vpack.c.b16 %v459, %v456
      %v496 = vpack.c.b16 %v463, %v460
      %v497 = vpack.c.b16 %v464, %v461
      %v498 = vpack.c.b16 %v465, %v462
      %v499 = vpack.c.b16 %v469, %v466
      %v500 = vpack.c.b16 %v470, %v467
      %v501 = vpack.c.b16 %v471, %v468
      %v502 = vpack.c.b16 %v475, %v472
      %v503 = vpack.c.b16 %v476, %v473
      %v504 = vpack.c.b16 %v477, %v474
      %v505 = vpack.c.b16 %v481, %v478
      %v506 = vpack.c.b16 %v482, %v479
      %v507 = vpack.c.b16 %v483, %v480
      %v580 = vunpack.c.l.b16 %v356
      %v581 = vunpack.c.l.b16 %v357
      %v582 = vunpack.c.l.b16 %v358
      %v583 = vunpack.c.l.b16 %v359
      %v584 = vunpack.c.l.b16 %v360
      %v585 = vunpack.c.l.b16 %v361
      %v586 = vunpack.c.l.b16 %v362
      %v587 = vunpack.c.l.b16 %v363
      %v588 = vunpack.c.l.b16 %v364
      %v589 = vunpack.c.l.b16 %v365
      %v590 = vunpack.c.l.b16 %v366
      %v591 = vunpack.c.l.b16 %v367
      %v592 = vunpack.c.l.b16 %v368
      %v593 = vunpack.c.l.b16 %v369
      %v594 = vunpack.c.l.b16 %v370
      %v595 = vunpack.c.l.b16 %v371
      %v596 = vunpack.c.l.b16 %v372
      %v597 = vunpack.c.l.b16 %v373
      %v598 = vunpack.c.l.b16 %v374
      %v599 = vunpack.c.l.b16 %v375
      %v600 = vunpack.c.l.b16 %v376
      %v601 = vunpack.c.l.b16 %v377
      %v602 = vunpack.c.l.b16 %v378
      %v603 = vunpack.c.l.b16 %v379
      %v604 = vunpack.c.l.b16 %v380
      %v605 = vunpack.c.l.b16 %v381
      %v606 = vunpack.c.l.b16 %v382
      %v607 = vunpack.c.l.b16 %v383
      %v608 = vunpack.c.l.b16 %v384
      %v609 = vunpack.c.l.b16 %v385
      %v610 = vunpack.c.l.b16 %v386
      %v611 = vunpack.c.l.b16 %v387
      %v612 = vunpack.c.l.b16 %v388
      %v613 = vunpack.c.l.b16 %v389
      %v614 = vunpack.c.l.b16 %v390
      %v615 = vunpack.c.l.b16 %v391
      %v616 = vunpack.c.l.b16 %v392
      %v617 = vunpack.c.l.b16 %v393
      %v618 = vunpack.c.l.b16 %v394
      %v619 = vunpack.c.l.b16 %v395
      %v620 = vunpack.c.l.b16 %v396
      %v621 = vunpack.c.l.b16 %v397
      %v622 = vunpack.c.l.b16 %v398
      %v623 = vunpack.c.l.b16 %v399
      %v624 = vunpack.c.l.b16 %v400
      %v625 = vunpack.c.l.b16 %v401
      %v626 = vunpack.c.l.b16 %v402
      %v627 = vunpack.c.l.b16 %v403
      %v628 = vpack.c.b16 %v581, %v580
      %v629 = vpack.c.b16 %v583, %v582
      %v630 = vpack.c.b16 %v585, %v584
      %v631 = vpack.c.b16 %v587, %v586
      %v632 = vpack.c.b16 %v589, %v588
      %v633 = vpack.c.b16 %v591, %v590
      %v634 = vpack.c.b16 %v593, %v592
      %v635 = vpack.c.b16 %v595, %v594
      %v636 = vpack.c.b16 %v597, %v596
      %v637 = vpack.c.b16 %v599, %v598
      %v638 = vpack.c.b16 %v601, %v600
      %v639 = vpack.c.b16 %v603, %v602
      %v640 = vpack.c.b16 %v605, %v604
      %v641 = vpack.c.b16 %v607, %v606
      %v642 = vpack.c.b16 %v609, %v608
      %v643 = vpack.c.b16 %v611, %v610
      %v644 = vpack.c.b16 %v613, %v612
      %v645 = vpack.c.b16 %v615, %v614
      %v646 = vpack.c.b16 %v617, %v616
      %v647 = vpack.c.b16 %v619, %v618
      %v648 = vpack.c.b16 %v621, %v620
      %v649 = vpack.c.b16 %v623, %v622
      %v650 = vpack.c.b16 %v625, %v624
      %v651 = vpack.c.b16 %v627, %v626
      %676 = vmatprep.subr.bf16.mxu0 0
      %677 = vmatpush1.bf16.msra.mxu0 %v635
      %678 = vmatprep.subr.bf16.mxu0 0
      %679 = vmatpush1.bf16.msra.mxu0 %v634
      %680 = vmatprep.subr.bf16.mxu0 0
      %681 = vmatpush1.bf16.msra.mxu0 %v633
      %682 = vmatprep.subr.bf16.mxu0 0
      %683 = vmatpush1.bf16.msra.mxu0 %v632
      %684 = vmatprep.subr.bf16.mxu0 0
      %685 = vmatpush1.bf16.msra.mxu0 %v631
      %686 = vmatprep.subr.bf16.mxu0 0
      %687 = vmatpush1.bf16.msra.mxu0 %v630
      %688 = vmatprep.subr.bf16.mxu0 0
      %689 = vmatpush1.bf16.msra.mxu0 %v629
      %690 = vmatprep.subr.bf16.mxu0 0
      %691 = vmatpush1.bf16.msra.mxu0 %v628
      %692 = vmatprep.subr.bf16.mxu0 0
      %693 = vmatpush2.bf16.msra.mxu0 %v643
      %694 = vmatprep.subr.bf16.mxu0 0
      %695 = vmatpush2.bf16.msra.mxu0 %v642
      %696 = vmatprep.subr.bf16.mxu0 0
      %697 = vmatpush2.bf16.msra.mxu0 %v641
      %698 = vmatprep.subr.bf16.mxu0 0
      %699 = vmatpush2.bf16.msra.mxu0 %v640
      %700 = vmatprep.subr.bf16.mxu0 0
      %701 = vmatpush2.bf16.msra.mxu0 %v639
      %702 = vmatprep.subr.bf16.mxu0 0
      %703 = vmatpush2.bf16.msra.mxu0 %v638
      %704 = vmatprep.subr.bf16.mxu0 0
      %705 = vmatpush2.bf16.msra.mxu0 %v637
      %706 = vmatprep.subr.bf16.mxu0 0
      %707 = vmatpush2.bf16.msra.mxu0 %v636
      %708 = vmatprep.mubr.bf16.mxu0 %v485
      %709 = vmatmul.mubr.bf16.gmra.mxu0 %v484
      %v710 = vpop.f32.mrf.mxu0
      %v711 = vadd.f32 0.0, %v710
      %v712 = vpop.f32.mrf.mxu0
      %v713 = vpop.f32.mrf.mxu0
      %v714 = vadd.f32 0.0, %v713
      %v715 = vpop.f32.mrf.mxu0
      %716 = vmatprep.mubr.bf16.mxu0 %v488
      %717 = vmatmul.mubr.bf16.gmra.mxu0 %v487
      %v718 = vpop.f32.mrf.mxu0
      %v719 = vadd.f32 0.0, %v718
      %v720 = vpop.f32.mrf.mxu0
      %v721 = vpop.f32.mrf.mxu0
      %v722 = vadd.f32 0.0, %v721
      %v723 = vpop.f32.mrf.mxu0
      %724 = vmatprep.mubr.bf16.mxu0 %v491
      %725 = vmatmul.mubr.bf16.gmra.mxu0 %v490
      %v726 = vpop.f32.mrf.mxu0
      %v727 = vadd.f32 0.0, %v726
      %v728 = vpop.f32.mrf.mxu0
      %v729 = vpop.f32.mrf.mxu0
      %v730 = vadd.f32 0.0, %v729
      %v731 = vpop.f32.mrf.mxu0
      %732 = vmatprep.mubr.bf16.mxu0 %v494
      %733 = vmatmul.mubr.bf16.gmra.mxu0 %v493
      %v734 = vpop.f32.mrf.mxu0
      %v735 = vadd.f32 0.0, %v734
      %v736 = vpop.f32.mrf.mxu0
      %v737 = vpop.f32.mrf.mxu0
      %v738 = vadd.f32 0.0, %v737
      %v739 = vpop.f32.mrf.mxu0
      %740 = vmatprep.mubr.bf16.mxu0 %v497
      %741 = vmatmul.mubr.bf16.gmra.mxu0 %v496
      %v742 = vpop.f32.mrf.mxu0
      %v743 = vadd.f32 0.0, %v742
      %v744 = vpop.f32.mrf.mxu0
      %v745 = vpop.f32.mrf.mxu0
      %v746 = vadd.f32 0.0, %v745
      %v747 = vpop.f32.mrf.mxu0
      %748 = vmatprep.mubr.bf16.mxu0 %v500
      %749 = vmatmul.mubr.bf16.gmra.mxu0 %v499
      %v750 = vpop.f32.mrf.mxu0
      %v751 = vadd.f32 0.0, %v750
      %v752 = vpop.f32.mrf.mxu0
      %v753 = vpop.f32.mrf.mxu0
      %v754 = vadd.f32 0.0, %v753
      %v755 = vpop.f32.mrf.mxu0
      %756 = vmatprep.mubr.bf16.mxu0 %v503
      %757 = vmatmul.mubr.bf16.gmra.mxu0 %v502
      %v758 = vpop.f32.mrf.mxu0
      %v759 = vadd.f32 0.0, %v758
      %v760 = vpop.f32.mrf.mxu0
      %v761 = vpop.f32.mrf.mxu0
      %v762 = vadd.f32 0.0, %v761
      %v763 = vpop.f32.mrf.mxu0
      %764 = vmatprep.mubr.bf16.mxu0 %v506
      %765 = vmatmul.mubr.bf16.gmra.mxu0 %v505
      %v766 = vpop.f32.mrf.mxu0
      %v767 = vadd.f32 0.0, %v766
      %v768 = vpop.f32.mrf.mxu0
      %v769 = vpop.f32.mrf.mxu0
      %v770 = vadd.f32 0.0, %v769
      %v771 = vpop.f32.mrf.mxu0
      %772 = vdwg.mxu0
      %773 = vmatprep.subr.bf16.mxu0 0
      %774 = vmatpush1.bf16.msra.mxu0 %v651
      %775 = vmatprep.subr.bf16.mxu0 0
      %776 = vmatpush1.bf16.msra.mxu0 %v650
      %777 = vmatprep.subr.bf16.mxu0 0
      %778 = vmatpush1.bf16.msra.mxu0 %v649
      %779 = vmatprep.subr.bf16.mxu0 0
      %780 = vmatpush1.bf16.msra.mxu0 %v648
      %781 = vmatprep.subr.bf16.mxu0 0
      %782 = vmatpush1.bf16.msra.mxu0 %v647
      %783 = vmatprep.subr.bf16.mxu0 0
      %784 = vmatpush1.bf16.msra.mxu0 %v646
      %785 = vmatprep.subr.bf16.mxu0 0
      %786 = vmatpush1.bf16.msra.mxu0 %v645
      %787 = vmatprep.subr.bf16.mxu0 0
      %788 = vmatpush1.bf16.msra.mxu0 %v644
      %789 = vmatprep.subr.bf16.mxu0 0
      %790 = vmatpush2.bf16.msra.mxu0 0
      %791 = vmatprep.subr.bf16.mxu0 0
      %792 = vmatpush2.bf16.msra.mxu0 0
      %793 = vmatprep.subr.bf16.mxu0 0
      %794 = vmatpush2.bf16.msra.mxu0 0
      %795 = vmatprep.subr.bf16.mxu0 0
      %796 = vmatpush2.bf16.msra.mxu0 0
      %797 = vmatprep.subr.bf16.mxu0 0
      %798 = vmatpush2.bf16.msra.mxu0 0
      %799 = vmatprep.subr.bf16.mxu0 0
      %800 = vmatpush2.bf16.msra.mxu0 0
      %801 = vmatprep.subr.bf16.mxu0 0
      %802 = vmatpush2.bf16.msra.mxu0 0
      %803 = vmatprep.subr.bf16.mxu0 0
      %804 = vmatpush2.bf16.msra.mxu0 0
      %805 = vmatprep.mubr.bf16.mxu0 0
      %806 = vmatmul.mubr.bf16.gmra.mxu0 %v486
      %v807 = vpop.f32.mrf.mxu0
      %v808 = vadd.f32 %v711, %v807
      %v809 = vpop.f32.mrf.mxu0
      %v810 = vpop.f32.mrf.mxu0
      %v811 = vadd.f32 %v714, %v810
      %v812 = vpop.f32.mrf.mxu0
      %813 = vmatprep.mubr.bf16.mxu0 0
      %814 = vmatmul.mubr.bf16.gmra.mxu0 %v489
      %v815 = vpop.f32.mrf.mxu0
      %v816 = vadd.f32 %v719, %v815
      %v817 = vpop.f32.mrf.mxu0
      %v818 = vpop.f32.mrf.mxu0
      %v819 = vadd.f32 %v722, %v818
      %v820 = vpop.f32.mrf.mxu0
      %821 = vmatprep.mubr.bf16.mxu0 0
      %822 = vmatmul.mubr.bf16.gmra.mxu0 %v492
      %v823 = vpop.f32.mrf.mxu0
      %v824 = vadd.f32 %v727, %v823
      %v825 = vpop.f32.mrf.mxu0
      %v826 = vpop.f32.mrf.mxu0
      %v827 = vadd.f32 %v730, %v826
      %v828 = vpop.f32.mrf.mxu0
      %829 = vmatprep.mubr.bf16.mxu0 0
      %830 = vmatmul.mubr.bf16.gmra.mxu0 %v495
      %v831 = vpop.f32.mrf.mxu0
      %v832 = vadd.f32 %v735, %v831
      %v833 = vpop.f32.mrf.mxu0
      %v834 = vpop.f32.mrf.mxu0
      %v835 = vadd.f32 %v738, %v834
      %v836 = vpop.f32.mrf.mxu0
      %837 = vmatprep.mubr.bf16.mxu0 0
      %838 = vmatmul.mubr.bf16.gmra.mxu0 %v498
      %v839 = vpop.f32.mrf.mxu0
      %v840 = vadd.f32 %v743, %v839
      %v841 = vpop.f32.mrf.mxu0
      %v842 = vpop.f32.mrf.mxu0
      %v843 = vadd.f32 %v746, %v842
      %v844 = vpop.f32.mrf.mxu0
      %845 = vmatprep.mubr.bf16.mxu0 0
      %846 = vmatmul.mubr.bf16.gmra.mxu0 %v501
      %v847 = vpop.f32.mrf.mxu0
      %v848 = vadd.f32 %v751, %v847
      %v849 = vpop.f32.mrf.mxu0
      %v850 = vpop.f32.mrf.mxu0
      %v851 = vadd.f32 %v754, %v850
      %v852 = vpop.f32.mrf.mxu0
      %853 = vmatprep.mubr.bf16.mxu0 0
      %854 = vmatmul.mubr.bf16.gmra.mxu0 %v504
      %v855 = vpop.f32.mrf.mxu0
      %v856 = vadd.f32 %v759, %v855
      %v857 = vpop.f32.mrf.mxu0
      %v858 = vpop.f32.mrf.mxu0
      %v859 = vadd.f32 %v762, %v858
      %v860 = vpop.f32.mrf.mxu0
      %861 = vmatprep.mubr.bf16.mxu0 0
      %862 = vmatmul.mubr.bf16.gmra.mxu0 %v507
      %v863 = vpop.f32.mrf.mxu0
      %v864 = vadd.f32 %v767, %v863
      %v865 = vpop.f32.mrf.mxu0
      %v866 = vpop.f32.mrf.mxu0
      %v867 = vadd.f32 %v770, %v866
      %v868 = vpop.f32.mrf.mxu0
      %869 = vdwg.mxu0
      %v902 = vunpack.c.l.b16 %v237
      %v903 = vunpack.c.h.b16 %v237
      %v904 = vunpack.c.l.b16 %v238
      %v905 = vunpack.c.l.b16 %v239
      %v906 = vunpack.c.h.b16 %v239
      %v907 = vunpack.c.l.b16 %v240
      %v908 = vunpack.c.l.b16 %v241
      %v909 = vunpack.c.h.b16 %v241
      %v910 = vunpack.c.l.b16 %v242
      %v911 = vunpack.c.l.b16 %v243
      %v912 = vunpack.c.h.b16 %v243
      %v913 = vunpack.c.l.b16 %v244
      %v914 = vunpack.c.l.b16 %v245
      %v915 = vunpack.c.h.b16 %v245
      %v916 = vunpack.c.l.b16 %v246
      %v917 = vunpack.c.l.b16 %v247
      %v918 = vunpack.c.h.b16 %v247
      %v919 = vunpack.c.l.b16 %v248
      %v920 = vunpack.c.l.b16 %v249
      %v921 = vunpack.c.h.b16 %v249
      %v922 = vunpack.c.l.b16 %v250
      %v923 = vunpack.c.l.b16 %v251
      %v924 = vunpack.c.h.b16 %v251
      %v925 = vunpack.c.l.b16 %v252
      %v926 = vunpack.c.l.b16 %v253
      %v927 = vunpack.c.h.b16 %v253
      %v928 = vunpack.c.l.b16 %v254
      %v929 = vunpack.c.l.b16 %v255
      %v930 = vunpack.c.h.b16 %v255
      %v931 = vunpack.c.l.b16 %v256
      %v932 = vunpack.c.l.b16 %v257
      %v933 = vunpack.c.h.b16 %v257
      %v934 = vunpack.c.l.b16 %v258
      %v935 = vunpack.c.l.b16 %v259
      %v936 = vunpack.c.h.b16 %v259
      %v937 = vunpack.c.l.b16 %v260
      %v938 = vunpack.c.l.b16 %v261
      %v939 = vunpack.c.h.b16 %v261
      %v940 = vunpack.c.l.b16 %v262
      %v941 = vunpack.c.l.b16 %v263
      %v942 = vunpack.c.h.b16 %v263
      %v943 = vunpack.c.l.b16 %v264
      %v944 = vunpack.c.l.b16 %v265
      %v945 = vunpack.c.h.b16 %v265
      %v946 = vunpack.c.l.b16 %v266
      %v947 = vunpack.c.l.b16 %v267
      %v948 = vunpack.c.h.b16 %v267
      %v949 = vunpack.c.l.b16 %v268
      %v950 = vpack.c.b16 %v905, %v902
      %v951 = vpack.c.b16 %v906, %v903
      %v952 = vpack.c.b16 %v907, %v904
      %v953 = vpack.c.b16 %v911, %v908
      %v954 = vpack.c.b16 %v912, %v909
      %v955 = vpack.c.b16 %v913, %v910
      %v956 = vpack.c.b16 %v917, %v914
      %v957 = vpack.c.b16 %v918, %v915
      %v958 = vpack.c.b16 %v919, %v916
      %v959 = vpack.c.b16 %v923, %v920
      %v960 = vpack.c.b16 %v924, %v921
      %v961 = vpack.c.b16 %v925, %v922
      %v962 = vpack.c.b16 %v929, %v926
      %v963 = vpack.c.b16 %v930, %v927
      %v964 = vpack.c.b16 %v931, %v928
      %v965 = vpack.c.b16 %v935, %v932
      %v966 = vpack.c.b16 %v936, %v933
      %v967 = vpack.c.b16 %v937, %v934
      %v968 = vpack.c.b16 %v941, %v938
      %v969 = vpack.c.b16 %v942, %v939
      %v970 = vpack.c.b16 %v943, %v940
      %v971 = vpack.c.b16 %v947, %v944
      %v972 = vpack.c.b16 %v948, %v945
      %v973 = vpack.c.b16 %v949, %v946
      %v1046 = vunpack.c.l.b16 %v269
      %v1047 = vunpack.c.l.b16 %v270
      %v1048 = vunpack.c.l.b16 %v271
      %v1049 = vunpack.c.l.b16 %v272
      %v1050 = vunpack.c.l.b16 %v273
      %v1051 = vunpack.c.l.b16 %v274
      %v1052 = vunpack.c.l.b16 %v275
      %v1053 = vunpack.c.l.b16 %v276
      %v1054 = vunpack.c.l.b16 %v277
      %v1055 = vunpack.c.l.b16 %v278
      %v1056 = vunpack.c.l.b16 %v279
      %v1057 = vunpack.c.l.b16 %v280
      %v1058 = vunpack.c.l.b16 %v281
      %v1059 = vunpack.c.l.b16 %v282
      %v1060 = vunpack.c.l.b16 %v283
      %v1061 = vunpack.c.l.b16 %v284
      %v1062 = vunpack.c.l.b16 %v285
      %v1063 = vunpack.c.l.b16 %v286
      %v1064 = vunpack.c.l.b16 %v287
      %v1065 = vunpack.c.l.b16 %v288
      %v1066 = vunpack.c.l.b16 %v289
      %v1067 = vunpack.c.l.b16 %v290
      %v1068 = vunpack.c.l.b16 %v291
      %v1069 = vunpack.c.l.b16 %v292
      %v1070 = vunpack.c.l.b16 %v293
      %v1071 = vunpack.c.l.b16 %v294
      %v1072 = vunpack.c.l.b16 %v295
      %v1073 = vunpack.c.l.b16 %v296
      %v1074 = vunpack.c.l.b16 %v297
      %v1075 = vunpack.c.l.b16 %v298
      %v1076 = vunpack.c.l.b16 %v299
      %v1077 = vunpack.c.l.b16 %v300
      %v1078 = vunpack.c.l.b16 %v301
      %v1079 = vunpack.c.l.b16 %v302
      %v1080 = vunpack.c.l.b16 %v303
      %v1081 = vunpack.c.l.b16 %v304
      %v1082 = vunpack.c.l.b16 %v305
      %v1083 = vunpack.c.l.b16 %v306
      %v1084 = vunpack.c.l.b16 %v307
      %v1085 = vunpack.c.l.b16 %v308
      %v1086 = vunpack.c.l.b16 %v309
      %v1087 = vunpack.c.l.b16 %v310
      %v1088 = vunpack.c.l.b16 %v311
      %v1089 = vunpack.c.l.b16 %v312
      %v1090 = vunpack.c.l.b16 %v313
      %v1091 = vunpack.c.l.b16 %v314
      %v1092 = vunpack.c.l.b16 %v315
      %v1093 = vunpack.c.l.b16 %v316
      %v1094 = vpack.c.b16 %v1047, %v1046
      %v1095 = vpack.c.b16 %v1049, %v1048
      %v1096 = vpack.c.b16 %v1051, %v1050
      %v1097 = vpack.c.b16 %v1053, %v1052
      %v1098 = vpack.c.b16 %v1055, %v1054
      %v1099 = vpack.c.b16 %v1057, %v1056
      %v1100 = vpack.c.b16 %v1059, %v1058
      %v1101 = vpack.c.b16 %v1061, %v1060
      %v1102 = vpack.c.b16 %v1063, %v1062
      %v1103 = vpack.c.b16 %v1065, %v1064
      %v1104 = vpack.c.b16 %v1067, %v1066
      %v1105 = vpack.c.b16 %v1069, %v1068
      %v1106 = vpack.c.b16 %v1071, %v1070
      %v1107 = vpack.c.b16 %v1073, %v1072
      %v1108 = vpack.c.b16 %v1075, %v1074
      %v1109 = vpack.c.b16 %v1077, %v1076
      %v1110 = vpack.c.b16 %v1079, %v1078
      %v1111 = vpack.c.b16 %v1081, %v1080
      %v1112 = vpack.c.b16 %v1083, %v1082
      %v1113 = vpack.c.b16 %v1085, %v1084
      %v1114 = vpack.c.b16 %v1087, %v1086
      %v1115 = vpack.c.b16 %v1089, %v1088
      %v1116 = vpack.c.b16 %v1091, %v1090
      %v1117 = vpack.c.b16 %v1093, %v1092
      %1142 = vmatprep.subr.bf16.mxu0 0
      %1143 = vmatpush1.bf16.msra.mxu0 %v1101
      %1144 = vmatprep.subr.bf16.mxu0 0
      %1145 = vmatpush1.bf16.msra.mxu0 %v1100
      %1146 = vmatprep.subr.bf16.mxu0 0
      %1147 = vmatpush1.bf16.msra.mxu0 %v1099
      %1148 = vmatprep.subr.bf16.mxu0 0
      %1149 = vmatpush1.bf16.msra.mxu0 %v1098
      %1150 = vmatprep.subr.bf16.mxu0 0
      %1151 = vmatpush1.bf16.msra.mxu0 %v1097
      %1152 = vmatprep.subr.bf16.mxu0 0
      %1153 = vmatpush1.bf16.msra.mxu0 %v1096
      %1154 = vmatprep.subr.bf16.mxu0 0
      %1155 = vmatpush1.bf16.msra.mxu0 %v1095
      %1156 = vmatprep.subr.bf16.mxu0 0
      %1157 = vmatpush1.bf16.msra.mxu0 %v1094
      %1158 = vmatprep.subr.bf16.mxu0 0
      %1159 = vmatpush2.bf16.msra.mxu0 %v1109
      %1160 = vmatprep.subr.bf16.mxu0 0
      %1161 = vmatpush2.bf16.msra.mxu0 %v1108
      %1162 = vmatprep.subr.bf16.mxu0 0
      %1163 = vmatpush2.bf16.msra.mxu0 %v1107
      %1164 = vmatprep.subr.bf16.mxu0 0
      %1165 = vmatpush2.bf16.msra.mxu0 %v1106
      %1166 = vmatprep.subr.bf16.mxu0 0
      %1167 = vmatpush2.bf16.msra.mxu0 %v1105
      %1168 = vmatprep.subr.bf16.mxu0 0
      %1169 = vmatpush2.bf16.msra.mxu0 %v1104
      %1170 = vmatprep.subr.bf16.mxu0 0
      %1171 = vmatpush2.bf16.msra.mxu0 %v1103
      %1172 = vmatprep.subr.bf16.mxu0 0
      %1173 = vmatpush2.bf16.msra.mxu0 %v1102
      %1174 = vmatprep.mubr.bf16.mxu0 %v951
      %1175 = vmatmul.mubr.bf16.gmra.mxu0 %v950
      %v1176 = vpop.f32.mrf.mxu0
      %v1177 = vadd.f32 %v808, %v1176
      %v1178 = vpop.f32.mrf.mxu0
      %v1179 = vpop.f32.mrf.mxu0
      %v1180 = vadd.f32 %v811, %v1179
      %v1181 = vpop.f32.mrf.mxu0
      %1182 = vmatprep.mubr.bf16.mxu0 %v954
      %1183 = vmatmul.mubr.bf16.gmra.mxu0 %v953
      %v1184 = vpop.f32.mrf.mxu0
      %v1185 = vadd.f32 %v816, %v1184
      %v1186 = vpop.f32.mrf.mxu0
      %v1187 = vpop.f32.mrf.mxu0
      %v1188 = vadd.f32 %v819, %v1187
      %v1189 = vpop.f32.mrf.mxu0
      %1190 = vmatprep.mubr.bf16.mxu0 %v957
      %1191 = vmatmul.mubr.bf16.gmra.mxu0 %v956
      %v1192 = vpop.f32.mrf.mxu0
      %v1193 = vadd.f32 %v824, %v1192
      %v1194 = vpop.f32.mrf.mxu0
      %v1195 = vpop.f32.mrf.mxu0
      %v1196 = vadd.f32 %v827, %v1195
      %v1197 = vpop.f32.mrf.mxu0
      %1198 = vmatprep.mubr.bf16.mxu0 %v960
      %1199 = vmatmul.mubr.bf16.gmra.mxu0 %v959
      %v1200 = vpop.f32.mrf.mxu0
      %v1201 = vadd.f32 %v832, %v1200
      %v1202 = vpop.f32.mrf.mxu0
      %v1203 = vpop.f32.mrf.mxu0
      %v1204 = vadd.f32 %v835, %v1203
      %v1205 = vpop.f32.mrf.mxu0
      %1206 = vmatprep.mubr.bf16.mxu0 %v963
      %1207 = vmatmul.mubr.bf16.gmra.mxu0 %v962
      %v1208 = vpop.f32.mrf.mxu0
      %v1209 = vadd.f32 %v840, %v1208
      %v1210 = vpop.f32.mrf.mxu0
      %v1211 = vpop.f32.mrf.mxu0
      %v1212 = vadd.f32 %v843, %v1211
      %v1213 = vpop.f32.mrf.mxu0
      %1214 = vmatprep.mubr.bf16.mxu0 %v966
      %1215 = vmatmul.mubr.bf16.gmra.mxu0 %v965
      %v1216 = vpop.f32.mrf.mxu0
      %v1217 = vadd.f32 %v848, %v1216
      %v1218 = vpop.f32.mrf.mxu0
      %v1219 = vpop.f32.mrf.mxu0
      %v1220 = vadd.f32 %v851, %v1219
      %v1221 = vpop.f32.mrf.mxu0
      %1222 = vmatprep.mubr.bf16.mxu0 %v969
      %1223 = vmatmul.mubr.bf16.gmra.mxu0 %v968
      %v1224 = vpop.f32.mrf.mxu0
      %v1225 = vadd.f32 %v856, %v1224
      %v1226 = vpop.f32.mrf.mxu0
      %v1227 = vpop.f32.mrf.mxu0
      %v1228 = vadd.f32 %v859, %v1227
      %v1229 = vpop.f32.mrf.mxu0
      %1230 = vmatprep.mubr.bf16.mxu0 %v972
      %1231 = vmatmul.mubr.bf16.gmra.mxu0 %v971
      %v1232 = vpop.f32.mrf.mxu0
      %v1233 = vadd.f32 %v864, %v1232
      %v1234 = vpop.f32.mrf.mxu0
      %v1235 = vpop.f32.mrf.mxu0
      %v1236 = vadd.f32 %v867, %v1235
      %v1237 = vpop.f32.mrf.mxu0
      %1238 = vdwg.mxu0
      %1239 = vmatprep.subr.bf16.mxu0 0
      %1240 = vmatpush1.bf16.msra.mxu0 %v1117
      %1241 = vmatprep.subr.bf16.mxu0 0
      %1242 = vmatpush1.bf16.msra.mxu0 %v1116
      %1243 = vmatprep.subr.bf16.mxu0 0
      %1244 = vmatpush1.bf16.msra.mxu0 %v1115
      %1245 = vmatprep.subr.bf16.mxu0 0
      %1246 = vmatpush1.bf16.msra.mxu0 %v1114
      %1247 = vmatprep.subr.bf16.mxu0 0
      %1248 = vmatpush1.bf16.msra.mxu0 %v1113
      %1249 = vmatprep.subr.bf16.mxu0 0
      %1250 = vmatpush1.bf16.msra.mxu0 %v1112
      %1251 = vmatprep.subr.bf16.mxu0 0
      %1252 = vmatpush1.bf16.msra.mxu0 %v1111
      %1253 = vmatprep.subr.bf16.mxu0 0
      %1254 = vmatpush1.bf16.msra.mxu0 %v1110
      %1255 = vmatprep.subr.bf16.mxu0 0
      %1256 = vmatpush2.bf16.msra.mxu0 0
      %1257 = vmatprep.subr.bf16.mxu0 0
      %1258 = vmatpush2.bf16.msra.mxu0 0
      %1259 = vmatprep.subr.bf16.mxu0 0
      %1260 = vmatpush2.bf16.msra.mxu0 0
      %1261 = vmatprep.subr.bf16.mxu0 0
      %1262 = vmatpush2.bf16.msra.mxu0 0
      %1263 = vmatprep.subr.bf16.mxu0 0
      %1264 = vmatpush2.bf16.msra.mxu0 0
      %1265 = vmatprep.subr.bf16.mxu0 0
      %1266 = vmatpush2.bf16.msra.mxu0 0
      %1267 = vmatprep.subr.bf16.mxu0 0
      %1268 = vmatpush2.bf16.msra.mxu0 0
      %1269 = vmatprep.subr.bf16.mxu0 0
      %1270 = vmatpush2.bf16.msra.mxu0 0
      %1271 = vmatprep.mubr.bf16.mxu0 0
      %1272 = vmatmul.mubr.bf16.gmra.mxu0 %v952
      %v1273 = vpop.f32.mrf.mxu0
      %v1274 = vadd.f32 %v1177, %v1273
      %v1275 = vpop.f32.mrf.mxu0
      %v1276 = vpop.f32.mrf.mxu0
      %v1277 = vadd.f32 %v1180, %v1276
      %v1278 = vpop.f32.mrf.mxu0
      %1279 = vmatprep.mubr.bf16.mxu0 0
      %1280 = vmatmul.mubr.bf16.gmra.mxu0 %v955
      %v1281 = vpop.f32.mrf.mxu0
      %v1282 = vadd.f32 %v1185, %v1281
      %v1283 = vpop.f32.mrf.mxu0
      %v1284 = vpop.f32.mrf.mxu0
      %v1285 = vadd.f32 %v1188, %v1284
      %v1286 = vpop.f32.mrf.mxu0
      %1287 = vmatprep.mubr.bf16.mxu0 0
      %1288 = vmatmul.mubr.bf16.gmra.mxu0 %v958
      %v1289 = vpop.f32.mrf.mxu0
      %v1290 = vadd.f32 %v1193, %v1289
      %v1291 = vpop.f32.mrf.mxu0
      %v1292 = vpop.f32.mrf.mxu0
      %v1293 = vadd.f32 %v1196, %v1292
      %v1294 = vpop.f32.mrf.mxu0
      %1295 = vmatprep.mubr.bf16.mxu0 0
      %1296 = vmatmul.mubr.bf16.gmra.mxu0 %v961
      %v1297 = vpop.f32.mrf.mxu0
      %v1298 = vadd.f32 %v1201, %v1297
      %v1299 = vpop.f32.mrf.mxu0
      %v1300 = vpop.f32.mrf.mxu0
      %v1301 = vadd.f32 %v1204, %v1300
      %v1302 = vpop.f32.mrf.mxu0
      %1303 = vmatprep.mubr.bf16.mxu0 0
      %1304 = vmatmul.mubr.bf16.gmra.mxu0 %v964
      %v1305 = vpop.f32.mrf.mxu0
      %v1306 = vadd.f32 %v1209, %v1305
      %v1307 = vpop.f32.mrf.mxu0
      %v1308 = vpop.f32.mrf.mxu0
      %v1309 = vadd.f32 %v1212, %v1308
      %v1310 = vpop.f32.mrf.mxu0
      %1311 = vmatprep.mubr.bf16.mxu0 0
      %1312 = vmatmul.mubr.bf16.gmra.mxu0 %v967
      %v1313 = vpop.f32.mrf.mxu0
      %v1314 = vadd.f32 %v1217, %v1313
      %v1315 = vpop.f32.mrf.mxu0
      %v1316 = vpop.f32.mrf.mxu0
      %v1317 = vadd.f32 %v1220, %v1316
      %v1318 = vpop.f32.mrf.mxu0
      %1319 = vmatprep.mubr.bf16.mxu0 0
      %1320 = vmatmul.mubr.bf16.gmra.mxu0 %v970
      %v1321 = vpop.f32.mrf.mxu0
      %v1322 = vadd.f32 %v1225, %v1321
      %v1323 = vpop.f32.mrf.mxu0
      %v1324 = vpop.f32.mrf.mxu0
      %v1325 = vadd.f32 %v1228, %v1324
      %v1326 = vpop.f32.mrf.mxu0
      %1327 = vmatprep.mubr.bf16.mxu0 0
      %1328 = vmatmul.mubr.bf16.gmra.mxu0 %v973
      %v1329 = vpop.f32.mrf.mxu0
      %v1330 = vadd.f32 %v1233, %v1329
      %v1331 = vpop.f32.mrf.mxu0
      %v1332 = vpop.f32.mrf.mxu0
      %v1333 = vadd.f32 %v1236, %v1332
      %v1334 = vpop.f32.mrf.mxu0
      %1335 = vdwg.mxu0
      %s1336 = sadd.s32 %s231, 16
      %s1337 = sshra.s32 %s1336, 3
      %s1338 = sand.u32 %s1336, 7
      %s1339 = smul.u32 %s1337, 3
      %s1340 = smul.addr %s1339, 4
      %s1341 = scalar_lea.vmem %s209, %s1340
      %v1342 = vld [vmem:[%s1341] sm:$0xff]
      %v1343 = vld [vmem:[%s1341 + $0x8] sm:$0xf]
      %v1344 = vld [vmem:[%s1341 + $0xc] sm:$0xff]
      %v1345 = vld [vmem:[%s1341 + $0x14] sm:$0xf]
      %v1346 = vld [vmem:[%s1341 + $0x18] sm:$0xff]
      %v1347 = vld [vmem:[%s1341 + $0x20] sm:$0xf]
      %v1348 = vld [vmem:[%s1341 + $0x24] sm:$0xff]
      %v1349 = vld [vmem:[%s1341 + $0x2c] sm:$0xf]
      %v1350 = vld [vmem:[%s1341 + $0x30] sm:$0xff]
      %v1351 = vld [vmem:[%s1341 + $0x38] sm:$0xf]
      %v1352 = vld [vmem:[%s1341 + $0x3c] sm:$0xff]
      %v1353 = vld [vmem:[%s1341 + $0x44] sm:$0xf]
      %v1354 = vld [vmem:[%s1341 + $0x48] sm:$0xff]
      %v1355 = vld [vmem:[%s1341 + $0x50] sm:$0xf]
      %v1356 = vld [vmem:[%s1341 + $0x54] sm:$0xff]
      %v1357 = vld [vmem:[%s1341 + $0x5c] sm:$0xf]
      %v1358 = vld [vmem:[%s1341 + $0x60] sm:$0xff]
      %v1359 = vld [vmem:[%s1341 + $0x68] sm:$0xf]
      %v1360 = vld [vmem:[%s1341 + $0x6c] sm:$0xff]
      %v1361 = vld [vmem:[%s1341 + $0x74] sm:$0xf]
      %v1362 = vld [vmem:[%s1341 + $0x78] sm:$0xff]
      %v1363 = vld [vmem:[%s1341 + $0x80] sm:$0xf]
      %v1364 = vld [vmem:[%s1341 + $0x84] sm:$0xff]
      %v1365 = vld [vmem:[%s1341 + $0x8c] sm:$0xf]
      %v1366 = vld [vmem:[%s1341 + $0x90] sm:$0xff]
      %v1367 = vld [vmem:[%s1341 + $0x98] sm:$0xf]
      %v1368 = vld [vmem:[%s1341 + $0x9c] sm:$0xff]
      %v1369 = vld [vmem:[%s1341 + $0xa4] sm:$0xf]
      %v1370 = vld [vmem:[%s1341 + $0xa8] sm:$0xff]
      %v1371 = vld [vmem:[%s1341 + $0xb0] sm:$0xf]
      %v1372 = vld [vmem:[%s1341 + $0xb4] sm:$0xff]
      %v1373 = vld [vmem:[%s1341 + $0xbc] sm:$0xf]
      %s1374 = scalar_lea.vmem %s1, 384
      %v1375 = vld [vmem:[%s1374] sm:$0xf]
      %v1376 = vld [vmem:[%s1374 + $0x4] sm:$0xf]
      %v1377 = vld [vmem:[%s1374 + $0x8] sm:$0xf]
      %v1378 = vld [vmem:[%s1374 + $0xc] sm:$0xf]
      %v1379 = vld [vmem:[%s1374 + $0x10] sm:$0xf]
      %v1380 = vld [vmem:[%s1374 + $0x14] sm:$0xf]
      %v1381 = vld [vmem:[%s1374 + $0x18] sm:$0xf]
      %v1382 = vld [vmem:[%s1374 + $0x1c] sm:$0xf]
      %v1383 = vld [vmem:[%s1374 + $0x20] sm:$0xf]
      %v1384 = vld [vmem:[%s1374 + $0x24] sm:$0xf]
      %v1385 = vld [vmem:[%s1374 + $0x28] sm:$0xf]
      %v1386 = vld [vmem:[%s1374 + $0x2c] sm:$0xf]
      %v1387 = vld [vmem:[%s1374 + $0x30] sm:$0xf]
      %v1388 = vld [vmem:[%s1374 + $0x34] sm:$0xf]
      %v1389 = vld [vmem:[%s1374 + $0x38] sm:$0xf]
      %v1390 = vld [vmem:[%s1374 + $0x3c] sm:$0xf]
      %v1391 = vld [vmem:[%s1374 + $0x40] sm:$0xf]
      %v1392 = vld [vmem:[%s1374 + $0x44] sm:$0xf]
      %v1393 = vld [vmem:[%s1374 + $0x48] sm:$0xf]
      %v1394 = vld [vmem:[%s1374 + $0x4c] sm:$0xf]
      %v1395 = vld [vmem:[%s1374 + $0x50] sm:$0xf]
      %v1396 = vld [vmem:[%s1374 + $0x54] sm:$0xf]
      %v1397 = vld [vmem:[%s1374 + $0x58] sm:$0xf]
      %v1398 = vld [vmem:[%s1374 + $0x5c] sm:$0xf]
      %v1399 = vld [vmem:[%s1374 + $0x60] sm:$0xf]
      %v1400 = vld [vmem:[%s1374 + $0x64] sm:$0xf]
      %v1401 = vld [vmem:[%s1374 + $0x68] sm:$0xf]
      %v1402 = vld [vmem:[%s1374 + $0x6c] sm:$0xf]
      %v1403 = vld [vmem:[%s1374 + $0x70] sm:$0xf]
      %v1404 = vld [vmem:[%s1374 + $0x74] sm:$0xf]
      %v1405 = vld [vmem:[%s1374 + $0x78] sm:$0xf]
      %v1406 = vld [vmem:[%s1374 + $0x7c] sm:$0xf]
      %v1407 = vld [vmem:[%s1374 + $0x80] sm:$0xf]
      %v1408 = vld [vmem:[%s1374 + $0x84] sm:$0xf]
      %v1409 = vld [vmem:[%s1374 + $0x88] sm:$0xf]
      %v1410 = vld [vmem:[%s1374 + $0x8c] sm:$0xf]
      %v1411 = vld [vmem:[%s1374 + $0x90] sm:$0xf]
      %v1412 = vld [vmem:[%s1374 + $0x94] sm:$0xf]
      %v1413 = vld [vmem:[%s1374 + $0x98] sm:$0xf]
      %v1414 = vld [vmem:[%s1374 + $0x9c] sm:$0xf]
      %v1415 = vld [vmem:[%s1374 + $0xa0] sm:$0xf]
      %v1416 = vld [vmem:[%s1374 + $0xa4] sm:$0xf]
      %v1417 = vld [vmem:[%s1374 + $0xa8] sm:$0xf]
      %v1418 = vld [vmem:[%s1374 + $0xac] sm:$0xf]
      %v1419 = vld [vmem:[%s1374 + $0xb0] sm:$0xf]
      %v1420 = vld [vmem:[%s1374 + $0xb4] sm:$0xf]
      %v1421 = vld [vmem:[%s1374 + $0xb8] sm:$0xf]
      %v1422 = vld [vmem:[%s1374 + $0xbc] sm:$0xf]
      %v1455 = vunpack.c.l.b16 %v1342
      %v1456 = vunpack.c.h.b16 %v1342
      %v1457 = vunpack.c.l.b16 %v1343
      %v1458 = vunpack.c.l.b16 %v1344
      %v1459 = vunpack.c.h.b16 %v1344
      %v1460 = vunpack.c.l.b16 %v1345
      %v1461 = vunpack.c.l.b16 %v1346
      %v1462 = vunpack.c.h.b16 %v1346
      %v1463 = vunpack.c.l.b16 %v1347
      %v1464 = vunpack.c.l.b16 %v1348
      %v1465 = vunpack.c.h.b16 %v1348
      %v1466 = vunpack.c.l.b16 %v1349
      %v1467 = vunpack.c.l.b16 %v1350
      %v1468 = vunpack.c.h.b16 %v1350
      %v1469 = vunpack.c.l.b16 %v1351
      %v1470 = vunpack.c.l.b16 %v1352
      %v1471 = vunpack.c.h.b16 %v1352
      %v1472 = vunpack.c.l.b16 %v1353
      %v1473 = vunpack.c.l.b16 %v1354
      %v1474 = vunpack.c.h.b16 %v1354
      %v1475 = vunpack.c.l.b16 %v1355
      %v1476 = vunpack.c.l.b16 %v1356
      %v1477 = vunpack.c.h.b16 %v1356
      %v1478 = vunpack.c.l.b16 %v1357
      %v1479 = vunpack.c.l.b16 %v1358
      %v1480 = vunpack.c.h.b16 %v1358
      %v1481 = vunpack.c.l.b16 %v1359
      %v1482 = vunpack.c.l.b16 %v1360
      %v1483 = vunpack.c.h.b16 %v1360
      %v1484 = vunpack.c.l.b16 %v1361
      %v1485 = vunpack.c.l.b16 %v1362
      %v1486 = vunpack.c.h.b16 %v1362
      %v1487 = vunpack.c.l.b16 %v1363
      %v1488 = vunpack.c.l.b16 %v1364
      %v1489 = vunpack.c.h.b16 %v1364
      %v1490 = vunpack.c.l.b16 %v1365
      %v1491 = vunpack.c.l.b16 %v1366
      %v1492 = vunpack.c.h.b16 %v1366
      %v1493 = vunpack.c.l.b16 %v1367
      %v1494 = vunpack.c.l.b16 %v1368
      %v1495 = vunpack.c.h.b16 %v1368
      %v1496 = vunpack.c.l.b16 %v1369
      %v1497 = vunpack.c.l.b16 %v1370
      %v1498 = vunpack.c.h.b16 %v1370
      %v1499 = vunpack.c.l.b16 %v1371
      %v1500 = vunpack.c.l.b16 %v1372
      %v1501 = vunpack.c.h.b16 %v1372
      %v1502 = vunpack.c.l.b16 %v1373
      %v1503 = vpack.c.b16 %v1458, %v1455
      %v1504 = vpack.c.b16 %v1459, %v1456
      %v1505 = vpack.c.b16 %v1460, %v1457
      %v1506 = vpack.c.b16 %v1464, %v1461
      %v1507 = vpack.c.b16 %v1465, %v1462
      %v1508 = vpack.c.b16 %v1466, %v1463
      %v1509 = vpack.c.b16 %v1470, %v1467
      %v1510 = vpack.c.b16 %v1471, %v1468
      %v1511 = vpack.c.b16 %v1472, %v1469
      %v1512 = vpack.c.b16 %v1476, %v1473
      %v1513 = vpack.c.b16 %v1477, %v1474
      %v1514 = vpack.c.b16 %v1478, %v1475
      %v1515 = vpack.c.b16 %v1482, %v1479
      %v1516 = vpack.c.b16 %v1483, %v1480
      %v1517 = vpack.c.b16 %v1484, %v1481
      %v1518 = vpack.c.b16 %v1488, %v1485
      %v1519 = vpack.c.b16 %v1489, %v1486
      %v1520 = vpack.c.b16 %v1490, %v1487
      %v1521 = vpack.c.b16 %v1494, %v1491
      %v1522 = vpack.c.b16 %v1495, %v1492
      %v1523 = vpack.c.b16 %v1496, %v1493
      %v1524 = vpack.c.b16 %v1500, %v1497
      %v1525 = vpack.c.b16 %v1501, %v1498
      %v1526 = vpack.c.b16 %v1502, %v1499
      %v1599 = vunpack.c.l.b16 %v1375
      %v1600 = vunpack.c.l.b16 %v1376
      %v1601 = vunpack.c.l.b16 %v1377
      %v1602 = vunpack.c.l.b16 %v1378
      %v1603 = vunpack.c.l.b16 %v1379
      %v1604 = vunpack.c.l.b16 %v1380
      %v1605 = vunpack.c.l.b16 %v1381
      %v1606 = vunpack.c.l.b16 %v1382
      %v1607 = vunpack.c.l.b16 %v1383
      %v1608 = vunpack.c.l.b16 %v1384
      %v1609 = vunpack.c.l.b16 %v1385
      %v1610 = vunpack.c.l.b16 %v1386
      %v1611 = vunpack.c.l.b16 %v1387
      %v1612 = vunpack.c.l.b16 %v1388
      %v1613 = vunpack.c.l.b16 %v1389
      %v1614 = vunpack.c.l.b16 %v1390
      %v1615 = vunpack.c.l.b16 %v1391
      %v1616 = vunpack.c.l.b16 %v1392
      %v1617 = vunpack.c.l.b16 %v1393
      %v1618 = vunpack.c.l.b16 %v1394
      %v1619 = vunpack.c.l.b16 %v1395
      %v1620 = vunpack.c.l.b16 %v1396
      %v1621 = vunpack.c.l.b16 %v1397
      %v1622 = vunpack.c.l.b16 %v1398
      %v1623 = vunpack.c.l.b16 %v1399
      %v1624 = vunpack.c.l.b16 %v1400
      %v1625 = vunpack.c.l.b16 %v1401
      %v1626 = vunpack.c.l.b16 %v1402
      %v1627 = vunpack.c.l.b16 %v1403
      %v1628 = vunpack.c.l.b16 %v1404
      %v1629 = vunpack.c.l.b16 %v1405
      %v1630 = vunpack.c.l.b16 %v1406
      %v1631 = vunpack.c.l.b16 %v1407
      %v1632 = vunpack.c.l.b16 %v1408
      %v1633 = vunpack.c.l.b16 %v1409
      %v1634 = vunpack.c.l.b16 %v1410
      %v1635 = vunpack.c.l.b16 %v1411
      %v1636 = vunpack.c.l.b16 %v1412
      %v1637 = vunpack.c.l.b16 %v1413
      %v1638 = vunpack.c.l.b16 %v1414
      %v1639 = vunpack.c.l.b16 %v1415
      %v1640 = vunpack.c.l.b16 %v1416
      %v1641 = vunpack.c.l.b16 %v1417
      %v1642 = vunpack.c.l.b16 %v1418
      %v1643 = vunpack.c.l.b16 %v1419
      %v1644 = vunpack.c.l.b16 %v1420
      %v1645 = vunpack.c.l.b16 %v1421
      %v1646 = vunpack.c.l.b16 %v1422
      %v1647 = vpack.c.b16 %v1600, %v1599
      %v1648 = vpack.c.b16 %v1602, %v1601
      %v1649 = vpack.c.b16 %v1604, %v1603
      %v1650 = vpack.c.b16 %v1606, %v1605
      %v1651 = vpack.c.b16 %v1608, %v1607
      %v1652 = vpack.c.b16 %v1610, %v1609
      %v1653 = vpack.c.b16 %v1612, %v1611
      %v1654 = vpack.c.b16 %v1614, %v1613
      %v1655 = vpack.c.b16 %v1616, %v1615
      %v1656 = vpack.c.b16 %v1618, %v1617
      %v1657 = vpack.c.b16 %v1620, %v1619
      %v1658 = vpack.c.b16 %v1622, %v1621
      %v1659 = vpack.c.b16 %v1624, %v1623
      %v1660 = vpack.c.b16 %v1626, %v1625
      %v1661 = vpack.c.b16 %v1628, %v1627
      %v1662 = vpack.c.b16 %v1630, %v1629
      %v1663 = vpack.c.b16 %v1632, %v1631
      %v1664 = vpack.c.b16 %v1634, %v1633
      %v1665 = vpack.c.b16 %v1636, %v1635
      %v1666 = vpack.c.b16 %v1638, %v1637
      %v1667 = vpack.c.b16 %v1640, %v1639
      %v1668 = vpack.c.b16 %v1642, %v1641
      %v1669 = vpack.c.b16 %v1644, %v1643
      %v1670 = vpack.c.b16 %v1646, %v1645
      %1695 = vmatprep.subr.bf16.mxu0 0
      %1696 = vmatpush1.bf16.msra.mxu0 %v1654
      %1697 = vmatprep.subr.bf16.mxu0 0
      %1698 = vmatpush1.bf16.msra.mxu0 %v1653
      %1699 = vmatprep.subr.bf16.mxu0 0
      %1700 = vmatpush1.bf16.msra.mxu0 %v1652
      %1701 = vmatprep.subr.bf16.mxu0 0
      %1702 = vmatpush1.bf16.msra.mxu0 %v1651
      %1703 = vmatprep.subr.bf16.mxu0 0
      %1704 = vmatpush1.bf16.msra.mxu0 %v1650
      %1705 = vmatprep.subr.bf16.mxu0 0
      %1706 = vmatpush1.bf16.msra.mxu0 %v1649
      %1707 = vmatprep.subr.bf16.mxu0 0
      %1708 = vmatpush1.bf16.msra.mxu0 %v1648
      %1709 = vmatprep.subr.bf16.mxu0 0
      %1710 = vmatpush1.bf16.msra.mxu0 %v1647
      %1711 = vmatprep.subr.bf16.mxu0 0
      %1712 = vmatpush2.bf16.msra.mxu0 %v1662
      %1713 = vmatprep.subr.bf16.mxu0 0
      %1714 = vmatpush2.bf16.msra.mxu0 %v1661
      %1715 = vmatprep.subr.bf16.mxu0 0
      %1716 = vmatpush2.bf16.msra.mxu0 %v1660
      %1717 = vmatprep.subr.bf16.mxu0 0
      %1718 = vmatpush2.bf16.msra.mxu0 %v1659
      %1719 = vmatprep.subr.bf16.mxu0 0
      %1720 = vmatpush2.bf16.msra.mxu0 %v1658
      %1721 = vmatprep.subr.bf16.mxu0 0
      %1722 = vmatpush2.bf16.msra.mxu0 %v1657
      %1723 = vmatprep.subr.bf16.mxu0 0
      %1724 = vmatpush2.bf16.msra.mxu0 %v1656
      %1725 = vmatprep.subr.bf16.mxu0 0
      %1726 = vmatpush2.bf16.msra.mxu0 %v1655
      %1727 = vmatprep.mubr.bf16.mxu0 %v1504
      %1728 = vmatmul.mubr.bf16.gmra.mxu0 %v1503
      %v1729 = vpop.f32.mrf.mxu0
      %v1730 = vadd.f32 0.0, %v1729
      %v1731 = vpop.f32.mrf.mxu0
      %v1732 = vpop.f32.mrf.mxu0
      %v1733 = vadd.f32 0.0, %v1732
      %v1734 = vpop.f32.mrf.mxu0
      %1735 = vmatprep.mubr.bf16.mxu0 %v1507
      %1736 = vmatmul.mubr.bf16.gmra.mxu0 %v1506
      %v1737 = vpop.f32.mrf.mxu0
      %v1738 = vadd.f32 0.0, %v1737
      %v1739 = vpop.f32.mrf.mxu0
      %v1740 = vpop.f32.mrf.mxu0
      %v1741 = vadd.f32 0.0, %v1740
      %v1742 = vpop.f32.mrf.mxu0
      %1743 = vmatprep.mubr.bf16.mxu0 %v1510
      %1744 = vmatmul.mubr.bf16.gmra.mxu0 %v1509
      %v1745 = vpop.f32.mrf.mxu0
      %v1746 = vadd.f32 0.0, %v1745
      %v1747 = vpop.f32.mrf.mxu0
      %v1748 = vpop.f32.mrf.mxu0
      %v1749 = vadd.f32 0.0, %v1748
      %v1750 = vpop.f32.mrf.mxu0
      %1751 = vmatprep.mubr.bf16.mxu0 %v1513
      %1752 = vmatmul.mubr.bf16.gmra.mxu0 %v1512
      %v1753 = vpop.f32.mrf.mxu0
      %v1754 = vadd.f32 0.0, %v1753
      %v1755 = vpop.f32.mrf.mxu0
      %v1756 = vpop.f32.mrf.mxu0
      %v1757 = vadd.f32 0.0, %v1756
      %v1758 = vpop.f32.mrf.mxu0
      %1759 = vmatprep.mubr.bf16.mxu0 %v1516
      %1760 = vmatmul.mubr.bf16.gmra.mxu0 %v1515
      %v1761 = vpop.f32.mrf.mxu0
      %v1762 = vadd.f32 0.0, %v1761
      %v1763 = vpop.f32.mrf.mxu0
      %v1764 = vpop.f32.mrf.mxu0
      %v1765 = vadd.f32 0.0, %v1764
      %v1766 = vpop.f32.mrf.mxu0
      %1767 = vmatprep.mubr.bf16.mxu0 %v1519
      %1768 = vmatmul.mubr.bf16.gmra.mxu0 %v1518
      %v1769 = vpop.f32.mrf.mxu0
      %v1770 = vadd.f32 0.0, %v1769
      %v1771 = vpop.f32.mrf.mxu0
      %v1772 = vpop.f32.mrf.mxu0
      %v1773 = vadd.f32 0.0, %v1772
      %v1774 = vpop.f32.mrf.mxu0
      %1775 = vmatprep.mubr.bf16.mxu0 %v1522
      %1776 = vmatmul.mubr.bf16.gmra.mxu0 %v1521
      %v1777 = vpop.f32.mrf.mxu0
      %v1778 = vadd.f32 0.0, %v1777
      %v1779 = vpop.f32.mrf.mxu0
      %v1780 = vpop.f32.mrf.mxu0
      %v1781 = vadd.f32 0.0, %v1780
      %v1782 = vpop.f32.mrf.mxu0
      %1783 = vmatprep.mubr.bf16.mxu0 %v1525
      %1784 = vmatmul.mubr.bf16.gmra.mxu0 %v1524
      %v1785 = vpop.f32.mrf.mxu0
      %v1786 = vadd.f32 0.0, %v1785
      %v1787 = vpop.f32.mrf.mxu0
      %v1788 = vpop.f32.mrf.mxu0
      %v1789 = vadd.f32 0.0, %v1788
      %v1790 = vpop.f32.mrf.mxu0
      %1791 = vdwg.mxu0
      %1792 = vmatprep.subr.bf16.mxu0 0
      %1793 = vmatpush1.bf16.msra.mxu0 %v1670
      %1794 = vmatprep.subr.bf16.mxu0 0
      %1795 = vmatpush1.bf16.msra.mxu0 %v1669
      %1796 = vmatprep.subr.bf16.mxu0 0
      %1797 = vmatpush1.bf16.msra.mxu0 %v1668
      %1798 = vmatprep.subr.bf16.mxu0 0
      %1799 = vmatpush1.bf16.msra.mxu0 %v1667
      %1800 = vmatprep.subr.bf16.mxu0 0
      %1801 = vmatpush1.bf16.msra.mxu0 %v1666
      %1802 = vmatprep.subr.bf16.mxu0 0
      %1803 = vmatpush1.bf16.msra.mxu0 %v1665
      %1804 = vmatprep.subr.bf16.mxu0 0
      %1805 = vmatpush1.bf16.msra.mxu0 %v1664
      %1806 = vmatprep.subr.bf16.mxu0 0
      %1807 = vmatpush1.bf16.msra.mxu0 %v1663
      %1808 = vmatprep.subr.bf16.mxu0 0
      %1809 = vmatpush2.bf16.msra.mxu0 0
      %1810 = vmatprep.subr.bf16.mxu0 0
      %1811 = vmatpush2.bf16.msra.mxu0 0
      %1812 = vmatprep.subr.bf16.mxu0 0
      %1813 = vmatpush2.bf16.msra.mxu0 0
      %1814 = vmatprep.subr.bf16.mxu0 0
      %1815 = vmatpush2.bf16.msra.mxu0 0
      %1816 = vmatprep.subr.bf16.mxu0 0
      %1817 = vmatpush2.bf16.msra.mxu0 0
      %1818 = vmatprep.subr.bf16.mxu0 0
      %1819 = vmatpush2.bf16.msra.mxu0 0
      %1820 = vmatprep.subr.bf16.mxu0 0
      %1821 = vmatpush2.bf16.msra.mxu0 0
      %1822 = vmatprep.subr.bf16.mxu0 0
      %1823 = vmatpush2.bf16.msra.mxu0 0
      %1824 = vmatprep.mubr.bf16.mxu0 0
      %1825 = vmatmul.mubr.bf16.gmra.mxu0 %v1505
      %v1826 = vpop.f32.mrf.mxu0
      %v1827 = vadd.f32 %v1730, %v1826
      %v1828 = vpop.f32.mrf.mxu0
      %v1829 = vpop.f32.mrf.mxu0
      %v1830 = vadd.f32 %v1733, %v1829
      %v1831 = vpop.f32.mrf.mxu0
      %1832 = vmatprep.mubr.bf16.mxu0 0
      %1833 = vmatmul.mubr.bf16.gmra.mxu0 %v1508
      %v1834 = vpop.f32.mrf.mxu0
      %v1835 = vadd.f32 %v1738, %v1834
      %v1836 = vpop.f32.mrf.mxu0
      %v1837 = vpop.f32.mrf.mxu0
      %v1838 = vadd.f32 %v1741, %v1837
      %v1839 = vpop.f32.mrf.mxu0
      %1840 = vmatprep.mubr.bf16.mxu0 0
      %1841 = vmatmul.mubr.bf16.gmra.mxu0 %v1511
      %v1842 = vpop.f32.mrf.mxu0
      %v1843 = vadd.f32 %v1746, %v1842
      %v1844 = vpop.f32.mrf.mxu0
      %v1845 = vpop.f32.mrf.mxu0
      %v1846 = vadd.f32 %v1749, %v1845
      %v1847 = vpop.f32.mrf.mxu0
      %1848 = vmatprep.mubr.bf16.mxu0 0
      %1849 = vmatmul.mubr.bf16.gmra.mxu0 %v1514
      %v1850 = vpop.f32.mrf.mxu0
      %v1851 = vadd.f32 %v1754, %v1850
      %v1852 = vpop.f32.mrf.mxu0
      %v1853 = vpop.f32.mrf.mxu0
      %v1854 = vadd.f32 %v1757, %v1853
      %v1855 = vpop.f32.mrf.mxu0
      %1856 = vmatprep.mubr.bf16.mxu0 0
      %1857 = vmatmul.mubr.bf16.gmra.mxu0 %v1517
      %v1858 = vpop.f32.mrf.mxu0
      %v1859 = vadd.f32 %v1762, %v1858
      %v1860 = vpop.f32.mrf.mxu0
      %v1861 = vpop.f32.mrf.mxu0
      %v1862 = vadd.f32 %v1765, %v1861
      %v1863 = vpop.f32.mrf.mxu0
      %1864 = vmatprep.mubr.bf16.mxu0 0
      %1865 = vmatmul.mubr.bf16.gmra.mxu0 %v1520
      %v1866 = vpop.f32.mrf.mxu0
      %v1867 = vadd.f32 %v1770, %v1866
      %v1868 = vpop.f32.mrf.mxu0
      %v1869 = vpop.f32.mrf.mxu0
      %v1870 = vadd.f32 %v1773, %v1869
      %v1871 = vpop.f32.mrf.mxu0
      %1872 = vmatprep.mubr.bf16.mxu0 0
      %1873 = vmatmul.mubr.bf16.gmra.mxu0 %v1523
      %v1874 = vpop.f32.mrf.mxu0
      %v1875 = vadd.f32 %v1778, %v1874
      %v1876 = vpop.f32.mrf.mxu0
      %v1877 = vpop.f32.mrf.mxu0
      %v1878 = vadd.f32 %v1781, %v1877
      %v1879 = vpop.f32.mrf.mxu0
      %1880 = vmatprep.mubr.bf16.mxu0 0
      %1881 = vmatmul.mubr.bf16.gmra.mxu0 %v1526
      %v1882 = vpop.f32.mrf.mxu0
      %v1883 = vadd.f32 %v1786, %v1882
      %v1884 = vpop.f32.mrf.mxu0
      %v1885 = vpop.f32.mrf.mxu0
      %v1886 = vadd.f32 %v1789, %v1885
      %v1887 = vpop.f32.mrf.mxu0
      %1888 = vdwg.mxu0
      %v1889 = vadd.f32 %v1274, %v1827
      %v1890 = vadd.f32 %v1277, %v1830
      %v1891 = vadd.f32 %v1282, %v1835
      %v1892 = vadd.f32 %v1285, %v1838
      %v1893 = vadd.f32 %v1290, %v1843
      %v1894 = vadd.f32 %v1293, %v1846
      %v1895 = vadd.f32 %v1298, %v1851
      %v1896 = vadd.f32 %v1301, %v1854
      %v1897 = vadd.f32 %v1306, %v1859
      %v1898 = vadd.f32 %v1309, %v1862
      %v1899 = vadd.f32 %v1314, %v1867
      %v1900 = vadd.f32 %v1317, %v1870
      %v1901 = vadd.f32 %v1322, %v1875
      %v1902 = vadd.f32 %v1325, %v1878
      %v1903 = vadd.f32 %v1330, %v1883
      %v1904 = vadd.f32 %v1333, %v1886
      %v1905 = vld [vmem:[%s218] sm:$0xf]
      %v1906 = vld [vmem:[%s218 + $0x4] sm:$0xf]
      %v1907 = vld [vmem:[%s218 + $0x8] sm:$0xf]
      %v1908 = vld [vmem:[%s218 + $0xc] sm:$0xf]
      %v1909 = vld [vmem:[%s218 + $0x10] sm:$0xf]
      %v1910 = vld [vmem:[%s218 + $0x14] sm:$0xf]
      %v1911 = vld [vmem:[%s218 + $0x18] sm:$0xf]
      %v1912 = vld [vmem:[%s218 + $0x1c] sm:$0xf]
      %v1913 = vld [vmem:[%s218 + $0x20] sm:$0xf]
      %v1914 = vld [vmem:[%s218 + $0x24] sm:$0xf]
      %v1915 = vld [vmem:[%s218 + $0x28] sm:$0xf]
      %v1916 = vld [vmem:[%s218 + $0x2c] sm:$0xf]
      %v1917 = vld [vmem:[%s218 + $0x30] sm:$0xf]
      %v1918 = vld [vmem:[%s218 + $0x34] sm:$0xf]
      %v1919 = vld [vmem:[%s218 + $0x38] sm:$0xf]
      %v1920 = vld [vmem:[%s218 + $0x3c] sm:$0xf]
      %v1921 = vunpack.c.l.bf16 %v1905
      %v1922 = vunpack.c.l.bf16 %v1906
      %v1923 = vunpack.c.l.bf16 %v1907
      %v1924 = vunpack.c.l.bf16 %v1908
      %v1925 = vunpack.c.l.bf16 %v1909
      %v1926 = vunpack.c.l.bf16 %v1910
      %v1927 = vunpack.c.l.bf16 %v1911
      %v1928 = vunpack.c.l.bf16 %v1912
      %v1929 = vunpack.c.l.bf16 %v1913
      %v1930 = vunpack.c.l.bf16 %v1914
      %v1931 = vunpack.c.l.bf16 %v1915
      %v1932 = vunpack.c.l.bf16 %v1916
      %v1933 = vunpack.c.l.bf16 %v1917
      %v1934 = vunpack.c.l.bf16 %v1918
      %v1935 = vunpack.c.l.bf16 %v1919
      %v1936 = vunpack.c.l.bf16 %v1920
      %v1937 = vadd.f32 %v1889, %v1921
      %v1938 = vadd.f32 %v1890, %v1922
      %v1939 = vadd.f32 %v1891, %v1923
      %v1940 = vadd.f32 %v1892, %v1924
      %v1941 = vadd.f32 %v1893, %v1925
      %v1942 = vadd.f32 %v1894, %v1926
      %v1943 = vadd.f32 %v1895, %v1927
      %v1944 = vadd.f32 %v1896, %v1928
      %v1945 = vadd.f32 %v1897, %v1929
      %v1946 = vadd.f32 %v1898, %v1930
      %v1947 = vadd.f32 %v1899, %v1931
      %v1948 = vadd.f32 %v1900, %v1932
      %v1949 = vadd.f32 %v1901, %v1933
      %v1950 = vadd.f32 %v1902, %v1934
      %v1951 = vadd.f32 %v1903, %v1935
      %v1952 = vadd.f32 %v1904, %v1936
      %v1953 = vpack.c.bf16 %v1938, %v1937
      %v1954 = vpack.c.bf16 %v1940, %v1939
      %v1955 = vpack.c.bf16 %v1942, %v1941
      %v1956 = vpack.c.bf16 %v1944, %v1943
      %v1957 = vpack.c.bf16 %v1946, %v1945
      %v1958 = vpack.c.bf16 %v1948, %v1947
      %v1959 = vpack.c.bf16 %v1950, %v1949
      %v1960 = vpack.c.bf16 %v1952, %v1951
      %v1969 = vunpack.c.l.b16 %v1953
      %v1970 = vunpack.c.h.b16 %v1953
      %v1971 = vunpack.c.l.b16 %v1954
      %v1972 = vunpack.c.h.b16 %v1954
      %v1973 = vunpack.c.l.b16 %v1955
      %v1974 = vunpack.c.h.b16 %v1955
      %v1975 = vunpack.c.l.b16 %v1956
      %v1976 = vunpack.c.h.b16 %v1956
      %v1977 = vunpack.c.l.b16 %v1957
      %v1978 = vunpack.c.h.b16 %v1957
      %v1979 = vunpack.c.l.b16 %v1958
      %v1980 = vunpack.c.h.b16 %v1958
      %v1981 = vunpack.c.l.b16 %v1959
      %v1982 = vunpack.c.h.b16 %v1959
      %v1983 = vunpack.c.l.b16 %v1960
      %v1984 = vunpack.c.h.b16 %v1960
      %v1985 = vpack.c.b16 %v1969, %v1969
      %v1986 = vpack.c.b16 %v1970, %v1970
      %v1987 = vpack.c.b16 %v1971, %v1971
      %v1988 = vpack.c.b16 %v1972, %v1972
      %v1989 = vpack.c.b16 %v1973, %v1973
      %v1990 = vpack.c.b16 %v1974, %v1974
      %v1991 = vpack.c.b16 %v1975, %v1975
      %v1992 = vpack.c.b16 %v1976, %v1976
      %v1993 = vpack.c.b16 %v1977, %v1977
      %v1994 = vpack.c.b16 %v1978, %v1978
      %v1995 = vpack.c.b16 %v1979, %v1979
      %v1996 = vpack.c.b16 %v1980, %v1980
      %v1997 = vpack.c.b16 %v1981, %v1981
      %v1998 = vpack.c.b16 %v1982, %v1982
      %v1999 = vpack.c.b16 %v1983, %v1983
      %v2000 = vpack.c.b16 %v1984, %v1984
      %2017 = vst [vmem:[%s228] sm:$0xf] %v1985
      %2018 = vst [vmem:[%s228 + $0x4] sm:$0xf] %v1986
      %2019 = vst [vmem:[%s228 + $0x8] sm:$0xf] %v1987
      %2020 = vst [vmem:[%s228 + $0xc] sm:$0xf] %v1988
      %2021 = vst [vmem:[%s228 + $0x10] sm:$0xf] %v1989
      %2022 = vst [vmem:[%s228 + $0x14] sm:$0xf] %v1990
      %2023 = vst [vmem:[%s228 + $0x18] sm:$0xf] %v1991
      %2024 = vst [vmem:[%s228 + $0x1c] sm:$0xf] %v1992
      %2025 = vst [vmem:[%s228 + $0x20] sm:$0xf] %v1993
      %2026 = vst [vmem:[%s228 + $0x24] sm:$0xf] %v1994
      %2027 = vst [vmem:[%s228 + $0x28] sm:$0xf] %v1995
      %2028 = vst [vmem:[%s228 + $0x2c] sm:$0xf] %v1996
      %2029 = vst [vmem:[%s228 + $0x30] sm:$0xf] %v1997
      %2030 = vst [vmem:[%s228 + $0x34] sm:$0xf] %v1998
      %2031 = vst [vmem:[%s228 + $0x38] sm:$0xf] %v1999
      %2032 = vst [vmem:[%s228 + $0x3c] sm:$0xf] %v2000
      %s2033 = smul.u32 16, %s19
      %p2034 = scmp.lt.s32.totalorder %s18, 1
      %s2035 = scalar_select %p2034, %s18, 1
      %p2036 = scmp.lt.s32.totalorder %s2033, 15
      %s2037 = scalar_select %p2036, %s2033, 15
      %s2038 = smul.addr %s2035, 16
      %s2039 = sadd.s32 %s2037, %s2038
      %s2040 = smul.addr %s2039, 4
      %s2041 = scalar_lea.vmem %s3, %s2040
      // Predicated region
      $region33: #{_lambda_.5} parent=31 // pred_check
        %p2042 = pneg %p121
      $region34: #{_lambda_.5} parent=31 // pred_check_branch
        %2044 = sbr.rel (%p2042) target = $region36
      $region35: #{_lambda_.5} parent=31 // pred_region
        %s2045 = smul.u32 16, %s19
      $region36: #{_lambda_.5} parent=31 // pred_fallthru
        _
    $region32: #{_lambda_.5} parent=5 // pred_fallthru
      _
    %p2046 = scmp.le.s32.totalorder 2, %s9
    // Predicated region
    $region37: #{_lambda_.5} parent=5 // pred_check
      %p2047 = pneg %p2046
    $region38: #{_lambda_.5} parent=5 // pred_check_branch
      %2049 = sbr.rel (%p2047) target = $region40
    $region39: #{_lambda_.5} parent=5 // pred_region
      %s2050 = ssub.s32 %s9, 2
      // Predicated region
      $region41: #{_lambda_.5} parent=39 // pred_check
        %p2051 = pneg %p127
      $region42: #{_lambda_.5} parent=39 // pred_check_branch
        %2053 = sbr.rel (%p2051) target = $region44
      $region43: #{_lambda_.5} parent=39 // pred_region
        %s2054 = smul.u32 16, %s21
        %p2055 = scmp.lt.s32.totalorder %s20, 1
        %s2056 = scalar_select %p2055, %s20, 1
        %p2057 = scmp.lt.s32.totalorder %s2054, 15
        %s2058 = scalar_select %p2057, %s2054, 15
        %s2059 = smul.addr %s2056, 16
        %s2060 = sadd.s32 %s2058, %s2059
        %s2061 = smul.addr %s2060, 4
        %s2062 = scalar_lea.vmem %s3, %s2061
      $region44: #{_lambda_.5} parent=39 // pred_fallthru
        _
    $region40: #{_lambda_.5} parent=5 // pred_fallthru
      _
  $region6: #{_lambda_.5} parent=0 // loop_footer
    %s13 = sadd.s32 1, %s9
  $region7: #{_lambda_.5} parent=0 // loop_footer_branch
    %8 = sbr.rel target = $region3
  $region8: #{_lambda_.5} parent=0 // loop_exit
    _

</llo_original>
